<compile_context>
chip_gen: v7x
topology: tpu7x:2x2x1
jax: 0.10.0
libtpu: 0.0.40
codegen_flags: <defaults>
</compile_context>

<pallas_src>
import numpy as np

import jax
import jax.numpy as jnp
from jax import lax
from jax.experimental import pallas as pl
from jax.experimental.pallas import tpu as pltpu


# -----------------------------------------------------------------------------
# Fused dense-layer kernel factory.
#   refs = [feat_0 .. feat_{G-1}, s1t, b1t, bd1, b2t, wband, out, pad_scratch]
#   feat_g : (1, D*H, W*16) f32      s1t/b1t : (G, W*16) f32
#   bd1    : (G, W*16, W*64) bf16    b2t     : (1, W*64) f32
#   wband  : (9, W*64, W*16) bf16    out     : (1, D*H, W*16) f32
#   pad_scratch : (4*H + D*H, W*64) f32 VMEM
# -----------------------------------------------------------------------------
def _make_layer_kernel(G, D, H, W, cmid, cout):
    DH = D * H
    WC = W * cmid      # 512
    WO = W * cout      # 128
    PAD = 2 * H        # zero rows above/below the data inside the scratch

    def kernel(*refs):
        feat = refs[:G]
        s1_ref, b1_ref, bd1_ref, b2_ref, wb_ref, o_ref, pad_ref = refs[G:]

        # ---- bottleneck: BN1 + ReLU1 + 1x1x1 conv (dense connectivity = sum over groups)
        y = jnp.zeros((DH, WC), jnp.float32)
        for g in range(G):
            f = feat[g][0]                                          # (DH, W*16) f32
            r = jnp.maximum(f * s1_ref[g:g + 1, :] + b1_ref[g:g + 1, :], 0.0)
            y = y + jnp.dot(r.astype(jnp.bfloat16), bd1_ref[g],
                            preferred_element_type=jnp.float32)     # (DH, WC)

        # ---- BN2 bias (scale folded into bd1) + ReLU2, write into row-padded scratch.
        #      Only D and H are padded with zero rows; W padding is encoded in wband.
        pad_ref[0:PAD, :] = jnp.zeros((PAD, WC), jnp.float32)
        pad_ref[PAD + DH:PAD + DH + PAD, :] = jnp.zeros((PAD, WC), jnp.float32)
        pad_ref[PAD:PAD + DH, :] = jnp.maximum(y + b2_ref[...], 0.0)

        # ---- 3x3x3 conv: 9 banded matmuls into a lane-dense (DH, W*16) accumulator.
        row_h = lax.broadcasted_iota(jnp.int32, (DH, 1), 0) % H
        acc = jnp.zeros((DH, WO), jnp.float32)
        for kd in range(3):
            for kh in range(3):
                start = PAD + H * (kd - 1) + (kh - 1)
                v = pad_ref[start:start + DH, :]                    # (DH, WC) f32
                if kh == 0:        # rows with h == 0 read across an h boundary -> zero
                    v = jnp.where(row_h >= 1, v, 0.0)
                elif kh == 2:      # rows with h == H-1 read across an h boundary -> zero
                    v = jnp.where(row_h <= H - 2, v, 0.0)
                acc = acc + jnp.dot(v.astype(jnp.bfloat16), wb_ref[3 * kd + kh],
                                    preferred_element_type=jnp.float32)
        # TODO(synk): dropout(p=0.5) omitted (inference / eval-mode identity).
        o_ref[0] = acc

    return kernel


def _dense_layer_call(groups, lp, D, H, W, cmid, growth):
    G = len(groups)
    N, DH, WG = groups[0].shape
    WC = W * cmid
    WO = W * growth
    kernel = _make_layer_kernel(G, D, H, W, cmid, growth)
    in_specs = (
        [pl.BlockSpec((1, DH, WG), lambda n: (n, 0, 0)) for _ in range(G)]
        + [pl.BlockSpec((G, WG), lambda n: (0, 0)),            # s1t
           pl.BlockSpec((G, WG), lambda n: (0, 0)),            # b1t
           pl.BlockSpec((G, WG, WC), lambda n: (0, 0, 0)),     # bd1 (block-diag 1x1 w)
           pl.BlockSpec((1, WC), lambda n: (0, 0)),            # b2t
           pl.BlockSpec((9, WC, WO), lambda n: (0, 0, 0))])    # banded 3x3x3 w
    return pl.pallas_call(
        kernel,
        out_shape=jax.ShapeDtypeStruct((N, DH, WO), jnp.float32),
        grid=(N,),
        in_specs=in_specs,
        out_specs=pl.BlockSpec((1, DH, WO), lambda n: (n, 0, 0)),
        scratch_shapes=[pltpu.VMEM((4 * H + DH, WC), jnp.float32)],
        compiler_params=pltpu.CompilerParams(
            dimension_semantics=("parallel",),
            vmem_limit_bytes=32 * 1024 * 1024),
    )(*groups, lp["s1t"], lp["b1t"], lp["bd1"], lp["b2t"], lp["b2band"])


# -----------------------------------------------------------------------------
# Final transition: conv1x1( relu(bn(cat(features))) ), again as a per-group sum.
# -----------------------------------------------------------------------------
def _make_transition_kernel(G, DH, WO):
    def kernel(*refs):
        feat = refs[:G]
        sf_ref, bf_ref, bdf_ref, o_ref = refs[G:]
        acc = jnp.zeros((DH, WO), jnp.float32)
        for g in range(G):
            f = feat[g][0]
            r = jnp.maximum(f * sf_ref[g:g + 1, :] + bf_ref[g:g + 1, :], 0.0)
            acc = acc + jnp.dot(r.astype(jnp.bfloat16), bdf_ref[g],
                                preferred_element_type=jnp.float32)
        o_ref[0] = acc
    return kernel


def _transition_call(groups, fp, D, H, W, cout_f):
    G = len(groups)
    N, DH, WG = groups[0].shape
    WO = W * cout_f
    kernel = _make_transition_kernel(G, DH, WO)
    in_specs = (
        [pl.BlockSpec((1, DH, WG), lambda n: (n, 0, 0)) for _ in range(G)]
        + [pl.BlockSpec((G, WG), lambda n: (0, 0)),
           pl.BlockSpec((G, WG), lambda n: (0, 0)),
           pl.BlockSpec((G, WG, WO), lambda n: (0, 0, 0))])
    return pl.pallas_call(
        kernel,
        out_shape=jax.ShapeDtypeStruct((N, DH, WO), jnp.float32),
        grid=(N,),
        in_specs=in_specs,
        out_specs=pl.BlockSpec((1, DH, WO), lambda n: (n, 0, 0)),
        compiler_params=pltpu.CompilerParams(
            dimension_semantics=("parallel",),
            vmem_limit_bytes=32 * 1024 * 1024),
    )(*groups, fp["sft"], fp["bft"], fp["bdf"])


# -----------------------------------------------------------------------------
# Parameters: deterministic synthetic init, BN folded to scale/bias, weights
# pre-packed into the block-diagonal / banded layouts the kernels consume.
# (Real PyTorch Conv3d weights (Cout,Cin,kd,kh,kw) would need a transpose to the
#  (kd,kh,kw,Cin,Cout) convention used here before packing.)
# -----------------------------------------------------------------------------
def make_params(key, num_input_features=4, num_output_features=8,
                num_layers=4, bn_size=4, growth_rate=16,
                D=8, H=8, W=8, eps=1e-5):
    cmid = bn_size * growth_rate          # 64
    gch = growth_rate                     # channels per feature-group slot (16)
    assert num_input_features <= gch

    def bn_fold(k, ch):
        k1, k2, k3, k4 = jax.random.split(k, 4)
        gamma = 1.0 + 0.1 * jax.random.normal(k1, (ch,))
        beta = 0.1 * jax.random.normal(k2, (ch,))
        mean = 0.1 * jax.random.normal(k3, (ch,))
        var = 0.5 + 0.5 * jax.random.uniform(k4, (ch,))
        scale = gamma / jnp.sqrt(var + eps)
        bias = beta - mean * scale
        return np.asarray(scale, np.float32), np.asarray(bias, np.float32)

    def group_slices(cin):
        # group 0 holds the first num_input_features channels (zero-padded to
        # gch slots); each later group holds exactly gch channels.
        out = [(0, num_input_features)]
        c = num_input_features
        while c < cin:
            out.append((c, gch))
            c += gch
        return out

    def tile_groups(vec, cin):            # (cin,) -> (G, W*gch), per-w repeated
        gs = group_slices(cin)
        arr = np.zeros((len(gs), W * gch), np.float32)
        for g, (off, cnt) in enumerate(gs):
            v16 = np.zeros((gch,), np.float32)
            v16[:cnt] = vec[off:off + cnt]
            arr[g] = np.tile(v16, W)
        return arr

    def blockdiag_groups(wmat, cin):      # (cin,cout) -> (G, W*gch, W*cout)
        gs = group_slices(cin)
        cout = wmat.shape[1]
        arr = np.zeros((len(gs), W * gch, W * cout), np.float32)
        for g, (off, cnt) in enumerate(gs):
            blk = np.zeros((gch, cout), np.float32)
            blk[:cnt] = wmat[off:off + cnt]
            for w in range(W):
                arr[g, w * gch:(w + 1) * gch, w * cout:(w + 1) * cout] = blk
        return arr

    def banded_conv3(w2):                 # (3,3,3,cmid,cout) -> (9, W*cmid, W*cout)
        cout = w2.shape[-1]
        B = np.zeros((9, W * cmid, W * cout), np.float32)
        for kd in range(3):
            for kh in range(3):
                t = 3 * kd + kh
                for kw in range(3):
                    for wo in range(W):
                        wi = wo + kw - 1
                        if 0 <= wi < W:   # W zero-padding handled by the band
                            B[t, wi * cmid:(wi + 1) * cmid,
                              wo * cout:(wo + 1) * cout] = w2[kd, kh, kw]
        return B

    keys = jax.random.split(key, num_layers + 1)
    layers = []
    for i in range(num_layers):
        cin = num_input_features + i * growth_rate
        k1, k2, k3, k4 = jax.random.split(keys[i], 4)
        s1, b1 = bn_fold(k1, cin)
        w1 = np.asarray(0.1 * jax.random.normal(k2, (cin, cmid)), np.float32)
        s2, b2 = bn_fold(k3, cmid)
        w2 = np.asarray(0.1 * jax.random.normal(k4, (3, 3, 3, cmid, growth_rate)),
                        np.float32)
        layers.append(dict(
            s1t=jnp.asarray(tile_groups(s1, cin)),
            b1t=jnp.asarray(tile_groups(b1, cin)),
            # BN2 scale folded into the 1x1x1 conv weights (ReLU sits before BN2's input).
            bd1=jnp.asarray(blockdiag_groups(w1 * s2[None, :], cin), jnp.bfloat16),
            b2t=jnp.asarray(np.tile(b2, W)[None, :]),
            b2band=jnp.asarray(banded_conv3(w2), jnp.bfloat16),
        ))

    cfin = num_input_features + num_layers * growth_rate
    kf1, kf2 = jax.random.split(keys[-1], 2)
    sf, bf = bn_fold(kf1, cfin)
    wf = np.asarray(0.1 * jax.random.normal(kf2, (cfin, num_output_features)),
                    np.float32)
    final = dict(
        sft=jnp.asarray(tile_groups(sf, cfin)),
        bft=jnp.asarray(tile_groups(bf, cfin)),
        bdf=jnp.asarray(blockdiag_groups(wf, cfin), jnp.bfloat16),
    )
    return dict(layers=layers, final=final)


# -----------------------------------------------------------------------------
# Full DenseBlock forward (API input NCDHW, like PyTorch).
# -----------------------------------------------------------------------------
def dense_block_forward(x_ncdhw, params, growth_rate=16, bn_size=4,
                        num_output_features=8):
    N, C0, D, H, W = x_ncdhw.shape
    gch = growth_rate
    cmid = bn_size * growth_rate
    assert (D * H) % 8 == 0 and (W * gch) % 128 == 0, "toy shapes must stay tile-aligned"

    # group 0: NCDHW -> NDHWC -> channel-pad to the 16-wide group slot ->
    # lane-dense (N, D*H, W*16) layout used by every kernel (row-major identical).
    x = jnp.transpose(x_ncdhw, (0, 2, 3, 4, 1)).astype(jnp.float32)
    x = jnp.pad(x, ((0, 0), (0, 0), (0, 0), (0, 0), (0, gch - C0)))
    groups = [x.reshape(N, D * H, W * gch)]

    for lp in params["layers"]:
        groups.append(_dense_layer_call(groups, lp, D, H, W, cmid, growth_rate))

    out = _transition_call(groups, params["final"], D, H, W, num_output_features)
    out = out.reshape(N, D, H, W, num_output_features)
    return jnp.transpose(out, (0, 4, 1, 2, 3))                  # back to NCDHW


# -----------------------------------------------------------------------------
if __name__ == "__main__":
    key = jax.random.PRNGKey(0)
    kx, kp = jax.random.split(key)

    # small shapes consistent with the module: N=2, C_in=4, D=H=W=8
    x = jax.random.normal(kx, (2, 4, 8, 8, 8), dtype=jnp.float32)   # NCDHW
    params = make_params(kp, num_input_features=4, num_output_features=8,
                         num_layers=4, bn_size=4, growth_rate=16, D=8, H=8, W=8)

    out = dense_block_forward(x, params, growth_rate=16, bn_size=4,
                              num_output_features=8)
    out = jax.block_until_ready(out)
    assert out.shape == (2, 8, 8, 8, 8), out.shape
    assert bool(jnp.all(jnp.isfinite(out)))
    print("KERNEL_OK")
</pallas_src>

<mosaic_0001>
module attributes {stable_mosaic.version = 11 : i64} {
  func.func @kernel(%arg0: i32, %arg1: memref<1x64x128xf32, #tpu.memory_space<vmem>>, %arg2: memref<1x128xf32, #tpu.memory_space<vmem>>, %arg3: memref<1x128xf32, #tpu.memory_space<vmem>>, %arg4: memref<1x128x512xbf16, #tpu.memory_space<vmem>>, %arg5: memref<1x512xf32, #tpu.memory_space<vmem>>, %arg6: memref<9x512x128xbf16, #tpu.memory_space<vmem>>, %arg7: memref<1x64x128xf32, #tpu.memory_space<vmem>>, %arg8: memref<96x512xf32, #tpu.memory_space<vmem>>) attributes {dimension_semantics = [#tpu.dimension_semantics<parallel>], iteration_bounds = array<i64: 2>, scalar_prefetch = 0 : i64, scratch_operands = 1 : i64, tpu.core_type = #tpu.core_type<tc>, window_params = [{transform_indices = @transform_0, window_bounds = array<i64: 1, 64, 128>}, {pipeline_mode = #tpu.pipeline_mode<synchronous>, transform_indices = @transform_1, window_bounds = array<i64: 1, 128>}, {pipeline_mode = #tpu.pipeline_mode<synchronous>, transform_indices = @transform_2, window_bounds = array<i64: 1, 128>}, {pipeline_mode = #tpu.pipeline_mode<synchronous>, transform_indices = @transform_3, window_bounds = array<i64: 1, 128, 512>}, {pipeline_mode = #tpu.pipeline_mode<synchronous>, transform_indices = @transform_4, window_bounds = array<i64: 1, 512>}, {pipeline_mode = #tpu.pipeline_mode<synchronous>, transform_indices = @transform_5, window_bounds = array<i64: 9, 512, 128>}, {transform_indices = @transform_6, window_bounds = array<i64: 1, 64, 128>}]} {
    %cst = arith.constant 0.000000e+00 : f32
    %0 = vector.broadcast %cst : f32 to vector<64x512xf32>
    %c0 = arith.constant 0 : index
    %c0_0 = arith.constant 0 : index
    %c0_1 = arith.constant 0 : index
    %1 = vector.load %arg1[%c0, %c0_0, %c0_1] : memref<1x64x128xf32, #tpu.memory_space<vmem>>, vector<1x64x128xf32>
    %2 = vector.shape_cast %1 : vector<1x64x128xf32> to vector<64x128xf32>
    %c0_2 = arith.constant 0 : index
    %c0_3 = arith.constant 0 : index
    %3 = vector.load %arg2[%c0_2, %c0_3] : memref<1x128xf32, #tpu.memory_space<vmem>>, vector<1x128xf32>
    %4 = vector.broadcast %3 : vector<1x128xf32> to vector<64x128xf32>
    %5 = arith.mulf %2, %4 : vector<64x128xf32>
    %c0_4 = arith.constant 0 : index
    %c0_5 = arith.constant 0 : index
    %6 = vector.load %arg3[%c0_4, %c0_5] : memref<1x128xf32, #tpu.memory_space<vmem>>, vector<1x128xf32>
    %7 = vector.broadcast %6 : vector<1x128xf32> to vector<64x128xf32>
    %8 = arith.addf %5, %7 : vector<64x128xf32>
    %cst_6 = arith.constant 0.000000e+00 : f32
    %9 = vector.broadcast %cst_6 : f32 to vector<64x128xf32>
    %10 = arith.maximumf %8, %9 : vector<64x128xf32>
    %11 = arith.truncf %10 : vector<64x128xf32> to vector<64x128xbf16>
    %c0_7 = arith.constant 0 : index
    %c0_8 = arith.constant 0 : index
    %c0_9 = arith.constant 0 : index
    %12 = vector.load %arg4[%c0_7, %c0_8, %c0_9] : memref<1x128x512xbf16, #tpu.memory_space<vmem>>, vector<1x128x512xbf16>
    %13 = vector.shape_cast %12 : vector<1x128x512xbf16> to vector<128x512xbf16>
    %cst_10 = arith.constant dense<0.000000e+00> : vector<64x512xf32>
    %14 = tpu.matmul %11, %13, %cst_10 {dimension_numbers = #tpu.dot_dimension_numbers<[1], [0], [0], [1], [0, 0, 1, 1], [], []>} : vector<64x128xbf16>, vector<128x512xbf16>, vector<64x512xf32> -> vector<64x512xf32>
    %15 = arith.addf %0, %14 : vector<64x512xf32>
    %cst_11 = arith.constant 0.000000e+00 : f32
    %16 = vector.broadcast %cst_11 : f32 to vector<16x512xf32>
    %c0_12 = arith.constant 0 : index
    %c0_13 = arith.constant 0 : index
    %17 = vector.load %arg8[%c0_12, %c0_13] : memref<96x512xf32, #tpu.memory_space<vmem>>, vector<16x512xf32>
    tpu.vector_store %arg8[%c0_12, %c0_13], %16 {strides = array<i32>} : memref<96x512xf32, #tpu.memory_space<vmem>>, vector<16x512xf32>,
    %cst_14 = arith.constant 0.000000e+00 : f32
    %18 = vector.broadcast %cst_14 : f32 to vector<16x512xf32>
    %c80 = arith.constant 80 : index
    %c0_15 = arith.constant 0 : index
    %19 = vector.load %arg8[%c80, %c0_15] : memref<96x512xf32, #tpu.memory_space<vmem>>, vector<16x512xf32>
    tpu.vector_store %arg8[%c80, %c0_15], %18 {strides = array<i32>} : memref<96x512xf32, #tpu.memory_space<vmem>>, vector<16x512xf32>,
    %c0_16 = arith.constant 0 : index
    %c0_17 = arith.constant 0 : index
    %20 = vector.load %arg5[%c0_16, %c0_17] : memref<1x512xf32, #tpu.memory_space<vmem>>, vector<1x512xf32>
    %21 = vector.broadcast %20 : vector<1x512xf32> to vector<64x512xf32>
    %22 = arith.addf %15, %21 : vector<64x512xf32>
    %cst_18 = arith.constant 0.000000e+00 : f32
    %23 = vector.broadcast %cst_18 : f32 to vector<64x512xf32>
    %24 = arith.maximumf %22, %23 : vector<64x512xf32>
    %c16 = arith.constant 16 : index
    %c0_19 = arith.constant 0 : index
    %25 = vector.load %arg8[%c16, %c0_19] : memref<96x512xf32, #tpu.memory_space<vmem>>, vector<64x512xf32>
    tpu.vector_store %arg8[%c16, %c0_19], %24 {strides = array<i32>} : memref<96x512xf32, #tpu.memory_space<vmem>>, vector<64x512xf32>,
    %26 = tpu.iota {dimensions = array<i32: 0>} : vector<64x1xi32>
    %c8_i32 = arith.constant 8 : i32
    %c0_i32 = arith.constant 0 : i32
    %27 = arith.cmpi eq, %c8_i32, %c0_i32 : i32
    %c1_i32 = arith.constant 1 : i32
    %28 = arith.select %27, %c1_i32, %c8_i32 : i32
    %29 = vector.broadcast %28 : i32 to vector<64x1xi32>
    %30 = arith.remsi %26, %29 : vector<64x1xi32>
    %c0_i32_20 = arith.constant 0 : i32
    %31 = vector.broadcast %c0_i32_20 : i32 to vector<64x1xi32>
    %32 = arith.cmpi ne, %30, %31 : vector<64x1xi32>
    %c0_i32_21 = arith.constant 0 : i32
    %33 = vector.broadcast %c0_i32_21 : i32 to vector<64x1xi32>
    %34 = arith.cmpi slt, %30, %33 : vector<64x1xi32>
    %c0_i32_22 = arith.constant 0 : i32
    %35 = arith.cmpi slt, %28, %c0_i32_22 : i32
    %36 = vector.broadcast %35 : i1 to vector<64x1xi1>
    %37 = vector.broadcast %36 : vector<64x1xi1> to vector<64x1xi1>
    %38 = arith.xori %34, %37 : vector<64x1xi1>
    %39 = arith.andi %38, %32 : vector<64x1xi1>
    %40 = vector.broadcast %28 : i32 to vector<64x1xi32>
    %41 = arith.addi %30, %40 : vector<64x1xi32>
    %42 = arith.select %39, %41, %30 : vector<64x1xi1>, vector<64x1xi32>
    %cst_23 = arith.constant 0.000000e+00 : f32
    %43 = vector.broadcast %cst_23 : f32 to vector<64x128xf32>
    %c7 = arith.constant 7 : index
    %c0_24 = arith.constant 0 : index
    %44 = vector.load %arg8[%c7, %c0_24] : memref<96x512xf32, #tpu.memory_space<vmem>>, vector<64x512xf32>
    %c1_i32_25 = arith.constant 1 : i32
    %45 = vector.broadcast %c1_i32_25 : i32 to vector<64x1xi32>
    %46 = arith.cmpi sge, %42, %45 : vector<64x1xi32>
    %cst_26 = arith.constant 0.000000e+00 : f32
    %47 = vector.shape_cast %46 : vector<64x1xi1> to vector<64x1xi1>
    %48 = vector.broadcast %47 : vector<64x1xi1> to vector<64x512xi1>
    %49 = vector.broadcast %cst_26 : f32 to vector<64x512xf32>
    %50 = arith.select %48, %44, %49 : vector<64x512xi1>, vector<64x512xf32>
    %51 = arith.truncf %50 : vector<64x512xf32> to vector<64x512xbf16>
    %c0_27 = arith.constant 0 : index
    %c0_28 = arith.constant 0 : index
    %c0_29 = arith.constant 0 : index
    %52 = vector.load %arg6[%c0_27, %c0_28, %c0_29] : memref<9x512x128xbf16, #tpu.memory_space<vmem>>, vector<1x512x128xbf16>
    %53 = vector.shape_cast %52 : vector<1x512x128xbf16> to vector<512x128xbf16>
    %cst_30 = arith.constant dense<0.000000e+00> : vector<64x128xf32>
    %54 = tpu.matmul %51, %53, %cst_30 {dimension_numbers = #tpu.dot_dimension_numbers<[1], [0], [0], [1], [0, 0, 1, 1], [], []>} : vector<64x512xbf16>, vector<512x128xbf16>, vector<64x128xf32> -> vector<64x128xf32>
    %55 = arith.addf %43, %54 : vector<64x128xf32>
    %c8 = arith.constant 8 : index
    %c0_31 = arith.constant 0 : index
    %56 = vector.load %arg8[%c8, %c0_31] : memref<96x512xf32, #tpu.memory_space<vmem>>, vector<64x512xf32>
    %57 = arith.truncf %56 : vector<64x512xf32> to vector<64x512xbf16>
    %c1 = arith.constant 1 : index
    %c0_32 = arith.constant 0 : index
    %c0_33 = arith.constant 0 : index
    %58 = vector.load %arg6[%c1, %c0_32, %c0_33] : memref<9x512x128xbf16, #tpu.memory_space<vmem>>, vector<1x512x128xbf16>
    %59 = vector.shape_cast %58 : vector<1x512x128xbf16> to vector<512x128xbf16>
    %cst_34 = arith.constant dense<0.000000e+00> : vector<64x128xf32>
    %60 = tpu.matmul %57, %59, %cst_34 {dimension_numbers = #tpu.dot_dimension_numbers<[1], [0], [0], [1], [0, 0, 1, 1], [], []>} : vector<64x512xbf16>, vector<512x128xbf16>, vector<64x128xf32> -> vector<64x128xf32>
    %61 = arith.addf %55, %60 : vector<64x128xf32>
    %c9 = arith.constant 9 : index
    %c0_35 = arith.constant 0 : index
    %62 = vector.load %arg8[%c9, %c0_35] : memref<96x512xf32, #tpu.memory_space<vmem>>, vector<64x512xf32>
    %c6_i32 = arith.constant 6 : i32
    %63 = vector.broadcast %c6_i32 : i32 to vector<64x1xi32>
    %64 = arith.cmpi sle, %42, %63 : vector<64x1xi32>
    %cst_36 = arith.constant 0.000000e+00 : f32
    %65 = vector.shape_cast %64 : vector<64x1xi1> to vector<64x1xi1>
    %66 = vector.broadcast %65 : vector<64x1xi1> to vector<64x512xi1>
    %67 = vector.broadcast %cst_36 : f32 to vector<64x512xf32>
    %68 = arith.select %66, %62, %67 : vector<64x512xi1>, vector<64x512xf32>
    %69 = arith.truncf %68 : vector<64x512xf32> to vector<64x512xbf16>
    %c2 = arith.constant 2 : index
    %c0_37 = arith.constant 0 : index
    %c0_38 = arith.constant 0 : index
    %70 = vector.load %arg6[%c2, %c0_37, %c0_38] : memref<9x512x128xbf16, #tpu.memory_space<vmem>>, vector<1x512x128xbf16>
    %71 = vector.shape_cast %70 : vector<1x512x128xbf16> to vector<512x128xbf16>
    %cst_39 = arith.constant dense<0.000000e+00> : vector<64x128xf32>
    %72 = tpu.matmul %69, %71, %cst_39 {dimension_numbers = #tpu.dot_dimension_numbers<[1], [0], [0], [1], [0, 0, 1, 1], [], []>} : vector<64x512xbf16>, vector<512x128xbf16>, vector<64x128xf32> -> vector<64x128xf32>
    %73 = arith.addf %61, %72 : vector<64x128xf32>
    %c15 = arith.constant 15 : index
    %c0_40 = arith.constant 0 : index
    %74 = vector.load %arg8[%c15, %c0_40] : memref<96x512xf32, #tpu.memory_space<vmem>>, vector<64x512xf32>
    %c1_i32_41 = arith.constant 1 : i32
    %75 = vector.broadcast %c1_i32_41 : i32 to vector<64x1xi32>
    %76 = arith.cmpi sge, %42, %75 : vector<64x1xi32>
    %cst_42 = arith.constant 0.000000e+00 : f32
    %77 = vector.shape_cast %76 : vector<64x1xi1> to vector<64x1xi1>
    %78 = vector.broadcast %77 : vector<64x1xi1> to vector<64x512xi1>
    %79 = vector.broadcast %cst_42 : f32 to vector<64x512xf32>
    %80 = arith.select %78, %74, %79 : vector<64x512xi1>, vector<64x512xf32>
    %81 = arith.truncf %80 : vector<64x512xf32> to vector<64x512xbf16>
    %c3 = arith.constant 3 : index
    %c0_43 = arith.constant 0 : index
    %c0_44 = arith.constant 0 : index
    %82 = vector.load %arg6[%c3, %c0_43, %c0_44] : memref<9x512x128xbf16, #tpu.memory_space<vmem>>, vector<1x512x128xbf16>
    %83 = vector.shape_cast %82 : vector<1x512x128xbf16> to vector<512x128xbf16>
    %cst_45 = arith.constant dense<0.000000e+00> : vector<64x128xf32>
    %84 = tpu.matmul %81, %83, %cst_45 {dimension_numbers = #tpu.dot_dimension_numbers<[1], [0], [0], [1], [0, 0, 1, 1], [], []>} : vector<64x512xbf16>, vector<512x128xbf16>, vector<64x128xf32> -> vector<64x128xf32>
    %85 = arith.addf %73, %84 : vector<64x128xf32>
    %c16_46 = arith.constant 16 : index
    %c0_47 = arith.constant 0 : index
    %86 = vector.load %arg8[%c16_46, %c0_47] : memref<96x512xf32, #tpu.memory_space<vmem>>, vector<64x512xf32>
    %87 = arith.truncf %86 : vector<64x512xf32> to vector<64x512xbf16>
    %c4 = arith.constant 4 : index
    %c0_48 = arith.constant 0 : index
    %c0_49 = arith.constant 0 : index
    %88 = vector.load %arg6[%c4, %c0_48, %c0_49] : memref<9x512x128xbf16, #tpu.memory_space<vmem>>, vector<1x512x128xbf16>
    %89 = vector.shape_cast %88 : vector<1x512x128xbf16> to vector<512x128xbf16>
    %cst_50 = arith.constant dense<0.000000e+00> : vector<64x128xf32>
    %90 = tpu.matmul %87, %89, %cst_50 {dimension_numbers = #tpu.dot_dimension_numbers<[1], [0], [0], [1], [0, 0, 1, 1], [], []>} : vector<64x512xbf16>, vector<512x128xbf16>, vector<64x128xf32> -> vector<64x128xf32>
    %91 = arith.addf %85, %90 : vector<64x128xf32>
    %c17 = arith.constant 17 : index
    %c0_51 = arith.constant 0 : index
    %92 = vector.load %arg8[%c17, %c0_51] : memref<96x512xf32, #tpu.memory_space<vmem>>, vector<64x512xf32>
    %c6_i32_52 = arith.constant 6 : i32
    %93 = vector.broadcast %c6_i32_52 : i32 to vector<64x1xi32>
    %94 = arith.cmpi sle, %42, %93 : vector<64x1xi32>
    %cst_53 = arith.constant 0.000000e+00 : f32
    %95 = vector.shape_cast %94 : vector<64x1xi1> to vector<64x1xi1>
    %96 = vector.broadcast %95 : vector<64x1xi1> to vector<64x512xi1>
    %97 = vector.broadcast %cst_53 : f32 to vector<64x512xf32>
    %98 = arith.select %96, %92, %97 : vector<64x512xi1>, vector<64x512xf32>
    %99 = arith.truncf %98 : vector<64x512xf32> to vector<64x512xbf16>
    %c5 = arith.constant 5 : index
    %c0_54 = arith.constant 0 : index
    %c0_55 = arith.constant 0 : index
    %100 = vector.load %arg6[%c5, %c0_54, %c0_55] : memref<9x512x128xbf16, #tpu.memory_space<vmem>>, vector<1x512x128xbf16>
    %101 = vector.shape_cast %100 : vector<1x512x128xbf16> to vector<512x128xbf16>
    %cst_56 = arith.constant dense<0.000000e+00> : vector<64x128xf32>
    %102 = tpu.matmul %99, %101, %cst_56 {dimension_numbers = #tpu.dot_dimension_numbers<[1], [0], [0], [1], [0, 0, 1, 1], [], []>} : vector<64x512xbf16>, vector<512x128xbf16>, vector<64x128xf32> -> vector<64x128xf32>
    %103 = arith.addf %91, %102 : vector<64x128xf32>
    %c23 = arith.constant 23 : index
    %c0_57 = arith.constant 0 : index
    %104 = vector.load %arg8[%c23, %c0_57] : memref<96x512xf32, #tpu.memory_space<vmem>>, vector<64x512xf32>
    %c1_i32_58 = arith.constant 1 : i32
    %105 = vector.broadcast %c1_i32_58 : i32 to vector<64x1xi32>
    %106 = arith.cmpi sge, %42, %105 : vector<64x1xi32>
    %cst_59 = arith.constant 0.000000e+00 : f32
    %107 = vector.shape_cast %106 : vector<64x1xi1> to vector<64x1xi1>
    %108 = vector.broadcast %107 : vector<64x1xi1> to vector<64x512xi1>
    %109 = vector.broadcast %cst_59 : f32 to vector<64x512xf32>
    %110 = arith.select %108, %104, %109 : vector<64x512xi1>, vector<64x512xf32>
    %111 = arith.truncf %110 : vector<64x512xf32> to vector<64x512xbf16>
    %c6 = arith.constant 6 : index
    %c0_60 = arith.constant 0 : index
    %c0_61 = arith.constant 0 : index
    %112 = vector.load %arg6[%c6, %c0_60, %c0_61] : memref<9x512x128xbf16, #tpu.memory_space<vmem>>, vector<1x512x128xbf16>
    %113 = vector.shape_cast %112 : vector<1x512x128xbf16> to vector<512x128xbf16>
    %cst_62 = arith.constant dense<0.000000e+00> : vector<64x128xf32>
    %114 = tpu.matmul %111, %113, %cst_62 {dimension_numbers = #tpu.dot_dimension_numbers<[1], [0], [0], [1], [0, 0, 1, 1], [], []>} : vector<64x512xbf16>, vector<512x128xbf16>, vector<64x128xf32> -> vector<64x128xf32>
    %115 = arith.addf %103, %114 : vector<64x128xf32>
    %c24 = arith.constant 24 : index
    %c0_63 = arith.constant 0 : index
    %116 = vector.load %arg8[%c24, %c0_63] : memref<96x512xf32, #tpu.memory_space<vmem>>, vector<64x512xf32>
    %117 = arith.truncf %116 : vector<64x512xf32> to vector<64x512xbf16>
    %c7_64 = arith.constant 7 : index
    %c0_65 = arith.constant 0 : index
    %c0_66 = arith.constant 0 : index
    %118 = vector.load %arg6[%c7_64, %c0_65, %c0_66] : memref<9x512x128xbf16, #tpu.memory_space<vmem>>, vector<1x512x128xbf16>
    %119 = vector.shape_cast %118 : vector<1x512x128xbf16> to vector<512x128xbf16>
    %cst_67 = arith.constant dense<0.000000e+00> : vector<64x128xf32>
    %120 = tpu.matmul %117, %119, %cst_67 {dimension_numbers = #tpu.dot_dimension_numbers<[1], [0], [0], [1], [0, 0, 1, 1], [], []>} : vector<64x512xbf16>, vector<512x128xbf16>, vector<64x128xf32> -> vector<64x128xf32>
    %121 = arith.addf %115, %120 : vector<64x128xf32>
    %c25 = arith.constant 25 : index
    %c0_68 = arith.constant 0 : index
    %122 = vector.load %arg8[%c25, %c0_68] : memref<96x512xf32, #tpu.memory_space<vmem>>, vector<64x512xf32>
    %c6_i32_69 = arith.constant 6 : i32
    %123 = vector.broadcast %c6_i32_69 : i32 to vector<64x1xi32>
    %124 = arith.cmpi sle, %42, %123 : vector<64x1xi32>
    %cst_70 = arith.constant 0.000000e+00 : f32
    %125 = vector.shape_cast %124 : vector<64x1xi1> to vector<64x1xi1>
    %126 = vector.broadcast %125 : vector<64x1xi1> to vector<64x512xi1>
    %127 = vector.broadcast %cst_70 : f32 to vector<64x512xf32>
    %128 = arith.select %126, %122, %127 : vector<64x512xi1>, vector<64x512xf32>
    %129 = arith.truncf %128 : vector<64x512xf32> to vector<64x512xbf16>
    %c8_71 = arith.constant 8 : index
    %c0_72 = arith.constant 0 : index
    %c0_73 = arith.constant 0 : index
    %130 = vector.load %arg6[%c8_71, %c0_72, %c0_73] : memref<9x512x128xbf16, #tpu.memory_space<vmem>>, vector<1x512x128xbf16>
    %131 = vector.shape_cast %130 : vector<1x512x128xbf16> to vector<512x128xbf16>
    %cst_74 = arith.constant dense<0.000000e+00> : vector<64x128xf32>
    %132 = tpu.matmul %129, %131, %cst_74 {dimension_numbers = #tpu.dot_dimension_numbers<[1], [0], [0], [1], [0, 0, 1, 1], [], []>} : vector<64x512xbf16>, vector<512x128xbf16>, vector<64x128xf32> -> vector<64x128xf32>
    %133 = arith.addf %121, %132 : vector<64x128xf32>
    %c0_75 = arith.constant 0 : index
    %c0_76 = arith.constant 0 : index
    %c0_77 = arith.constant 0 : index
    %134 = vector.load %arg7[%c0_75, %c0_76, %c0_77] : memref<1x64x128xf32, #tpu.memory_space<vmem>>, vector<1x64x128xf32>
    %135 = vector.shape_cast %134 : vector<1x64x128xf32> to vector<64x128xf32>
    %136 = vector.shape_cast %133 : vector<64x128xf32> to vector<1x64x128xf32>
    tpu.vector_store %arg7[%c0_75, %c0_76, %c0_77], %136 {strides = array<i32>} : memref<1x64x128xf32, #tpu.memory_space<vmem>>, vector<1x64x128xf32>,
    return
  }
  func.func @transform_0(%arg0: i32) -> (i32, i32, i32) {
    %c0_i32 = arith.constant 0 : i32
    %c0_i32_0 = arith.constant 0 : i32
    %c0_i32_1 = arith.constant 0 : i32
    return %arg0, %c0_i32, %c0_i32_0 : i32, i32, i32
  }
  func.func @transform_1(%arg0: i32) -> (i32, i32) {
    %c0_i32 = arith.constant 0 : i32
    %c0_i32_0 = arith.constant 0 : i32
    %c0_i32_1 = arith.constant 0 : i32
    return %c0_i32, %c0_i32_0 : i32, i32
  }
  func.func @transform_2(%arg0: i32) -> (i32, i32) {
    %c0_i32 = arith.constant 0 : i32
    %c0_i32_0 = arith.constant 0 : i32
    %c0_i32_1 = arith.constant 0 : i32
    return %c0_i32, %c0_i32_0 : i32, i32
  }
  func.func @transform_3(%arg0: i32) -> (i32, i32, i32) {
    %c0_i32 = arith.constant 0 : i32
    %c0_i32_0 = arith.constant 0 : i32
    %c0_i32_1 = arith.constant 0 : i32
    %c0_i32_2 = arith.constant 0 : i32
    return %c0_i32, %c0_i32_0, %c0_i32_1 : i32, i32, i32
  }
  func.func @transform_4(%arg0: i32) -> (i32, i32) {
    %c0_i32 = arith.constant 0 : i32
    %c0_i32_0 = arith.constant 0 : i32
    %c0_i32_1 = arith.constant 0 : i32
    return %c0_i32, %c0_i32_0 : i32, i32
  }
  func.func @transform_5(%arg0: i32) -> (i32, i32, i32) {
    %c0_i32 = arith.constant 0 : i32
    %c0_i32_0 = arith.constant 0 : i32
    %c0_i32_1 = arith.constant 0 : i32
    %c0_i32_2 = arith.constant 0 : i32
    return %c0_i32, %c0_i32_0, %c0_i32_1 : i32, i32, i32
  }
  func.func @transform_6(%arg0: i32) -> (i32, i32, i32) {
    %c0_i32 = arith.constant 0 : i32
    %c0_i32_0 = arith.constant 0 : i32
    %c0_i32_1 = arith.constant 0 : i32
    return %arg0, %c0_i32, %c0_i32_0 : i32, i32, i32
  }
}

</mosaic_0001>

<llo_original>
// kernel: tpu_custom_call.1
$region0: #{tpu_custom_call.1}
  #allocation0 [shape = 'u32[]', space=smem, size = 0x4, offset = 0x4, fixed_abs, tag = 'smem constant byte address 0x4 - core index']
  #allocation1 [shape = 'u32[144,128]{1,0:T(1,128)}', space=vmem, size = 0x12000, scoped, tag = 'internal scratch']
  #allocation2 [shape = 'f32[96,512]{1,0:T(8,128)}', space=vmem, size = 0x30000, scoped, tag = 'scratch operand']
  %s0 = inlined_call_operand.hbm [shape: f32[2,64,128], index: 0, kind: input, shape index: {}]
  %s1 = inlined_call_operand.hbm [shape: f32[1,128], index: 1, kind: input, shape index: {}]
  %s2 = inlined_call_operand.hbm [shape: f32[1,128], index: 2, kind: input, shape index: {}]
  %s3 = inlined_call_operand.hbm [shape: bf16[1,128,512], index: 3, kind: input, shape index: {}]
  %s4 = inlined_call_operand.hbm [shape: f32[1,512], index: 4, kind: input, shape index: {}]
  %s5 = inlined_call_operand.hbm [shape: bf16[9,512,128], index: 5, kind: input, shape index: {}]
  %s6 = inlined_call_operand.hbm [shape: f32[2,64,128], index: 6, kind: output, shape index: {}]
  %s7 = sld [smem:[#allocation0]]
  $region81: #{tpu_custom_call.1} parent=0
    _
  %s9 = ssub.s32 1, %s7
  %s10 = scalar_select 0, %s9, %s7
  $region1: #{tpu_custom_call.1} parent=0
    #allocation3 [shape = 'u8[65536]{0}', space=vmem, size = 0x10000, scoped, tag = 'input window, operand 0']
    #allocation4 [shape = 's32[2]{0}', space=sflag, size = 0x8, scoped, tag = 'scoped memory for tpu_custom_call.1']
    #allocation5 [shape = 's32[2]{0}', space=sflag, size = 0x8, scoped, tag = 'scoped memory for tpu_custom_call.1']
    #allocation6 [shape = 'u8[512]{0}', space=vmem, size = 0x400, scoped, tag = 'input window, operand 1, single buffered']
    #allocation7 [shape = 's32[1]{0}', space=sflag, size = 0x4, scoped, tag = 'scoped memory for tpu_custom_call.1']
    #allocation8 [shape = 'u8[512]{0}', space=vmem, size = 0x400, scoped, tag = 'input window, operand 2, single buffered']
    #allocation9 [shape = 'u8[131072]{0}', space=vmem, size = 0x20000, scoped, tag = 'input window, operand 3, single buffered']
    #allocation10 [shape = 's32[1]{0}', space=sflag, size = 0x4, scoped, tag = 'scoped memory for tpu_custom_call.1']
    #allocation11 [shape = 'u8[2048]{0}', space=vmem, size = 0x800, scoped, tag = 'input window, operand 4, single buffered']
    #allocation12 [shape = 'u8[1179648]{0}', space=vmem, size = 0x120000, scoped, tag = 'input window, operand 5, single buffered']
    #allocation13 [shape = 's32[1]{0}', space=sflag, size = 0x4, scoped, tag = 'scoped memory for tpu_custom_call.1']
    #allocation14 [shape = 'u8[65536]{0}', space=vmem, size = 0x10000, scoped, tag = 'output window, operand 0']
    %11 = vsyncpa [#allocation4], 0
    %s12 = scalar_lea.sflag [#allocation4], 1
    %13 = vsyncpa %s12, 0
    %14 = vsyncpa [#allocation7], 0
    %15 = vsyncpa [#allocation10], 0
    %16 = vsyncpa [#allocation13], 0
    %17 = vsyncpa [#allocation5], 0
    %s18 = scalar_lea.sflag [#allocation5], 1
    %19 = vsyncpa %s18, 0
    loop: start=0, step=1, limit=4
    $region2: #{tpu_custom_call.1} parent=1 // loop_pre_header
      _
    $region3: #{tpu_custom_call.1} parent=1 // loop_header
      %s21 = sphi 0, %s25
      %p22 = scmp.ge.s32.totalorder %s21, 4
      %s31 = sphi 0, %s33
      %s34 = sphi 0, %s31
      %s35 = sphi 0, %s34
      %s51 = sphi 0, %s35
      %s55 = sphi 0, %s55
      %s57 = sphi 0, %s55
      %s58 = sphi 0, %s57
      %s72 = sphi 0, %s58
      %s76 = sphi 0, %s76
      %s78 = sphi 0, %s76
      %s79 = sphi 0, %s78
      %s93 = sphi 0, %s79
      %s97 = sphi 0, %s97
      %s99 = sphi 0, %s97
      %s100 = sphi 0, %s99
      %s114 = sphi 0, %s100
      %s118 = sphi 0, %s118
      %s120 = sphi 0, %s118
      %s121 = sphi 0, %s120
      %s135 = sphi 0, %s121
      %s139 = sphi 0, %s139
      %s141 = sphi 0, %s139
      %s142 = sphi 0, %s141
      %s156 = sphi 0, %s142
      %s162 = sphi 0, %s164
      %s165 = sphi 0, %s162
      %s166 = sphi 0, %s165
      %s182 = sphi 0, %s166
    $region4: #{tpu_custom_call.1} parent=1 // loop_header_branch
      %24 = sbr.rel (%p22) target = $region8
    $region5: #{tpu_custom_call.1} parent=1 // loop_body
      %s26 = ssub.s32 %s21, 1
      %s27 = ssub.s32 %s21, 2
      %s28 = sadd.s32 %s21, 1
      %s29 = ssub.s32 %s21, %s28
      %p30 = scmp.eq.s32.totalorder %s29, 0
      %s32 = sadd.s32 %s31, 1
      %s33 = scalar_select %p30, %s31, %s32
      %p36 = pneg %p30
      %p37 = scmp.eq.s32.totalorder %s21, 1
      %p38 = por %p36, %p37
      %p39 = scmp.ne.s32.totalorder %s31, %s34
      %p40 = scmp.eq.s32.totalorder %s21, 0
      %p41 = por %p39, %p40
      %p42 = scmp.ne.s32.totalorder %s31, %s34
      %p43 = scmp.eq.s32.totalorder %s26, 1
      %p44 = por %p42, %p43
      %p45 = scmp.ne.s32.totalorder %s34, %s35
      %p46 = scmp.eq.s32.totalorder %s26, 0
      %p47 = por %p45, %p46
      %p48 = scmp.ne.s32.totalorder %s34, %s35
      %p49 = scmp.eq.s32.totalorder %s27, 1
      %p50 = por %p48, %p49
      %p52 = scmp.ne.s32.totalorder %s35, %s51
      %p53 = scmp.eq.s32.totalorder %s27, 0
      %p54 = por %p52, %p53
      %s56 = sadd.s32 %s55, 1
      %p59 = scmp.eq.s32.totalorder %s21, 1
      %p60 = scmp.ne.s32.totalorder %s55, %s57
      %p61 = scmp.eq.s32.totalorder %s21, 0
      %p62 = por %p60, %p61
      %p63 = scmp.ne.s32.totalorder %s55, %s57
      %p64 = scmp.eq.s32.totalorder %s26, 1
      %p65 = por %p63, %p64
      %p66 = scmp.ne.s32.totalorder %s57, %s58
      %p67 = scmp.eq.s32.totalorder %s26, 0
      %p68 = por %p66, %p67
      %p69 = scmp.ne.s32.totalorder %s57, %s58
      %p70 = scmp.eq.s32.totalorder %s27, 1
      %p71 = por %p69, %p70
      %p73 = scmp.ne.s32.totalorder %s58, %s72
      %p74 = scmp.eq.s32.totalorder %s27, 0
      %p75 = por %p73, %p74
      %s77 = sadd.s32 %s76, 1
      %p80 = scmp.eq.s32.totalorder %s21, 1
      %p81 = scmp.ne.s32.totalorder %s76, %s78
      %p82 = scmp.eq.s32.totalorder %s21, 0
      %p83 = por %p81, %p82
      %p84 = scmp.ne.s32.totalorder %s76, %s78
      %p85 = scmp.eq.s32.totalorder %s26, 1
      %p86 = por %p84, %p85
      %p87 = scmp.ne.s32.totalorder %s78, %s79
      %p88 = scmp.eq.s32.totalorder %s26, 0
      %p89 = por %p87, %p88
      %p90 = scmp.ne.s32.totalorder %s78, %s79
      %p91 = scmp.eq.s32.totalorder %s27, 1
      %p92 = por %p90, %p91
      %p94 = scmp.ne.s32.totalorder %s79, %s93
      %p95 = scmp.eq.s32.totalorder %s27, 0
      %p96 = por %p94, %p95
      %s98 = sadd.s32 %s97, 1
      %p101 = scmp.eq.s32.totalorder %s21, 1
      %p102 = scmp.ne.s32.totalorder %s97, %s99
      %p103 = scmp.eq.s32.totalorder %s21, 0
      %p104 = por %p102, %p103
      %p105 = scmp.ne.s32.totalorder %s97, %s99
      %p106 = scmp.eq.s32.totalorder %s26, 1
      %p107 = por %p105, %p106
      %p108 = scmp.ne.s32.totalorder %s99, %s100
      %p109 = scmp.eq.s32.totalorder %s26, 0
      %p110 = por %p108, %p109
      %p111 = scmp.ne.s32.totalorder %s99, %s100
      %p112 = scmp.eq.s32.totalorder %s27, 1
      %p113 = por %p111, %p112
      %p115 = scmp.ne.s32.totalorder %s100, %s114
      %p116 = scmp.eq.s32.totalorder %s27, 0
      %p117 = por %p115, %p116
      %s119 = sadd.s32 %s118, 1
      %p122 = scmp.eq.s32.totalorder %s21, 1
      %p123 = scmp.ne.s32.totalorder %s118, %s120
      %p124 = scmp.eq.s32.totalorder %s21, 0
      %p125 = por %p123, %p124
      %p126 = scmp.ne.s32.totalorder %s118, %s120
      %p127 = scmp.eq.s32.totalorder %s26, 1
      %p128 = por %p126, %p127
      %p129 = scmp.ne.s32.totalorder %s120, %s121
      %p130 = scmp.eq.s32.totalorder %s26, 0
      %p131 = por %p129, %p130
      %p132 = scmp.ne.s32.totalorder %s120, %s121
      %p133 = scmp.eq.s32.totalorder %s27, 1
      %p134 = por %p132, %p133
      %p136 = scmp.ne.s32.totalorder %s121, %s135
      %p137 = scmp.eq.s32.totalorder %s27, 0
      %p138 = por %p136, %p137
      %s140 = sadd.s32 %s139, 1
      %p143 = scmp.eq.s32.totalorder %s21, 1
      %p144 = scmp.ne.s32.totalorder %s139, %s141
      %p145 = scmp.eq.s32.totalorder %s21, 0
      %p146 = por %p144, %p145
      %p147 = scmp.ne.s32.totalorder %s139, %s141
      %p148 = scmp.eq.s32.totalorder %s26, 1
      %p149 = por %p147, %p148
      %p150 = scmp.ne.s32.totalorder %s141, %s142
      %p151 = scmp.eq.s32.totalorder %s26, 0
      %p152 = por %p150, %p151
      %p153 = scmp.ne.s32.totalorder %s141, %s142
      %p154 = scmp.eq.s32.totalorder %s27, 1
      %p155 = por %p153, %p154
      %p157 = scmp.ne.s32.totalorder %s142, %s156
      %p158 = scmp.eq.s32.totalorder %s27, 0
      %p159 = por %p157, %p158
      %s160 = ssub.s32 %s21, %s28
      %p161 = scmp.eq.s32.totalorder %s160, 0
      %s163 = sadd.s32 %s162, 1
      %s164 = scalar_select %p161, %s162, %s163
      %p167 = pneg %p161
      %p168 = scmp.eq.s32.totalorder %s21, 1
      %p169 = por %p167, %p168
      %p170 = scmp.ne.s32.totalorder %s162, %s165
      %p171 = scmp.eq.s32.totalorder %s21, 0
      %p172 = por %p170, %p171
      %p173 = scmp.ne.s32.totalorder %s162, %s165
      %p174 = scmp.eq.s32.totalorder %s26, 1
      %p175 = por %p173, %p174
      %p176 = scmp.ne.s32.totalorder %s165, %s166
      %p177 = scmp.eq.s32.totalorder %s26, 0
      %p178 = por %p176, %p177
      %p179 = scmp.ne.s32.totalorder %s165, %s166
      %p180 = scmp.eq.s32.totalorder %s27, 1
      %p181 = por %p179, %p180
      %p183 = scmp.ne.s32.totalorder %s166, %s182
      %p184 = scmp.eq.s32.totalorder %s27, 0
      %p185 = por %p183, %p184
      %p186 = scmp.le.s32.totalorder 1, %s21
      %p187 = scmp.lt.s32.totalorder %s21, 3
      %p188 = pnand %p186, %p187
      %p189 = pneg %p188
      // Predicated region
      $region9: #{tpu_custom_call.1} parent=5 // pred_check
        _
      $region10: #{tpu_custom_call.1} parent=5 // pred_check_branch
        %191 = sbr.rel (%p188) target = $region12
      $region11: #{tpu_custom_call.1} parent=5 // pred_region
        %s192 = ssub.s32 %s21, 1
        // Predicated region
        $region13: #{tpu_custom_call.1} parent=11 // pred_check
          %p193 = pneg %p68
        $region14: #{tpu_custom_call.1} parent=11 // pred_check_branch
          %195 = sbr.rel (%p193) target = $region16
        $region15: #{tpu_custom_call.1} parent=11 // pred_region
          %s197 = ssub.s32 16, 16
          %198 = vsyncadd [#allocation7], %s197
          %s200 = sshll.u32 [#allocation6], 4
          %s201 = int_to_ptr.vmem [resolvable:$true] %s200
          %203 = dma.hbm_to_vmem [thread:$0]  %s1, 16, %s201, [#allocation7]
        $region16: #{tpu_custom_call.1} parent=11 // pred_fallthru
          _
        // Predicated region
        $region17: #{tpu_custom_call.1} parent=11 // pred_check
          %p204 = pneg %p89
        $region18: #{tpu_custom_call.1} parent=11 // pred_check_branch
          %206 = sbr.rel (%p204) target = $region20
        $region19: #{tpu_custom_call.1} parent=11 // pred_region
          %s208 = ssub.s32 16, 16
          %209 = vsyncadd [#allocation7], %s208
          %s211 = sshll.u32 [#allocation8], 4
          %s212 = int_to_ptr.vmem [resolvable:$true] %s211
          %214 = dma.hbm_to_vmem [thread:$0]  %s2, 16, %s212, [#allocation7]
        $region20: #{tpu_custom_call.1} parent=11 // pred_fallthru
          _
        // Predicated region
        $region21: #{tpu_custom_call.1} parent=11 // pred_check
          %p215 = pneg %p110
        $region22: #{tpu_custom_call.1} parent=11 // pred_check_branch
          %217 = sbr.rel (%p215) target = $region24
        $region23: #{tpu_custom_call.1} parent=11 // pred_region
          %s219 = ssub.s32 4096, 4096
          %220 = vsyncadd [#allocation10], %s219
          %s221 = sshll.u32 [#allocation9], 4
          %s222 = int_to_ptr.vmem [resolvable:$true] %s221
          %227 = dma.hbm_to_vmem [thread:$0]  %s3, 4096, %s222, [#allocation10], 256, 256, 16
        $region24: #{tpu_custom_call.1} parent=11 // pred_fallthru
          _
        // Predicated region
        $region25: #{tpu_custom_call.1} parent=11 // pred_check
          %p228 = pneg %p131
        $region26: #{tpu_custom_call.1} parent=11 // pred_check_branch
          %230 = sbr.rel (%p228) target = $region28
        $region27: #{tpu_custom_call.1} parent=11 // pred_region
          %s232 = ssub.s32 64, 64
          %233 = vsyncadd [#allocation10], %s232
          %s235 = sshll.u32 [#allocation11], 4
          %s236 = int_to_ptr.vmem [resolvable:$true] %s235
          %238 = dma.hbm_to_vmem [thread:$0]  %s4, 64, %s236, [#allocation10]
        $region28: #{tpu_custom_call.1} parent=11 // pred_fallthru
          _
        // Predicated region
        $region29: #{tpu_custom_call.1} parent=11 // pred_check
          %p239 = pneg %p152
        $region30: #{tpu_custom_call.1} parent=11 // pred_check_branch
          %241 = sbr.rel (%p239) target = $region32
        $region31: #{tpu_custom_call.1} parent=11 // pred_region
          %s243 = ssub.s32 36864, 36864
          %244 = vsyncadd [#allocation13], %s243
          %s245 = sshll.u32 [#allocation12], 4
          %s246 = int_to_ptr.vmem [resolvable:$true] %s245
          %251 = dma.hbm_to_vmem [thread:$0]  %s5, 36864, %s246, [#allocation13], 64, 64, 4
        $region32: #{tpu_custom_call.1} parent=11 // pred_fallthru
          _
      $region12: #{tpu_custom_call.1} parent=5 // pred_fallthru
        _
      %p252 = scmp.lt.s32.totalorder %s21, 2
      // Predicated region
      $region33: #{tpu_custom_call.1} parent=5 // pred_check
        %p253 = pneg %p252
      $region34: #{tpu_custom_call.1} parent=5 // pred_check_branch
        %255 = sbr.rel (%p253) target = $region36
      $region35: #{tpu_custom_call.1} parent=5 // pred_region
        // Predicated region
        $region37: #{tpu_custom_call.1} parent=35 // pred_check
          %p256 = pneg %p41
        $region38: #{tpu_custom_call.1} parent=35 // pred_check_branch
          %258 = sbr.rel (%p256) target = $region40
        $region39: #{tpu_custom_call.1} parent=35 // pred_region
          %s259 = sand.u32 %s31, 1
          %s260 = scalar_lea.sflag [#allocation4], %s259
          %s261 = sand.u32 %s31, 1
          %s262 = smul.addr %s261, 64
          %s263 = scalar_lea.vmem [#allocation3], %s262
          %s265 = ssub.s32 1024, 1024
          %266 = vsyncadd %s260, %s265
          %s267 = smul.addr %s21, 8
          %s268 = smul.addr %s267, 128
          %s269 = scalar_lea.hbm %s0, %s268
          %s270 = sshll.u32 %s263, 4
          %s271 = int_to_ptr.vmem [resolvable:$true] %s270
          %276 = dma.hbm_to_vmem [thread:$0]  %s269, 1024, %s271, %s260, 128, 128, 8
        $region40: #{tpu_custom_call.1} parent=35 // pred_fallthru
          _
      $region36: #{tpu_custom_call.1} parent=5 // pred_fallthru
        _
      %p277 = scmp.le.s32.totalorder 1, %s21
      %p278 = scmp.lt.s32.totalorder %s21, 3
      %p279 = pnand %p277, %p278
      %p280 = pneg %p279
      // Predicated region
      $region41: #{tpu_custom_call.1} parent=5 // pred_check
        _
      $region42: #{tpu_custom_call.1} parent=5 // pred_check_branch
        %282 = sbr.rel (%p279) target = $region44
      $region43: #{tpu_custom_call.1} parent=5 // pred_region
        %s283 = ssub.s32 %s21, 1
        %s284 = sand.u32 %s34, 1
        %s285 = scalar_lea.sflag [#allocation4], %s284
        %s286 = sand.u32 %s34, 1
        %s287 = smul.addr %s286, 64
        %s288 = scalar_lea.vmem [#allocation3], %s287
        // Predicated region
        $region45: #{tpu_custom_call.1} parent=43 // pred_check
          %p289 = pneg %p47
        $region46: #{tpu_custom_call.1} parent=43 // pred_check_branch
          %291 = sbr.rel (%p289) target = $region48
        $region47: #{tpu_custom_call.1} parent=43 // pred_region
          %292 = dma.done %s285, 1024
        $region48: #{tpu_custom_call.1} parent=43 // pred_fallthru
          _
        // Predicated region
        $region49: #{tpu_custom_call.1} parent=43 // pred_check
          %p293 = pneg %p68
        $region50: #{tpu_custom_call.1} parent=43 // pred_check_branch
          %295 = sbr.rel (%p293) target = $region52
        $region51: #{tpu_custom_call.1} parent=43 // pred_region
          %296 = dma.done [#allocation7], 16
        $region52: #{tpu_custom_call.1} parent=43 // pred_fallthru
          _
        // Predicated region
        $region53: #{tpu_custom_call.1} parent=43 // pred_check
          %p297 = pneg %p89
        $region54: #{tpu_custom_call.1} parent=43 // pred_check_branch
          %299 = sbr.rel (%p297) target = $region56
        $region55: #{tpu_custom_call.1} parent=43 // pred_region
          %300 = dma.done [#allocation7], 16
        $region56: #{tpu_custom_call.1} parent=43 // pred_fallthru
          _
        // Predicated region
        $region57: #{tpu_custom_call.1} parent=43 // pred_check
          %p301 = pneg %p110
        $region58: #{tpu_custom_call.1} parent=43 // pred_check_branch
          %303 = sbr.rel (%p301) target = $region60
        $region59: #{tpu_custom_call.1} parent=43 // pred_region
          %304 = dma.done [#allocation10], 4096
        $region60: #{tpu_custom_call.1} parent=43 // pred_fallthru
          _
        // Predicated region
        $region61: #{tpu_custom_call.1} parent=43 // pred_check
          %p305 = pneg %p131
        $region62: #{tpu_custom_call.1} parent=43 // pred_check_branch
          %307 = sbr.rel (%p305) target = $region64
        $region63: #{tpu_custom_call.1} parent=43 // pred_region
          %308 = dma.done [#allocation10], 64
        $region64: #{tpu_custom_call.1} parent=43 // pred_fallthru
          _
        // Predicated region
        $region65: #{tpu_custom_call.1} parent=43 // pred_check
          %p309 = pneg %p152
        $region66: #{tpu_custom_call.1} parent=43 // pred_check_branch
          %311 = sbr.rel (%p309) target = $region68
        $region67: #{tpu_custom_call.1} parent=43 // pred_region
          %312 = dma.done [#allocation13], 36864
        $region68: #{tpu_custom_call.1} parent=43 // pred_fallthru
          _
        %s313 = sand.u32 %s34, 1
        %s314 = scalar_lea.sflag [#allocation4], %s313
        %s315 = sand.u32 %s34, 1
        %s316 = smul.addr %s315, 64
        %s317 = scalar_lea.vmem [#allocation3], %s316
        %p318 = pneg %p47
        %p319 = pneg %p44
        %p320 = pneg %p68
        %p321 = pneg %p65
        %p322 = pneg %p89
        %p323 = pneg %p86
        %p324 = pneg %p110
        %p325 = pneg %p107
        %p326 = pneg %p131
        %p327 = pneg %p128
        %p328 = pneg %p152
        %p329 = pneg %p149
        %p330 = pneg %p178
        %p331 = pneg %p175
        %s332 = sand.u32 %s165, 1
        %s333 = scalar_lea.sflag [#allocation5], %s332
        %s334 = sand.u32 %s165, 1
        %s335 = smul.addr %s334, 64
        %s336 = scalar_lea.vmem [#allocation14], %s335
        %v338 = vld [vmem:[%s288] sm:$0xff]
        %v339 = vld [vmem:[%s288 + $0x8] sm:$0xff]
        %v340 = vld [vmem:[%s288 + $0x10] sm:$0xff]
        %v341 = vld [vmem:[%s288 + $0x18] sm:$0xff]
        %v342 = vld [vmem:[%s288 + $0x20] sm:$0xff]
        %v343 = vld [vmem:[%s288 + $0x28] sm:$0xff]
        %v344 = vld [vmem:[%s288 + $0x30] sm:$0xff]
        %v345 = vld [vmem:[%s288 + $0x38] sm:$0xff]
        %v346 = vld [vmem:[#allocation6] sm:$0x1]
        %v348 = vlaneseq
        %v349 = vshrl.u32 %v348, 7
        %v350 = vsub.s32 0, %v349
        %v351 = vrot.slane %v346, %v350
        %v353 = vmul.f32 %v338, %v351
        %v354 = vmul.f32 %v339, %v351
        %v355 = vmul.f32 %v340, %v351
        %v356 = vmul.f32 %v341, %v351
        %v357 = vmul.f32 %v342, %v351
        %v358 = vmul.f32 %v343, %v351
        %v359 = vmul.f32 %v344, %v351
        %v360 = vmul.f32 %v345, %v351
        %v361 = vld [vmem:[#allocation8] sm:$0x1]
        %v363 = vlaneseq
        %v364 = vshrl.u32 %v363, 7
        %v365 = vsub.s32 0, %v364
        %v366 = vrot.slane %v361, %v365
        %v368 = vadd.f32 %v353, %v366
        %v369 = vadd.f32 %v354, %v366
        %v370 = vadd.f32 %v355, %v366
        %v371 = vadd.f32 %v356, %v366
        %v372 = vadd.f32 %v357, %v366
        %v373 = vadd.f32 %v358, %v366
        %v374 = vadd.f32 %v359, %v366
        %v375 = vadd.f32 %v360, %v366
        %v376 = vmax.f32 %v368, 0.0
        %v377 = vmax.f32 %v369, 0.0
        %v378 = vmax.f32 %v370, 0.0
        %v379 = vmax.f32 %v371, 0.0
        %v380 = vmax.f32 %v372, 0.0
        %v381 = vmax.f32 %v373, 0.0
        %v382 = vmax.f32 %v374, 0.0
        %v383 = vmax.f32 %v375, 0.0
        %v384 = vpack.c.bf16 %v377, %v376
        %v385 = vpack.c.bf16 %v379, %v378
        %v386 = vpack.c.bf16 %v381, %v380
        %v387 = vpack.c.bf16 %v383, %v382
        %v388 = vld [vmem:[#allocation9] sm:$0xff]
        %v389 = vld [vmem:[#allocation9 + $0x8] sm:$0xff]
        %v390 = vld [vmem:[#allocation9 + $0x10] sm:$0xff]
        %v391 = vld [vmem:[#allocation9 + $0x18] sm:$0xff]
        %v392 = vld [vmem:[#allocation9 + $0x20] sm:$0xff]
        %v393 = vld [vmem:[#allocation9 + $0x28] sm:$0xff]
        %v394 = vld [vmem:[#allocation9 + $0x30] sm:$0xff]
        %v395 = vld [vmem:[#allocation9 + $0x38] sm:$0xff]
        %v396 = vld [vmem:[#allocation9 + $0x40] sm:$0xff]
        %v397 = vld [vmem:[#allocation9 + $0x48] sm:$0xff]
        %v398 = vld [vmem:[#allocation9 + $0x50] sm:$0xff]
        %v399 = vld [vmem:[#allocation9 + $0x58] sm:$0xff]
        %v400 = vld [vmem:[#allocation9 + $0x60] sm:$0xff]
        %v401 = vld [vmem:[#allocation9 + $0x68] sm:$0xff]
        %v402 = vld [vmem:[#allocation9 + $0x70] sm:$0xff]
        %v403 = vld [vmem:[#allocation9 + $0x78] sm:$0xff]
        %v404 = vld [vmem:[#allocation9 + $0x80] sm:$0xff]
        %v405 = vld [vmem:[#allocation9 + $0x88] sm:$0xff]
        %v406 = vld [vmem:[#allocation9 + $0x90] sm:$0xff]
        %v407 = vld [vmem:[#allocation9 + $0x98] sm:$0xff]
        %v408 = vld [vmem:[#allocation9 + $0xa0] sm:$0xff]
        %v409 = vld [vmem:[#allocation9 + $0xa8] sm:$0xff]
        %v410 = vld [vmem:[#allocation9 + $0xb0] sm:$0xff]
        %v411 = vld [vmem:[#allocation9 + $0xb8] sm:$0xff]
        %v412 = vld [vmem:[#allocation9 + $0xc0] sm:$0xff]
        %v413 = vld [vmem:[#allocation9 + $0xc8] sm:$0xff]
        %v414 = vld [vmem:[#allocation9 + $0xd0] sm:$0xff]
        %v415 = vld [vmem:[#allocation9 + $0xd8] sm:$0xff]
        %v416 = vld [vmem:[#allocation9 + $0xe0] sm:$0xff]
        %v417 = vld [vmem:[#allocation9 + $0xe8] sm:$0xff]
        %v418 = vld [vmem:[#allocation9 + $0xf0] sm:$0xff]
        %v419 = vld [vmem:[#allocation9 + $0xf8] sm:$0xff]
        %420 = vst [vmem:[#allocation2] sm:$0xff] 0.0
        %421 = vst [vmem:[#allocation2 + $0x8] sm:$0xff] 0.0
        %422 = vst [vmem:[#allocation2 + $0x10] sm:$0xff] 0.0
        %423 = vst [vmem:[#allocation2 + $0x18] sm:$0xff] 0.0
        %424 = vst [vmem:[#allocation2 + $0x20] sm:$0xff] 0.0
        %425 = vst [vmem:[#allocation2 + $0x28] sm:$0xff] 0.0
        %426 = vst [vmem:[#allocation2 + $0x30] sm:$0xff] 0.0
        %427 = vst [vmem:[#allocation2 + $0x38] sm:$0xff] 0.0
        %428 = vst [vmem:[#allocation2 + $0x140] sm:$0xff] 0.0
        %429 = vst [vmem:[#allocation2 + $0x148] sm:$0xff] 0.0
        %430 = vst [vmem:[#allocation2 + $0x150] sm:$0xff] 0.0
        %431 = vst [vmem:[#allocation2 + $0x158] sm:$0xff] 0.0
        %432 = vst [vmem:[#allocation2 + $0x160] sm:$0xff] 0.0
        %433 = vst [vmem:[#allocation2 + $0x168] sm:$0xff] 0.0
        %434 = vst [vmem:[#allocation2 + $0x170] sm:$0xff] 0.0
        %435 = vst [vmem:[#allocation2 + $0x178] sm:$0xff] 0.0
        %v436 = vld [vmem:[#allocation11] sm:$0xf]
        %v438 = vlaneseq
        %v439 = vshrl.u32 %v438, 7
        %v440 = vsub.s32 0, %v439
        %v441 = vrot.slane %v436, %v440
        %v442 = vlaneseq
        %v443 = vshrl.u32 %v442, 7
        %v444 = vsub.s32 1, %v443
        %v445 = vrot.slane %v436, %v444
        %v446 = vlaneseq
        %v447 = vshrl.u32 %v446, 7
        %v448 = vsub.s32 2, %v447
        %v449 = vrot.slane %v436, %v448
        %v450 = vlaneseq
        %v451 = vshrl.u32 %v450, 7
        %v452 = vsub.s32 3, %v451
        %v453 = vrot.slane %v436, %v452
        %v490 = vunpack.c.l.b16 %v388
        %v491 = vunpack.c.h.b16 %v388
        %v492 = vunpack.c.l.b16 %v389
        %v493 = vunpack.c.h.b16 %v389
        %v494 = vunpack.c.l.b16 %v390
        %v495 = vunpack.c.h.b16 %v390
        %v496 = vunpack.c.l.b16 %v391
        %v497 = vunpack.c.h.b16 %v391
        %v498 = vunpack.c.l.b16 %v392
        %v499 = vunpack.c.h.b16 %v392
        %v500 = vunpack.c.l.b16 %v393
        %v501 = vunpack.c.h.b16 %v393
        %v502 = vunpack.c.l.b16 %v394
        %v503 = vunpack.c.h.b16 %v394
        %v504 = vunpack.c.l.b16 %v395
        %v505 = vunpack.c.h.b16 %v395
        %v506 = vunpack.c.l.b16 %v396
        %v507 = vunpack.c.h.b16 %v396
        %v508 = vunpack.c.l.b16 %v397
        %v509 = vunpack.c.h.b16 %v397
        %v510 = vunpack.c.l.b16 %v398
        %v511 = vunpack.c.h.b16 %v398
        %v512 = vunpack.c.l.b16 %v399
        %v513 = vunpack.c.h.b16 %v399
        %v514 = vunpack.c.l.b16 %v400
        %v515 = vunpack.c.h.b16 %v400
        %v516 = vunpack.c.l.b16 %v401
        %v517 = vunpack.c.h.b16 %v401
        %v518 = vunpack.c.l.b16 %v402
        %v519 = vunpack.c.h.b16 %v402
        %v520 = vunpack.c.l.b16 %v403
        %v521 = vunpack.c.h.b16 %v403
        %v522 = vunpack.c.l.b16 %v404
        %v523 = vunpack.c.h.b16 %v404
        %v524 = vunpack.c.l.b16 %v405
        %v525 = vunpack.c.h.b16 %v405
        %v526 = vunpack.c.l.b16 %v406
        %v527 = vunpack.c.h.b16 %v406
        %v528 = vunpack.c.l.b16 %v407
        %v529 = vunpack.c.h.b16 %v407
        %v530 = vunpack.c.l.b16 %v408
        %v531 = vunpack.c.h.b16 %v408
        %v532 = vunpack.c.l.b16 %v409
        %v533 = vunpack.c.h.b16 %v409
        %v534 = vunpack.c.l.b16 %v410
        %v535 = vunpack.c.h.b16 %v410
        %v536 = vunpack.c.l.b16 %v411
        %v537 = vunpack.c.h.b16 %v411
        %v538 = vunpack.c.l.b16 %v412
        %v539 = vunpack.c.h.b16 %v412
        %v540 = vunpack.c.l.b16 %v413
        %v541 = vunpack.c.h.b16 %v413
        %v542 = vunpack.c.l.b16 %v414
        %v543 = vunpack.c.h.b16 %v414
        %v544 = vunpack.c.l.b16 %v415
        %v545 = vunpack.c.h.b16 %v415
        %v546 = vunpack.c.l.b16 %v416
        %v547 = vunpack.c.h.b16 %v416
        %v548 = vunpack.c.l.b16 %v417
        %v549 = vunpack.c.h.b16 %v417
        %v550 = vunpack.c.l.b16 %v418
        %v551 = vunpack.c.h.b16 %v418
        %v552 = vunpack.c.l.b16 %v419
        %v553 = vunpack.c.h.b16 %v419
        %v554 = vpack.c.b16 %v494, %v490
        %v555 = vpack.c.b16 %v495, %v491
        %v556 = vpack.c.b16 %v496, %v492
        %v557 = vpack.c.b16 %v497, %v493
        %v558 = vpack.c.b16 %v502, %v498
        %v559 = vpack.c.b16 %v503, %v499
        %v560 = vpack.c.b16 %v504, %v500
        %v561 = vpack.c.b16 %v505, %v501
        %v562 = vpack.c.b16 %v510, %v506
        %v563 = vpack.c.b16 %v511, %v507
        %v564 = vpack.c.b16 %v512, %v508
        %v565 = vpack.c.b16 %v513, %v509
        %v566 = vpack.c.b16 %v518, %v514
        %v567 = vpack.c.b16 %v519, %v515
        %v568 = vpack.c.b16 %v520, %v516
        %v569 = vpack.c.b16 %v521, %v517
        %v570 = vpack.c.b16 %v526, %v522
        %v571 = vpack.c.b16 %v527, %v523
        %v572 = vpack.c.b16 %v528, %v524
        %v573 = vpack.c.b16 %v529, %v525
        %v574 = vpack.c.b16 %v534, %v530
        %v575 = vpack.c.b16 %v535, %v531
        %v576 = vpack.c.b16 %v536, %v532
        %v577 = vpack.c.b16 %v537, %v533
        %v578 = vpack.c.b16 %v542, %v538
        %v579 = vpack.c.b16 %v543, %v539
        %v580 = vpack.c.b16 %v544, %v540
        %v581 = vpack.c.b16 %v545, %v541
        %v582 = vpack.c.b16 %v550, %v546
        %v583 = vpack.c.b16 %v551, %v547
        %v584 = vpack.c.b16 %v552, %v548
        %v585 = vpack.c.b16 %v553, %v549
        %618 = vmatprep.subr.bf16.mxu0 %v555
        %619 = vmatpush1.bf16.msra.mxu0 %v554
        %620 = vmatprep.subr.bf16.mxu0 %v559
        %621 = vmatpush1.bf16.msra.mxu0 %v558
        %622 = vmatprep.subr.bf16.mxu0 %v563
        %623 = vmatpush1.bf16.msra.mxu0 %v562
        %624 = vmatprep.subr.bf16.mxu0 %v567
        %625 = vmatpush1.bf16.msra.mxu0 %v566
        %626 = vmatprep.subr.bf16.mxu0 %v571
        %627 = vmatpush1.bf16.msra.mxu0 %v570
        %628 = vmatprep.subr.bf16.mxu0 %v575
        %629 = vmatpush1.bf16.msra.mxu0 %v574
        %630 = vmatprep.subr.bf16.mxu0 %v579
        %631 = vmatpush1.bf16.msra.mxu0 %v578
        %632 = vmatprep.subr.bf16.mxu0 %v583
        %633 = vmatpush1.bf16.msra.mxu0 %v582
        %634 = vmatprep.subr.bf16.mxu0 0
        %635 = vmatpush1.bf16.msra.mxu0 0
        %636 = vmatprep.subr.bf16.mxu0 0
        %637 = vmatpush1.bf16.msra.mxu0 0
        %638 = vmatprep.subr.bf16.mxu0 0
        %639 = vmatpush1.bf16.msra.mxu0 0
        %640 = vmatprep.subr.bf16.mxu0 0
        %641 = vmatpush1.bf16.msra.mxu0 0
        %642 = vmatprep.subr.bf16.mxu0 0
        %643 = vmatpush1.bf16.msra.mxu0 0
        %644 = vmatprep.subr.bf16.mxu0 0
        %645 = vmatpush1.bf16.msra.mxu0 0
        %646 = vmatprep.subr.bf16.mxu0 0
        %647 = vmatpush1.bf16.msra.mxu0 0
        %648 = vmatprep.subr.bf16.mxu0 0
        %649 = vmatpush1.bf16.msra.mxu0 0
        %650 = vmatprep.mubr.bf16.mxu0 0
        %651 = vmatmul.mubr.bf16.gmra.mrb[0].mxu0 %v384
        %v652 = vpop.f32.mrb[0].mxu0
        %v653 = vadd.f32 %v441, %v652
        %v654 = vpop.f32.mrb[0].mxu0
        %v655 = vadd.f32 %v445, %v654
        %v656 = vpop.f32.mrb[0].mxu0
        %v657 = vadd.f32 %v441, %v656
        %v658 = vpop.f32.mrb[0].mxu0
        %v659 = vadd.f32 %v445, %v658
        %660 = vmatprep.mubr.bf16.mxu0 0
        %661 = vmatmul.mubr.bf16.gmra.mrb[0].mxu0 %v385
        %v662 = vpop.f32.mrb[0].mxu0
        %v663 = vadd.f32 %v441, %v662
        %v664 = vpop.f32.mrb[0].mxu0
        %v665 = vadd.f32 %v445, %v664
        %v666 = vpop.f32.mrb[0].mxu0
        %v667 = vadd.f32 %v441, %v666
        %v668 = vpop.f32.mrb[0].mxu0
        %v669 = vadd.f32 %v445, %v668
        %670 = vmatprep.mubr.bf16.mxu0 0
        %671 = vmatmul.mubr.bf16.gmra.mrb[0].mxu0 %v386
        %v672 = vpop.f32.mrb[0].mxu0
        %v673 = vadd.f32 %v441, %v672
        %v674 = vpop.f32.mrb[0].mxu0
        %v675 = vadd.f32 %v445, %v674
        %v676 = vpop.f32.mrb[0].mxu0
        %v677 = vadd.f32 %v441, %v676
        %v678 = vpop.f32.mrb[0].mxu0
        %v679 = vadd.f32 %v445, %v678
        %680 = vmatprep.mubr.bf16.mxu0 0
        %681 = vmatmul.mubr.bf16.gmra.mrb[0].mxu0 %v387
        %v682 = vpop.f32.mrb[0].mxu0
        %v683 = vadd.f32 %v441, %v682
        %v684 = vpop.f32.mrb[0].mxu0
        %v685 = vadd.f32 %v445, %v684
        %v686 = vpop.f32.mrb[0].mxu0
        %v687 = vadd.f32 %v441, %v686
        %v688 = vpop.f32.mrb[0].mxu0
        %v689 = vadd.f32 %v445, %v688
        %690 = vdwg.mxu0
        %691 = vmatprep.subr.bf16.mxu0 %v557
        %692 = vmatpush1.bf16.msra.mxu0 %v556
        %693 = vmatprep.subr.bf16.mxu0 %v561
        %694 = vmatpush1.bf16.msra.mxu0 %v560
        %695 = vmatprep.subr.bf16.mxu0 %v565
        %696 = vmatpush1.bf16.msra.mxu0 %v564
        %697 = vmatprep.subr.bf16.mxu0 %v569
        %698 = vmatpush1.bf16.msra.mxu0 %v568
        %699 = vmatprep.subr.bf16.mxu0 %v573
        %700 = vmatpush1.bf16.msra.mxu0 %v572
        %701 = vmatprep.subr.bf16.mxu0 %v577
        %702 = vmatpush1.bf16.msra.mxu0 %v576
        %703 = vmatprep.subr.bf16.mxu0 %v581
        %704 = vmatpush1.bf16.msra.mxu0 %v580
        %705 = vmatprep.subr.bf16.mxu0 %v585
        %706 = vmatpush1.bf16.msra.mxu0 %v584
        %707 = vmatprep.subr.bf16.mxu0 0
        %708 = vmatpush1.bf16.msra.mxu0 0
        %709 = vmatprep.subr.bf16.mxu0 0
        %710 = vmatpush1.bf16.msra.mxu0 0
        %711 = vmatprep.subr.bf16.mxu0 0
        %712 = vmatpush1.bf16.msra.mxu0 0
        %713 = vmatprep.subr.bf16.mxu0 0
        %714 = vmatpush1.bf16.msra.mxu0 0
        %715 = vmatprep.subr.bf16.mxu0 0
        %716 = vmatpush1.bf16.msra.mxu0 0
        %717 = vmatprep.subr.bf16.mxu0 0
        %718 = vmatpush1.bf16.msra.mxu0 0
        %719 = vmatprep.subr.bf16.mxu0 0
        %720 = vmatpush1.bf16.msra.mxu0 0
        %721 = vmatprep.subr.bf16.mxu0 0
        %722 = vmatpush1.bf16.msra.mxu0 0
        %723 = vmatprep.mubr.bf16.mxu0 0
        %724 = vmatmul.mubr.bf16.gmra.mrb[0].mxu0 %v384
        %v725 = vpop.f32.mrb[0].mxu0
        %v726 = vadd.f32 %v449, %v725
        %v727 = vpop.f32.mrb[0].mxu0
        %v728 = vadd.f32 %v453, %v727
        %v729 = vpop.f32.mrb[0].mxu0
        %v730 = vadd.f32 %v449, %v729
        %v731 = vpop.f32.mrb[0].mxu0
        %v732 = vadd.f32 %v453, %v731
        %733 = vmatprep.mubr.bf16.mxu0 0
        %734 = vmatmul.mubr.bf16.gmra.mrb[0].mxu0 %v385
        %v735 = vpop.f32.mrb[0].mxu0
        %v736 = vadd.f32 %v449, %v735
        %v737 = vpop.f32.mrb[0].mxu0
        %v738 = vadd.f32 %v453, %v737
        %v739 = vpop.f32.mrb[0].mxu0
        %v740 = vadd.f32 %v449, %v739
        %v741 = vpop.f32.mrb[0].mxu0
        %v742 = vadd.f32 %v453, %v741
        %743 = vmatprep.mubr.bf16.mxu0 0
        %744 = vmatmul.mubr.bf16.gmra.mrb[0].mxu0 %v386
        %v745 = vpop.f32.mrb[0].mxu0
        %v746 = vadd.f32 %v449, %v745
        %v747 = vpop.f32.mrb[0].mxu0
        %v748 = vadd.f32 %v453, %v747
        %v749 = vpop.f32.mrb[0].mxu0
        %v750 = vadd.f32 %v449, %v749
        %v751 = vpop.f32.mrb[0].mxu0
        %v752 = vadd.f32 %v453, %v751
        %753 = vmatprep.mubr.bf16.mxu0 0
        %754 = vmatmul.mubr.bf16.gmra.mrb[0].mxu0 %v387
        %v755 = vpop.f32.mrb[0].mxu0
        %v756 = vadd.f32 %v449, %v755
        %v757 = vpop.f32.mrb[0].mxu0
        %v758 = vadd.f32 %v453, %v757
        %v759 = vpop.f32.mrb[0].mxu0
        %v760 = vadd.f32 %v449, %v759
        %v761 = vpop.f32.mrb[0].mxu0
        %v762 = vadd.f32 %v453, %v761
        %763 = vdwg.mxu0
        %v764 = vmax.f32 %v653, 0.0
        %v765 = vmax.f32 %v655, 0.0
        %v766 = vmax.f32 %v726, 0.0
        %v767 = vmax.f32 %v728, 0.0
        %v768 = vmax.f32 %v657, 0.0
        %v769 = vmax.f32 %v659, 0.0
        %v770 = vmax.f32 %v730, 0.0
        %v771 = vmax.f32 %v732, 0.0
        %v772 = vmax.f32 %v663, 0.0
        %v773 = vmax.f32 %v665, 0.0
        %v774 = vmax.f32 %v736, 0.0
        %v775 = vmax.f32 %v738, 0.0
        %v776 = vmax.f32 %v667, 0.0
        %v777 = vmax.f32 %v669, 0.0
        %v778 = vmax.f32 %v740, 0.0
        %v779 = vmax.f32 %v742, 0.0
        %v780 = vmax.f32 %v673, 0.0
        %v781 = vmax.f32 %v675, 0.0
        %v782 = vmax.f32 %v746, 0.0
        %v783 = vmax.f32 %v748, 0.0
        %v784 = vmax.f32 %v677, 0.0
        %v785 = vmax.f32 %v679, 0.0
        %v786 = vmax.f32 %v750, 0.0
        %v787 = vmax.f32 %v752, 0.0
        %v788 = vmax.f32 %v683, 0.0
        %v789 = vmax.f32 %v685, 0.0
        %v790 = vmax.f32 %v756, 0.0
        %v791 = vmax.f32 %v758, 0.0
        %v792 = vmax.f32 %v687, 0.0
        %v793 = vmax.f32 %v689, 0.0
        %v794 = vmax.f32 %v760, 0.0
        %v795 = vmax.f32 %v762, 0.0
        %796 = vst [vmem:[#allocation2 + $0x40] sm:$0xff] %v764
        %797 = vst [vmem:[#allocation2 + $0x48] sm:$0xff] %v765
        %798 = vst [vmem:[#allocation2 + $0x50] sm:$0xff] %v766
        %799 = vst [vmem:[#allocation2 + $0x58] sm:$0xff] %v767
        %800 = vst [vmem:[#allocation2 + $0x60] sm:$0xff] %v768
        %801 = vst [vmem:[#allocation2 + $0x68] sm:$0xff] %v769
        %802 = vst [vmem:[#allocation2 + $0x70] sm:$0xff] %v770
        %803 = vst [vmem:[#allocation2 + $0x78] sm:$0xff] %v771
        %804 = vst [vmem:[#allocation2 + $0x80] sm:$0xff] %v772
        %805 = vst [vmem:[#allocation2 + $0x88] sm:$0xff] %v773
        %806 = vst [vmem:[#allocation2 + $0x90] sm:$0xff] %v774
        %807 = vst [vmem:[#allocation2 + $0x98] sm:$0xff] %v775
        %808 = vst [vmem:[#allocation2 + $0xa0] sm:$0xff] %v776
        %809 = vst [vmem:[#allocation2 + $0xa8] sm:$0xff] %v777
        %810 = vst [vmem:[#allocation2 + $0xb0] sm:$0xff] %v778
        %811 = vst [vmem:[#allocation2 + $0xb8] sm:$0xff] %v779
        %812 = vst [vmem:[#allocation2 + $0xc0] sm:$0xff] %v780
        %813 = vst [vmem:[#allocation2 + $0xc8] sm:$0xff] %v781
        %814 = vst [vmem:[#allocation2 + $0xd0] sm:$0xff] %v782
        %815 = vst [vmem:[#allocation2 + $0xd8] sm:$0xff] %v783
        %816 = vst [vmem:[#allocation2 + $0xe0] sm:$0xff] %v784
        %817 = vst [vmem:[#allocation2 + $0xe8] sm:$0xff] %v785
        %818 = vst [vmem:[#allocation2 + $0xf0] sm:$0xff] %v786
        %819 = vst [vmem:[#allocation2 + $0xf8] sm:$0xff] %v787
        %820 = vst [vmem:[#allocation2 + $0x100] sm:$0xff] %v788
        %821 = vst [vmem:[#allocation2 + $0x108] sm:$0xff] %v789
        %822 = vst [vmem:[#allocation2 + $0x110] sm:$0xff] %v790
        %823 = vst [vmem:[#allocation2 + $0x118] sm:$0xff] %v791
        %824 = vst [vmem:[#allocation2 + $0x120] sm:$0xff] %v792
        %825 = vst [vmem:[#allocation2 + $0x128] sm:$0xff] %v793
        %826 = vst [vmem:[#allocation2 + $0x130] sm:$0xff] %v794
        %827 = vst [vmem:[#allocation2 + $0x138] sm:$0xff] %v795
        %v828 = vlaneseq
        %v829 = vshrl.u32 %v828, 7
        %v830 = vadd.s32 %v829, 8
        %v831 = vadd.s32 %v829, 16
        %v832 = vadd.s32 %v829, 24
        %v833 = vadd.s32 %v829, 32
        %v834 = vadd.s32 %v829, 40
        %v835 = vadd.s32 %v829, 48
        %v836 = vadd.s32 %v829, 56
        %vm837 = vcmp.lt.s32.totalorder %v829, 0
        %v838 = vsub.s32 0, %v829
        %v839 = vsel %vm837, %v838, %v829
        %v840 = vshrl.u32 %v839, 3
        %v841 = vand.u32 %v839, 7
        %v842 = vsub.s32 0, %v841
        %v843 = vsel %vm837, %v842, %v841
        %vm844 = vcmp.lt.s32.totalorder %v830, 0
        %v845 = vsub.s32 0, %v830
        %v846 = vsel %vm844, %v845, %v830
        %v847 = vshrl.u32 %v846, 3
        %v848 = vand.u32 %v846, 7
        %v849 = vsub.s32 0, %v848
        %v850 = vsel %vm844, %v849, %v848
        %vm851 = vcmp.lt.s32.totalorder %v831, 0
        %v852 = vsub.s32 0, %v831
        %v853 = vsel %vm851, %v852, %v831
        %v854 = vshrl.u32 %v853, 3
        %v855 = vand.u32 %v853, 7
        %v856 = vsub.s32 0, %v855
        %v857 = vsel %vm851, %v856, %v855
        %vm858 = vcmp.lt.s32.totalorder %v832, 0
        %v859 = vsub.s32 0, %v832
        %v860 = vsel %vm858, %v859, %v832
        %v861 = vshrl.u32 %v860, 3
        %v862 = vand.u32 %v860, 7
        %v863 = vsub.s32 0, %v862
        %v864 = vsel %vm858, %v863, %v862
        %vm865 = vcmp.lt.s32.totalorder %v833, 0
        %v866 = vsub.s32 0, %v833
        %v867 = vsel %vm865, %v866, %v833
        %v868 = vshrl.u32 %v867, 3
        %v869 = vand.u32 %v867, 7
        %v870 = vsub.s32 0, %v869
        %v871 = vsel %vm865, %v870, %v869
        %vm872 = vcmp.lt.s32.totalorder %v834, 0
        %v873 = vsub.s32 0, %v834
        %v874 = vsel %vm872, %v873, %v834
        %v875 = vshrl.u32 %v874, 3
        %v876 = vand.u32 %v874, 7
        %v877 = vsub.s32 0, %v876
        %v878 = vsel %vm872, %v877, %v876
        %vm879 = vcmp.lt.s32.totalorder %v835, 0
        %v880 = vsub.s32 0, %v835
        %v881 = vsel %vm879, %v880, %v835
        %v882 = vshrl.u32 %v881, 3
        %v883 = vand.u32 %v881, 7
        %v884 = vsub.s32 0, %v883
        %v885 = vsel %vm879, %v884, %v883
        %vm886 = vcmp.lt.s32.totalorder %v836, 0
        %v887 = vsub.s32 0, %v836
        %v888 = vsel %vm886, %v887, %v836
        %v889 = vshrl.u32 %v888, 3
        %v890 = vand.u32 %v888, 7
        %v891 = vsub.s32 0, %v890
        %v892 = vsel %vm886, %v891, %v890
        %vm893 = vcmp.ne.s32.totalorder %v843, 0
        %vm894 = vcmp.ne.s32.totalorder %v850, 0
        %vm895 = vcmp.ne.s32.totalorder %v857, 0
        %vm896 = vcmp.ne.s32.totalorder %v864, 0
        %vm897 = vcmp.ne.s32.totalorder %v871, 0
        %vm898 = vcmp.ne.s32.totalorder %v878, 0
        %vm899 = vcmp.ne.s32.totalorder %v885, 0
        %vm900 = vcmp.ne.s32.totalorder %v892, 0
        %vm901 = vcmp.lt.s32.totalorder %v843, 0
        %vm902 = vcmp.lt.s32.totalorder %v850, 0
        %vm903 = vcmp.lt.s32.totalorder %v857, 0
        %vm904 = vcmp.lt.s32.totalorder %v864, 0
        %vm905 = vcmp.lt.s32.totalorder %v871, 0
        %vm906 = vcmp.lt.s32.totalorder %v878, 0
        %vm907 = vcmp.lt.s32.totalorder %v885, 0
        %vm908 = vcmp.lt.s32.totalorder %v892, 0
        %vm909 = vmand %vm901, %vm893
        %vm910 = vmand %vm902, %vm894
        %vm911 = vmand %vm903, %vm895
        %vm912 = vmand %vm904, %vm896
        %vm913 = vmand %vm905, %vm897
        %vm914 = vmand %vm906, %vm898
        %vm915 = vmand %vm907, %vm899
        %vm916 = vmand %vm908, %vm900
        %v917 = vadd.s32 %v843, 8
        %v918 = vadd.s32 %v850, 8
        %v919 = vadd.s32 %v857, 8
        %v920 = vadd.s32 %v864, 8
        %v921 = vadd.s32 %v871, 8
        %v922 = vadd.s32 %v878, 8
        %v923 = vadd.s32 %v885, 8
        %v924 = vadd.s32 %v892, 8
        %v925 = vsel %vm909, %v917, %v843
        %v926 = vsel %vm910, %v918, %v850
        %v927 = vsel %vm911, %v919, %v857
        %v928 = vsel %vm912, %v920, %v864
        %v929 = vsel %vm913, %v921, %v871
        %v930 = vsel %vm914, %v922, %v878
        %v931 = vsel %vm915, %v923, %v885
        %v932 = vsel %vm916, %v924, %v892
        %v933 = vld [vmem:[#allocation2] sm:$0x80]
        %v934 = vld [vmem:[#allocation2 + $0x8] sm:$0x80]
        %v935 = vld [vmem:[#allocation2 + $0x10] sm:$0x80]
        %v936 = vld [vmem:[#allocation2 + $0x18] sm:$0x80]
        %v937 = vld [vmem:[#allocation2 + $0x20] sm:$0xff]
        %v938 = vld [vmem:[#allocation2 + $0x28] sm:$0xff]
        %v939 = vld [vmem:[#allocation2 + $0x30] sm:$0xff]
        %v940 = vld [vmem:[#allocation2 + $0x38] sm:$0xff]
        %v941 = vld [vmem:[#allocation2 + $0x40] sm:$0xff]
        %v942 = vld [vmem:[#allocation2 + $0x48] sm:$0xff]
        %v943 = vld [vmem:[#allocation2 + $0x50] sm:$0xff]
        %v944 = vld [vmem:[#allocation2 + $0x58] sm:$0xff]
        %v945 = vld [vmem:[#allocation2 + $0x60] sm:$0xff]
        %v946 = vld [vmem:[#allocation2 + $0x68] sm:$0xff]
        %v947 = vld [vmem:[#allocation2 + $0x70] sm:$0xff]
        %v948 = vld [vmem:[#allocation2 + $0x78] sm:$0xff]
        %v949 = vld [vmem:[#allocation2 + $0x80] sm:$0xff]
        %v950 = vld [vmem:[#allocation2 + $0x88] sm:$0xff]
        %v951 = vld [vmem:[#allocation2 + $0x90] sm:$0xff]
        %v952 = vld [vmem:[#allocation2 + $0x98] sm:$0xff]
        %v953 = vld [vmem:[#allocation2 + $0xa0] sm:$0xff]
        %v954 = vld [vmem:[#allocation2 + $0xa8] sm:$0xff]
        %v955 = vld [vmem:[#allocation2 + $0xb0] sm:$0xff]
        %v956 = vld [vmem:[#allocation2 + $0xb8] sm:$0xff]
        %v957 = vld [vmem:[#allocation2 + $0xc0] sm:$0xff]
        %v958 = vld [vmem:[#allocation2 + $0xc8] sm:$0xff]
        %v959 = vld [vmem:[#allocation2 + $0xd0] sm:$0xff]
        %v960 = vld [vmem:[#allocation2 + $0xd8] sm:$0xff]
        %v961 = vld [vmem:[#allocation2 + $0xe0] sm:$0xff]
        %v962 = vld [vmem:[#allocation2 + $0xe8] sm:$0xff]
        %v963 = vld [vmem:[#allocation2 + $0xf0] sm:$0xff]
        %v964 = vld [vmem:[#allocation2 + $0xf8] sm:$0xff]
        %v965 = vld [vmem:[#allocation2 + $0x100] sm:$0x7f]
        %v966 = vld [vmem:[#allocation2 + $0x108] sm:$0x7f]
        %v967 = vld [vmem:[#allocation2 + $0x110] sm:$0x7f]
        %v968 = vld [vmem:[#allocation2 + $0x118] sm:$0x7f]
        %vm969 = vcmp.ge.s32.totalorder %v925, 1
        %vm970 = vcmp.ge.s32.totalorder %v926, 1
        %vm971 = vcmp.ge.s32.totalorder %v927, 1
        %vm972 = vcmp.ge.s32.totalorder %v928, 1
        %vm973 = vcmp.ge.s32.totalorder %v929, 1
        %vm974 = vcmp.ge.s32.totalorder %v930, 1
        %vm975 = vcmp.ge.s32.totalorder %v931, 1
        %vm976 = vcmp.ge.s32.totalorder %v932, 1
        %v977 = vsel %vm969, 1, 0
        %v978 = vsel %vm970, 1, 0
        %v979 = vsel %vm971, 1, 0
        %v980 = vsel %vm972, 1, 0
        %v981 = vsel %vm973, 1, 0
        %v982 = vsel %vm974, 1, 0
        %v983 = vsel %vm975, 1, 0
        %v984 = vsel %vm976, 1, 0
        %vm985 = vcmp.eq.s32.totalorder %v977, 1
        %vm986 = vcmp.eq.s32.totalorder %v978, 1
        %vm987 = vcmp.eq.s32.totalorder %v979, 1
        %vm988 = vcmp.eq.s32.totalorder %v980, 1
        %vm989 = vcmp.eq.s32.totalorder %v981, 1
        %vm990 = vcmp.eq.s32.totalorder %v982, 1
        %vm991 = vcmp.eq.s32.totalorder %v983, 1
        %vm992 = vcmp.eq.s32.totalorder %v984, 1
        %vm1029 = vcmask 1040384
        %v1030 = vrot.slane %v933, 7
        %v1031 = vrot.slane %v937, 7
        %v1032 = vsel %vm1029, %v1030, %v1031
        %v1033 = vrot.slane %v934, 7
        %v1034 = vrot.slane %v938, 7
        %v1035 = vsel %vm1029, %v1033, %v1034
        %v1036 = vrot.slane %v935, 7
        %v1037 = vrot.slane %v939, 7
        %v1038 = vsel %vm1029, %v1036, %v1037
        %v1039 = vrot.slane %v936, 7
        %v1040 = vrot.slane %v940, 7
        %v1041 = vsel %vm1029, %v1039, %v1040
        %v1042 = vrot.slane %v941, 7
        %v1043 = vsel %vm1029, %v1031, %v1042
        %v1044 = vrot.slane %v942, 7
        %v1045 = vsel %vm1029, %v1034, %v1044
        %v1046 = vrot.slane %v943, 7
        %v1047 = vsel %vm1029, %v1037, %v1046
        %v1048 = vrot.slane %v944, 7
        %v1049 = vsel %vm1029, %v1040, %v1048
        %v1050 = vrot.slane %v945, 7
        %v1051 = vsel %vm1029, %v1042, %v1050
        %v1052 = vrot.slane %v946, 7
        %v1053 = vsel %vm1029, %v1044, %v1052
        %v1054 = vrot.slane %v947, 7
        %v1055 = vsel %vm1029, %v1046, %v1054
        %v1056 = vrot.slane %v948, 7
        %v1057 = vsel %vm1029, %v1048, %v1056
        %v1058 = vrot.slane %v949, 7
        %v1059 = vsel %vm1029, %v1050, %v1058
        %v1060 = vrot.slane %v950, 7
        %v1061 = vsel %vm1029, %v1052, %v1060
        %v1062 = vrot.slane %v951, 7
        %v1063 = vsel %vm1029, %v1054, %v1062
        %v1064 = vrot.slane %v952, 7
        %v1065 = vsel %vm1029, %v1056, %v1064
        %v1066 = vrot.slane %v953, 7
        %v1067 = vsel %vm1029, %v1058, %v1066
        %v1068 = vrot.slane %v954, 7
        %v1069 = vsel %vm1029, %v1060, %v1068
        %v1070 = vrot.slane %v955, 7
        %v1071 = vsel %vm1029, %v1062, %v1070
        %v1072 = vrot.slane %v956, 7
        %v1073 = vsel %vm1029, %v1064, %v1072
        %v1074 = vrot.slane %v957, 7
        %v1075 = vsel %vm1029, %v1066, %v1074
        %v1076 = vrot.slane %v958, 7
        %v1077 = vsel %vm1029, %v1068, %v1076
        %v1078 = vrot.slane %v959, 7
        %v1079 = vsel %vm1029, %v1070, %v1078
        %v1080 = vrot.slane %v960, 7
        %v1081 = vsel %vm1029, %v1072, %v1080
        %v1082 = vrot.slane %v961, 7
        %v1083 = vsel %vm1029, %v1074, %v1082
        %v1084 = vrot.slane %v962, 7
        %v1085 = vsel %vm1029, %v1076, %v1084
        %v1086 = vrot.slane %v963, 7
        %v1087 = vsel %vm1029, %v1078, %v1086
        %v1088 = vrot.slane %v964, 7
        %v1089 = vsel %vm1029, %v1080, %v1088
        %v1090 = vrot.slane %v965, 7
        %v1091 = vsel %vm1029, %v1082, %v1090
        %v1092 = vrot.slane %v966, 7
        %v1093 = vsel %vm1029, %v1084, %v1092
        %v1094 = vrot.slane %v967, 7
        %v1095 = vsel %vm1029, %v1086, %v1094
        %v1096 = vrot.slane %v968, 7
        %v1097 = vsel %vm1029, %v1088, %v1096
        %v1130 = vsel %vm985, %v1032, 0.0
        %v1131 = vsel %vm985, %v1035, 0.0
        %v1132 = vsel %vm985, %v1038, 0.0
        %v1133 = vsel %vm985, %v1041, 0.0
        %v1134 = vsel %vm986, %v1043, 0.0
        %v1135 = vsel %vm986, %v1045, 0.0
        %v1136 = vsel %vm986, %v1047, 0.0
        %v1137 = vsel %vm986, %v1049, 0.0
        %v1138 = vsel %vm987, %v1051, 0.0
        %v1139 = vsel %vm987, %v1053, 0.0
        %v1140 = vsel %vm987, %v1055, 0.0
        %v1141 = vsel %vm987, %v1057, 0.0
        %v1142 = vsel %vm988, %v1059, 0.0
        %v1143 = vsel %vm988, %v1061, 0.0
        %v1144 = vsel %vm988, %v1063, 0.0
        %v1145 = vsel %vm988, %v1065, 0.0
        %v1146 = vsel %vm989, %v1067, 0.0
        %v1147 = vsel %vm989, %v1069, 0.0
        %v1148 = vsel %vm989, %v1071, 0.0
        %v1149 = vsel %vm989, %v1073, 0.0
        %v1150 = vsel %vm990, %v1075, 0.0
        %v1151 = vsel %vm990, %v1077, 0.0
        %v1152 = vsel %vm990, %v1079, 0.0
        %v1153 = vsel %vm990, %v1081, 0.0
        %v1154 = vsel %vm991, %v1083, 0.0
        %v1155 = vsel %vm991, %v1085, 0.0
        %v1156 = vsel %vm991, %v1087, 0.0
        %v1157 = vsel %vm991, %v1089, 0.0
        %v1158 = vsel %vm992, %v1091, 0.0
        %v1159 = vsel %vm992, %v1093, 0.0
        %v1160 = vsel %vm992, %v1095, 0.0
        %v1161 = vsel %vm992, %v1097, 0.0
        %v1162 = vpack.c.bf16 %v1134, %v1130
        %v1163 = vpack.c.bf16 %v1135, %v1131
        %v1164 = vpack.c.bf16 %v1136, %v1132
        %v1165 = vpack.c.bf16 %v1137, %v1133
        %v1166 = vpack.c.bf16 %v1142, %v1138
        %v1167 = vpack.c.bf16 %v1143, %v1139
        %v1168 = vpack.c.bf16 %v1144, %v1140
        %v1169 = vpack.c.bf16 %v1145, %v1141
        %v1170 = vpack.c.bf16 %v1150, %v1146
        %v1171 = vpack.c.bf16 %v1151, %v1147
        %v1172 = vpack.c.bf16 %v1152, %v1148
        %v1173 = vpack.c.bf16 %v1153, %v1149
        %v1174 = vpack.c.bf16 %v1158, %v1154
        %v1175 = vpack.c.bf16 %v1159, %v1155
        %v1176 = vpack.c.bf16 %v1160, %v1156
        %v1177 = vpack.c.bf16 %v1161, %v1157
        %v1178 = vld [vmem:[#allocation12] sm:$0xf]
        %v1179 = vld [vmem:[#allocation12 + $0x4] sm:$0xf]
        %v1180 = vld [vmem:[#allocation12 + $0x8] sm:$0xf]
        %v1181 = vld [vmem:[#allocation12 + $0xc] sm:$0xf]
        %v1182 = vld [vmem:[#allocation12 + $0x10] sm:$0xf]
        %v1183 = vld [vmem:[#allocation12 + $0x14] sm:$0xf]
        %v1184 = vld [vmem:[#allocation12 + $0x18] sm:$0xf]
        %v1185 = vld [vmem:[#allocation12 + $0x1c] sm:$0xf]
        %v1186 = vld [vmem:[#allocation12 + $0x20] sm:$0xf]
        %v1187 = vld [vmem:[#allocation12 + $0x24] sm:$0xf]
        %v1188 = vld [vmem:[#allocation12 + $0x28] sm:$0xf]
        %v1189 = vld [vmem:[#allocation12 + $0x2c] sm:$0xf]
        %v1190 = vld [vmem:[#allocation12 + $0x30] sm:$0xf]
        %v1191 = vld [vmem:[#allocation12 + $0x34] sm:$0xf]
        %v1192 = vld [vmem:[#allocation12 + $0x38] sm:$0xf]
        %v1193 = vld [vmem:[#allocation12 + $0x3c] sm:$0xf]
        %v1194 = vld [vmem:[#allocation12 + $0x40] sm:$0xf]
        %v1195 = vld [vmem:[#allocation12 + $0x44] sm:$0xf]
        %v1196 = vld [vmem:[#allocation12 + $0x48] sm:$0xf]
        %v1197 = vld [vmem:[#allocation12 + $0x4c] sm:$0xf]
        %v1198 = vld [vmem:[#allocation12 + $0x50] sm:$0xf]
        %v1199 = vld [vmem:[#allocation12 + $0x54] sm:$0xf]
        %v1200 = vld [vmem:[#allocation12 + $0x58] sm:$0xf]
        %v1201 = vld [vmem:[#allocation12 + $0x5c] sm:$0xf]
        %v1202 = vld [vmem:[#allocation12 + $0x60] sm:$0xf]
        %v1203 = vld [vmem:[#allocation12 + $0x64] sm:$0xf]
        %v1204 = vld [vmem:[#allocation12 + $0x68] sm:$0xf]
        %v1205 = vld [vmem:[#allocation12 + $0x6c] sm:$0xf]
        %v1206 = vld [vmem:[#allocation12 + $0x70] sm:$0xf]
        %v1207 = vld [vmem:[#allocation12 + $0x74] sm:$0xf]
        %v1208 = vld [vmem:[#allocation12 + $0x78] sm:$0xf]
        %v1209 = vld [vmem:[#allocation12 + $0x7c] sm:$0xf]
        %v1210 = vld [vmem:[#allocation12 + $0x80] sm:$0xf]
        %v1211 = vld [vmem:[#allocation12 + $0x84] sm:$0xf]
        %v1212 = vld [vmem:[#allocation12 + $0x88] sm:$0xf]
        %v1213 = vld [vmem:[#allocation12 + $0x8c] sm:$0xf]
        %v1214 = vld [vmem:[#allocation12 + $0x90] sm:$0xf]
        %v1215 = vld [vmem:[#allocation12 + $0x94] sm:$0xf]
        %v1216 = vld [vmem:[#allocation12 + $0x98] sm:$0xf]
        %v1217 = vld [vmem:[#allocation12 + $0x9c] sm:$0xf]
        %v1218 = vld [vmem:[#allocation12 + $0xa0] sm:$0xf]
        %v1219 = vld [vmem:[#allocation12 + $0xa4] sm:$0xf]
        %v1220 = vld [vmem:[#allocation12 + $0xa8] sm:$0xf]
        %v1221 = vld [vmem:[#allocation12 + $0xac] sm:$0xf]
        %v1222 = vld [vmem:[#allocation12 + $0xb0] sm:$0xf]
        %v1223 = vld [vmem:[#allocation12 + $0xb4] sm:$0xf]
        %v1224 = vld [vmem:[#allocation12 + $0xb8] sm:$0xf]
        %v1225 = vld [vmem:[#allocation12 + $0xbc] sm:$0xf]
        %v1226 = vld [vmem:[#allocation12 + $0xc0] sm:$0xf]
        %v1227 = vld [vmem:[#allocation12 + $0xc4] sm:$0xf]
        %v1228 = vld [vmem:[#allocation12 + $0xc8] sm:$0xf]
        %v1229 = vld [vmem:[#allocation12 + $0xcc] sm:$0xf]
        %v1230 = vld [vmem:[#allocation12 + $0xd0] sm:$0xf]
        %v1231 = vld [vmem:[#allocation12 + $0xd4] sm:$0xf]
        %v1232 = vld [vmem:[#allocation12 + $0xd8] sm:$0xf]
        %v1233 = vld [vmem:[#allocation12 + $0xdc] sm:$0xf]
        %v1234 = vld [vmem:[#allocation12 + $0xe0] sm:$0xf]
        %v1235 = vld [vmem:[#allocation12 + $0xe4] sm:$0xf]
        %v1236 = vld [vmem:[#allocation12 + $0xe8] sm:$0xf]
        %v1237 = vld [vmem:[#allocation12 + $0xec] sm:$0xf]
        %v1238 = vld [vmem:[#allocation12 + $0xf0] sm:$0xf]
        %v1239 = vld [vmem:[#allocation12 + $0xf4] sm:$0xf]
        %v1240 = vld [vmem:[#allocation12 + $0xf8] sm:$0xf]
        %v1241 = vld [vmem:[#allocation12 + $0xfc] sm:$0xf]
        %v1242 = vld [vmem:[#allocation2 + $0x100] sm:$0xff]
        %v1243 = vld [vmem:[#allocation2 + $0x108] sm:$0xff]
        %v1244 = vld [vmem:[#allocation2 + $0x110] sm:$0xff]
        %v1245 = vld [vmem:[#allocation2 + $0x118] sm:$0xff]
        %v1246 = vpack.c.bf16 %v941, %v937
        %v1247 = vpack.c.bf16 %v942, %v938
        %v1248 = vpack.c.bf16 %v943, %v939
        %v1249 = vpack.c.bf16 %v944, %v940
        %v1250 = vpack.c.bf16 %v949, %v945
        %v1251 = vpack.c.bf16 %v950, %v946
        %v1252 = vpack.c.bf16 %v951, %v947
        %v1253 = vpack.c.bf16 %v952, %v948
        %v1254 = vpack.c.bf16 %v957, %v953
        %v1255 = vpack.c.bf16 %v958, %v954
        %v1256 = vpack.c.bf16 %v959, %v955
        %v1257 = vpack.c.bf16 %v960, %v956
        %v1258 = vpack.c.bf16 %v1242, %v961
        %v1259 = vpack.c.bf16 %v1243, %v962
        %v1260 = vpack.c.bf16 %v1244, %v963
        %v1261 = vpack.c.bf16 %v1245, %v964
        %s1262 = scalar_lea.vmem [#allocation12], 256
        %v1263 = vld [vmem:[%s1262] sm:$0xf]
        %v1264 = vld [vmem:[%s1262 + $0x4] sm:$0xf]
        %v1265 = vld [vmem:[%s1262 + $0x8] sm:$0xf]
        %v1266 = vld [vmem:[%s1262 + $0xc] sm:$0xf]
        %v1267 = vld [vmem:[%s1262 + $0x10] sm:$0xf]
        %v1268 = vld [vmem:[%s1262 + $0x14] sm:$0xf]
        %v1269 = vld [vmem:[%s1262 + $0x18] sm:$0xf]
        %v1270 = vld [vmem:[%s1262 + $0x1c] sm:$0xf]
        %v1271 = vld [vmem:[%s1262 + $0x20] sm:$0xf]
        %v1272 = vld [vmem:[%s1262 + $0x24] sm:$0xf]
        %v1273 = vld [vmem:[%s1262 + $0x28] sm:$0xf]
        %v1274 = vld [vmem:[%s1262 + $0x2c] sm:$0xf]
        %v1275 = vld [vmem:[%s1262 + $0x30] sm:$0xf]
        %v1276 = vld [vmem:[%s1262 + $0x34] sm:$0xf]
        %v1277 = vld [vmem:[%s1262 + $0x38] sm:$0xf]
        %v1278 = vld [vmem:[%s1262 + $0x3c] sm:$0xf]
        %v1279 = vld [vmem:[%s1262 + $0x40] sm:$0xf]
        %v1280 = vld [vmem:[%s1262 + $0x44] sm:$0xf]
        %v1281 = vld [vmem:[%s1262 + $0x48] sm:$0xf]
        %v1282 = vld [vmem:[%s1262 + $0x4c] sm:$0xf]
        %v1283 = vld [vmem:[%s1262 + $0x50] sm:$0xf]
        %v1284 = vld [vmem:[%s1262 + $0x54] sm:$0xf]
        %v1285 = vld [vmem:[%s1262 + $0x58] sm:$0xf]
        %v1286 = vld [vmem:[%s1262 + $0x5c] sm:$0xf]
        %v1287 = vld [vmem:[%s1262 + $0x60] sm:$0xf]
        %v1288 = vld [vmem:[%s1262 + $0x64] sm:$0xf]
        %v1289 = vld [vmem:[%s1262 + $0x68] sm:$0xf]
        %v1290 = vld [vmem:[%s1262 + $0x6c] sm:$0xf]
        %v1291 = vld [vmem:[%s1262 + $0x70] sm:$0xf]
        %v1292 = vld [vmem:[%s1262 + $0x74] sm:$0xf]
        %v1293 = vld [vmem:[%s1262 + $0x78] sm:$0xf]
        %v1294 = vld [vmem:[%s1262 + $0x7c] sm:$0xf]
        %v1295 = vld [vmem:[%s1262 + $0x80] sm:$0xf]
        %v1296 = vld [vmem:[%s1262 + $0x84] sm:$0xf]
        %v1297 = vld [vmem:[%s1262 + $0x88] sm:$0xf]
        %v1298 = vld [vmem:[%s1262 + $0x8c] sm:$0xf]
        %v1299 = vld [vmem:[%s1262 + $0x90] sm:$0xf]
        %v1300 = vld [vmem:[%s1262 + $0x94] sm:$0xf]
        %v1301 = vld [vmem:[%s1262 + $0x98] sm:$0xf]
        %v1302 = vld [vmem:[%s1262 + $0x9c] sm:$0xf]
        %v1303 = vld [vmem:[%s1262 + $0xa0] sm:$0xf]
        %v1304 = vld [vmem:[%s1262 + $0xa4] sm:$0xf]
        %v1305 = vld [vmem:[%s1262 + $0xa8] sm:$0xf]
        %v1306 = vld [vmem:[%s1262 + $0xac] sm:$0xf]
        %v1307 = vld [vmem:[%s1262 + $0xb0] sm:$0xf]
        %v1308 = vld [vmem:[%s1262 + $0xb4] sm:$0xf]
        %v1309 = vld [vmem:[%s1262 + $0xb8] sm:$0xf]
        %v1310 = vld [vmem:[%s1262 + $0xbc] sm:$0xf]
        %v1311 = vld [vmem:[%s1262 + $0xc0] sm:$0xf]
        %v1312 = vld [vmem:[%s1262 + $0xc4] sm:$0xf]
        %v1313 = vld [vmem:[%s1262 + $0xc8] sm:$0xf]
        %v1314 = vld [vmem:[%s1262 + $0xcc] sm:$0xf]
        %v1315 = vld [vmem:[%s1262 + $0xd0] sm:$0xf]
        %v1316 = vld [vmem:[%s1262 + $0xd4] sm:$0xf]
        %v1317 = vld [vmem:[%s1262 + $0xd8] sm:$0xf]
        %v1318 = vld [vmem:[%s1262 + $0xdc] sm:$0xf]
        %v1319 = vld [vmem:[%s1262 + $0xe0] sm:$0xf]
        %v1320 = vld [vmem:[%s1262 + $0xe4] sm:$0xf]
        %v1321 = vld [vmem:[%s1262 + $0xe8] sm:$0xf]
        %v1322 = vld [vmem:[%s1262 + $0xec] sm:$0xf]
        %v1323 = vld [vmem:[%s1262 + $0xf0] sm:$0xf]
        %v1324 = vld [vmem:[%s1262 + $0xf4] sm:$0xf]
        %v1325 = vld [vmem:[%s1262 + $0xf8] sm:$0xf]
        %v1326 = vld [vmem:[%s1262 + $0xfc] sm:$0xf]
        %v1391 = vunpack.c.l.b16 %v1263
        %v1392 = vunpack.c.l.b16 %v1264
        %v1393 = vunpack.c.l.b16 %v1265
        %v1394 = vunpack.c.l.b16 %v1266
        %v1395 = vunpack.c.l.b16 %v1267
        %v1396 = vunpack.c.l.b16 %v1268
        %v1397 = vunpack.c.l.b16 %v1269
        %v1398 = vunpack.c.l.b16 %v1270
        %v1399 = vunpack.c.l.b16 %v1271
        %v1400 = vunpack.c.l.b16 %v1272
        %v1401 = vunpack.c.l.b16 %v1273
        %v1402 = vunpack.c.l.b16 %v1274
        %v1403 = vunpack.c.l.b16 %v1275
        %v1404 = vunpack.c.l.b16 %v1276
        %v1405 = vunpack.c.l.b16 %v1277
        %v1406 = vunpack.c.l.b16 %v1278
        %v1407 = vunpack.c.l.b16 %v1279
        %v1408 = vunpack.c.l.b16 %v1280
        %v1409 = vunpack.c.l.b16 %v1281
        %v1410 = vunpack.c.l.b16 %v1282
        %v1411 = vunpack.c.l.b16 %v1283
        %v1412 = vunpack.c.l.b16 %v1284
        %v1413 = vunpack.c.l.b16 %v1285
        %v1414 = vunpack.c.l.b16 %v1286
        %v1415 = vunpack.c.l.b16 %v1287
        %v1416 = vunpack.c.l.b16 %v1288
        %v1417 = vunpack.c.l.b16 %v1289
        %v1418 = vunpack.c.l.b16 %v1290
        %v1419 = vunpack.c.l.b16 %v1291
        %v1420 = vunpack.c.l.b16 %v1292
        %v1421 = vunpack.c.l.b16 %v1293
        %v1422 = vunpack.c.l.b16 %v1294
        %v1423 = vunpack.c.l.b16 %v1295
        %v1424 = vunpack.c.l.b16 %v1296
        %v1425 = vunpack.c.l.b16 %v1297
        %v1426 = vunpack.c.l.b16 %v1298
        %v1427 = vunpack.c.l.b16 %v1299
        %v1428 = vunpack.c.l.b16 %v1300
        %v1429 = vunpack.c.l.b16 %v1301
        %v1430 = vunpack.c.l.b16 %v1302
        %v1431 = vunpack.c.l.b16 %v1303
        %v1432 = vunpack.c.l.b16 %v1304
        %v1433 = vunpack.c.l.b16 %v1305
        %v1434 = vunpack.c.l.b16 %v1306
        %v1435 = vunpack.c.l.b16 %v1307
        %v1436 = vunpack.c.l.b16 %v1308
        %v1437 = vunpack.c.l.b16 %v1309
        %v1438 = vunpack.c.l.b16 %v1310
        %v1439 = vunpack.c.l.b16 %v1311
        %v1440 = vunpack.c.l.b16 %v1312
        %v1441 = vunpack.c.l.b16 %v1313
        %v1442 = vunpack.c.l.b16 %v1314
        %v1443 = vunpack.c.l.b16 %v1315
        %v1444 = vunpack.c.l.b16 %v1316
        %v1445 = vunpack.c.l.b16 %v1317
        %v1446 = vunpack.c.l.b16 %v1318
        %v1447 = vunpack.c.l.b16 %v1319
        %v1448 = vunpack.c.l.b16 %v1320
        %v1449 = vunpack.c.l.b16 %v1321
        %v1450 = vunpack.c.l.b16 %v1322
        %v1451 = vunpack.c.l.b16 %v1323
        %v1452 = vunpack.c.l.b16 %v1324
        %v1453 = vunpack.c.l.b16 %v1325
        %v1454 = vunpack.c.l.b16 %v1326
        %v1455 = vpack.c.b16 %v1392, %v1391
        %v1456 = vpack.c.b16 %v1394, %v1393
        %v1457 = vpack.c.b16 %v1396, %v1395
        %v1458 = vpack.c.b16 %v1398, %v1397
        %v1459 = vpack.c.b16 %v1400, %v1399
        %v1460 = vpack.c.b16 %v1402, %v1401
        %v1461 = vpack.c.b16 %v1404, %v1403
        %v1462 = vpack.c.b16 %v1406, %v1405
        %v1463 = vpack.c.b16 %v1408, %v1407
        %v1464 = vpack.c.b16 %v1410, %v1409
        %v1465 = vpack.c.b16 %v1412, %v1411
        %v1466 = vpack.c.b16 %v1414, %v1413
        %v1467 = vpack.c.b16 %v1416, %v1415
        %v1468 = vpack.c.b16 %v1418, %v1417
        %v1469 = vpack.c.b16 %v1420, %v1419
        %v1470 = vpack.c.b16 %v1422, %v1421
        %v1471 = vpack.c.b16 %v1424, %v1423
        %v1472 = vpack.c.b16 %v1426, %v1425
        %v1473 = vpack.c.b16 %v1428, %v1427
        %v1474 = vpack.c.b16 %v1430, %v1429
        %v1475 = vpack.c.b16 %v1432, %v1431
        %v1476 = vpack.c.b16 %v1434, %v1433
        %v1477 = vpack.c.b16 %v1436, %v1435
        %v1478 = vpack.c.b16 %v1438, %v1437
        %v1479 = vpack.c.b16 %v1440, %v1439
        %v1480 = vpack.c.b16 %v1442, %v1441
        %v1481 = vpack.c.b16 %v1444, %v1443
        %v1482 = vpack.c.b16 %v1446, %v1445
        %v1483 = vpack.c.b16 %v1448, %v1447
        %v1484 = vpack.c.b16 %v1450, %v1449
        %v1485 = vpack.c.b16 %v1452, %v1451
        %v1486 = vpack.c.b16 %v1454, %v1453
        %1519 = vmatprep.subr.bf16.mxu0 0
        %1520 = vmatpush1.bf16.msra.mxu0 %v1455
        %1521 = vmatprep.subr.bf16.mxu0 0
        %1522 = vmatpush1.bf16.msra.mxu0 %v1456
        %1523 = vmatprep.subr.bf16.mxu0 0
        %1524 = vmatpush1.bf16.msra.mxu0 %v1457
        %1525 = vmatprep.subr.bf16.mxu0 0
        %1526 = vmatpush1.bf16.msra.mxu0 %v1458
        %1527 = vmatprep.subr.bf16.mxu0 0
        %1528 = vmatpush1.bf16.msra.mxu0 %v1459
        %1529 = vmatprep.subr.bf16.mxu0 0
        %1530 = vmatpush1.bf16.msra.mxu0 %v1460
        %1531 = vmatprep.subr.bf16.mxu0 0
        %1532 = vmatpush1.bf16.msra.mxu0 %v1461
        %1533 = vmatprep.subr.bf16.mxu0 0
        %1534 = vmatpush1.bf16.msra.mxu0 %v1462
        %1535 = vmatprep.subr.bf16.mxu0 0
        %1536 = vmatpush1.bf16.msra.mxu0 %v1463
        %1537 = vmatprep.subr.bf16.mxu0 0
        %1538 = vmatpush1.bf16.msra.mxu0 %v1464
        %1539 = vmatprep.subr.bf16.mxu0 0
        %1540 = vmatpush1.bf16.msra.mxu0 %v1465
        %1541 = vmatprep.subr.bf16.mxu0 0
        %1542 = vmatpush1.bf16.msra.mxu0 %v1466
        %1543 = vmatprep.subr.bf16.mxu0 0
        %1544 = vmatpush1.bf16.msra.mxu0 %v1467
        %1545 = vmatprep.subr.bf16.mxu0 0
        %1546 = vmatpush1.bf16.msra.mxu0 %v1468
        %1547 = vmatprep.subr.bf16.mxu0 0
        %1548 = vmatpush1.bf16.msra.mxu0 %v1469
        %1549 = vmatprep.subr.bf16.mxu0 0
        %1550 = vmatpush1.bf16.msra.mxu0 %v1470
        %1551 = vmatprep.mubr.bf16.mxu0 %v1247
        %1552 = vmatmul.mubr.bf16.gmra.mrb[0].mxu0 %v1246
        %v1553 = vpop.f32.mrb[0].mxu0
        %v1554 = vadd.f32 0.0, %v1553
        %v1555 = vpop.f32.mrb[0].mxu0
        %v1556 = vpop.f32.mrb[0].mxu0
        %v1557 = vadd.f32 0.0, %v1556
        %v1558 = vpop.f32.mrb[0].mxu0
        %1559 = vmatprep.mubr.bf16.mxu0 %v1251
        %1560 = vmatmul.mubr.bf16.gmra.mrb[0].mxu0 %v1250
        %v1561 = vpop.f32.mrb[0].mxu0
        %v1562 = vadd.f32 0.0, %v1561
        %v1563 = vpop.f32.mrb[0].mxu0
        %v1564 = vpop.f32.mrb[0].mxu0
        %v1565 = vadd.f32 0.0, %v1564
        %v1566 = vpop.f32.mrb[0].mxu0
        %1567 = vmatprep.mubr.bf16.mxu0 %v1255
        %1568 = vmatmul.mubr.bf16.gmra.mrb[0].mxu0 %v1254
        %v1569 = vpop.f32.mrb[0].mxu0
        %v1570 = vadd.f32 0.0, %v1569
        %v1571 = vpop.f32.mrb[0].mxu0
        %v1572 = vpop.f32.mrb[0].mxu0
        %v1573 = vadd.f32 0.0, %v1572
        %v1574 = vpop.f32.mrb[0].mxu0
        %1575 = vmatprep.mubr.bf16.mxu0 %v1259
        %1576 = vmatmul.mubr.bf16.gmra.mrb[0].mxu0 %v1258
        %v1577 = vpop.f32.mrb[0].mxu0
        %v1578 = vadd.f32 0.0, %v1577
        %v1579 = vpop.f32.mrb[0].mxu0
        %v1580 = vpop.f32.mrb[0].mxu0
        %v1581 = vadd.f32 0.0, %v1580
        %v1582 = vpop.f32.mrb[0].mxu0
        %1583 = vdwg.mxu0
        %1584 = vmatprep.subr.bf16.mxu0 0
        %1585 = vmatpush1.bf16.msra.mxu0 %v1471
        %1586 = vmatprep.subr.bf16.mxu0 0
        %1587 = vmatpush1.bf16.msra.mxu0 %v1472
        %1588 = vmatprep.subr.bf16.mxu0 0
        %1589 = vmatpush1.bf16.msra.mxu0 %v1473
        %1590 = vmatprep.subr.bf16.mxu0 0
        %1591 = vmatpush1.bf16.msra.mxu0 %v1474
        %1592 = vmatprep.subr.bf16.mxu0 0
        %1593 = vmatpush1.bf16.msra.mxu0 %v1475
        %1594 = vmatprep.subr.bf16.mxu0 0
        %1595 = vmatpush1.bf16.msra.mxu0 %v1476
        %1596 = vmatprep.subr.bf16.mxu0 0
        %1597 = vmatpush1.bf16.msra.mxu0 %v1477
        %1598 = vmatprep.subr.bf16.mxu0 0
        %1599 = vmatpush1.bf16.msra.mxu0 %v1478
        %1600 = vmatprep.subr.bf16.mxu0 0
        %1601 = vmatpush1.bf16.msra.mxu0 %v1479
        %1602 = vmatprep.subr.bf16.mxu0 0
        %1603 = vmatpush1.bf16.msra.mxu0 %v1480
        %1604 = vmatprep.subr.bf16.mxu0 0
        %1605 = vmatpush1.bf16.msra.mxu0 %v1481
        %1606 = vmatprep.subr.bf16.mxu0 0
        %1607 = vmatpush1.bf16.msra.mxu0 %v1482
        %1608 = vmatprep.subr.bf16.mxu0 0
        %1609 = vmatpush1.bf16.msra.mxu0 %v1483
        %1610 = vmatprep.subr.bf16.mxu0 0
        %1611 = vmatpush1.bf16.msra.mxu0 %v1484
        %1612 = vmatprep.subr.bf16.mxu0 0
        %1613 = vmatpush1.bf16.msra.mxu0 %v1485
        %1614 = vmatprep.subr.bf16.mxu0 0
        %1615 = vmatpush1.bf16.msra.mxu0 %v1486
        %1616 = vmatprep.mubr.bf16.mxu0 %v1249
        %1617 = vmatmul.mubr.bf16.gmra.mrb[0].mxu0 %v1248
        %v1618 = vpop.f32.mrb[0].mxu0
        %v1619 = vadd.f32 %v1554, %v1618
        %v1620 = vpop.f32.mrb[0].mxu0
        %v1621 = vpop.f32.mrb[0].mxu0
        %v1622 = vadd.f32 %v1557, %v1621
        %v1623 = vpop.f32.mrb[0].mxu0
        %1624 = vmatprep.mubr.bf16.mxu0 %v1253
        %1625 = vmatmul.mubr.bf16.gmra.mrb[0].mxu0 %v1252
        %v1626 = vpop.f32.mrb[0].mxu0
        %v1627 = vadd.f32 %v1562, %v1626
        %v1628 = vpop.f32.mrb[0].mxu0
        %v1629 = vpop.f32.mrb[0].mxu0
        %v1630 = vadd.f32 %v1565, %v1629
        %v1631 = vpop.f32.mrb[0].mxu0
        %1632 = vmatprep.mubr.bf16.mxu0 %v1257
        %1633 = vmatmul.mubr.bf16.gmra.mrb[0].mxu0 %v1256
        %v1634 = vpop.f32.mrb[0].mxu0
        %v1635 = vadd.f32 %v1570, %v1634
        %v1636 = vpop.f32.mrb[0].mxu0
        %v1637 = vpop.f32.mrb[0].mxu0
        %v1638 = vadd.f32 %v1573, %v1637
        %v1639 = vpop.f32.mrb[0].mxu0
        %1640 = vmatprep.mubr.bf16.mxu0 %v1261
        %1641 = vmatmul.mubr.bf16.gmra.mrb[0].mxu0 %v1260
        %v1642 = vpop.f32.mrb[0].mxu0
        %v1643 = vadd.f32 %v1578, %v1642
        %v1644 = vpop.f32.mrb[0].mxu0
        %v1645 = vpop.f32.mrb[0].mxu0
        %v1646 = vadd.f32 %v1581, %v1645
        %v1647 = vpop.f32.mrb[0].mxu0
        %1648 = vdwg.mxu0
        %v1713 = vunpack.c.l.b16 %v1178
        %v1714 = vunpack.c.l.b16 %v1179
        %v1715 = vunpack.c.l.b16 %v1180
        %v1716 = vunpack.c.l.b16 %v1181
        %v1717 = vunpack.c.l.b16 %v1182
        %v1718 = vunpack.c.l.b16 %v1183
        %v1719 = vunpack.c.l.b16 %v1184
        %v1720 = vunpack.c.l.b16 %v1185
        %v1721 = vunpack.c.l.b16 %v1186
        %v1722 = vunpack.c.l.b16 %v1187
        %v1723 = vunpack.c.l.b16 %v1188
        %v1724 = vunpack.c.l.b16 %v1189
        %v1725 = vunpack.c.l.b16 %v1190
        %v1726 = vunpack.c.l.b16 %v1191
        %v1727 = vunpack.c.l.b16 %v1192
        %v1728 = vunpack.c.l.b16 %v1193
        %v1729 = vunpack.c.l.b16 %v1194
        %v1730 = vunpack.c.l.b16 %v1195
        %v1731 = vunpack.c.l.b16 %v1196
        %v1732 = vunpack.c.l.b16 %v1197
        %v1733 = vunpack.c.l.b16 %v1198
        %v1734 = vunpack.c.l.b16 %v1199
        %v1735 = vunpack.c.l.b16 %v1200
        %v1736 = vunpack.c.l.b16 %v1201
        %v1737 = vunpack.c.l.b16 %v1202
        %v1738 = vunpack.c.l.b16 %v1203
        %v1739 = vunpack.c.l.b16 %v1204
        %v1740 = vunpack.c.l.b16 %v1205
        %v1741 = vunpack.c.l.b16 %v1206
        %v1742 = vunpack.c.l.b16 %v1207
        %v1743 = vunpack.c.l.b16 %v1208
        %v1744 = vunpack.c.l.b16 %v1209
        %v1745 = vunpack.c.l.b16 %v1210
        %v1746 = vunpack.c.l.b16 %v1211
        %v1747 = vunpack.c.l.b16 %v1212
        %v1748 = vunpack.c.l.b16 %v1213
        %v1749 = vunpack.c.l.b16 %v1214
        %v1750 = vunpack.c.l.b16 %v1215
        %v1751 = vunpack.c.l.b16 %v1216
        %v1752 = vunpack.c.l.b16 %v1217
        %v1753 = vunpack.c.l.b16 %v1218
        %v1754 = vunpack.c.l.b16 %v1219
        %v1755 = vunpack.c.l.b16 %v1220
        %v1756 = vunpack.c.l.b16 %v1221
        %v1757 = vunpack.c.l.b16 %v1222
        %v1758 = vunpack.c.l.b16 %v1223
        %v1759 = vunpack.c.l.b16 %v1224
        %v1760 = vunpack.c.l.b16 %v1225
        %v1761 = vunpack.c.l.b16 %v1226
        %v1762 = vunpack.c.l.b16 %v1227
        %v1763 = vunpack.c.l.b16 %v1228
        %v1764 = vunpack.c.l.b16 %v1229
        %v1765 = vunpack.c.l.b16 %v1230
        %v1766 = vunpack.c.l.b16 %v1231
        %v1767 = vunpack.c.l.b16 %v1232
        %v1768 = vunpack.c.l.b16 %v1233
        %v1769 = vunpack.c.l.b16 %v1234
        %v1770 = vunpack.c.l.b16 %v1235
        %v1771 = vunpack.c.l.b16 %v1236
        %v1772 = vunpack.c.l.b16 %v1237
        %v1773 = vunpack.c.l.b16 %v1238
        %v1774 = vunpack.c.l.b16 %v1239
        %v1775 = vunpack.c.l.b16 %v1240
        %v1776 = vunpack.c.l.b16 %v1241
        %v1777 = vpack.c.b16 %v1714, %v1713
        %v1778 = vpack.c.b16 %v1716, %v1715
        %v1779 = vpack.c.b16 %v1718, %v1717
        %v1780 = vpack.c.b16 %v1720, %v1719
        %v1781 = vpack.c.b16 %v1722, %v1721
        %v1782 = vpack.c.b16 %v1724, %v1723
        %v1783 = vpack.c.b16 %v1726, %v1725
        %v1784 = vpack.c.b16 %v1728, %v1727
        %v1785 = vpack.c.b16 %v1730, %v1729
        %v1786 = vpack.c.b16 %v1732, %v1731
        %v1787 = vpack.c.b16 %v1734, %v1733
        %v1788 = vpack.c.b16 %v1736, %v1735
        %v1789 = vpack.c.b16 %v1738, %v1737
        %v1790 = vpack.c.b16 %v1740, %v1739
        %v1791 = vpack.c.b16 %v1742, %v1741
        %v1792 = vpack.c.b16 %v1744, %v1743
        %v1793 = vpack.c.b16 %v1746, %v1745
        %v1794 = vpack.c.b16 %v1748, %v1747
        %v1795 = vpack.c.b16 %v1750, %v1749
        %v1796 = vpack.c.b16 %v1752, %v1751
        %v1797 = vpack.c.b16 %v1754, %v1753
        %v1798 = vpack.c.b16 %v1756, %v1755
        %v1799 = vpack.c.b16 %v1758, %v1757
        %v1800 = vpack.c.b16 %v1760, %v1759
        %v1801 = vpack.c.b16 %v1762, %v1761
        %v1802 = vpack.c.b16 %v1764, %v1763
        %v1803 = vpack.c.b16 %v1766, %v1765
        %v1804 = vpack.c.b16 %v1768, %v1767
        %v1805 = vpack.c.b16 %v1770, %v1769
        %v1806 = vpack.c.b16 %v1772, %v1771
        %v1807 = vpack.c.b16 %v1774, %v1773
        %v1808 = vpack.c.b16 %v1776, %v1775
        %1841 = vmatprep.subr.bf16.mxu0 0
        %1842 = vmatpush1.bf16.msra.mxu0 %v1777
        %1843 = vmatprep.subr.bf16.mxu0 0
        %1844 = vmatpush1.bf16.msra.mxu0 %v1778
        %1845 = vmatprep.subr.bf16.mxu0 0
        %1846 = vmatpush1.bf16.msra.mxu0 %v1779
        %1847 = vmatprep.subr.bf16.mxu0 0
        %1848 = vmatpush1.bf16.msra.mxu0 %v1780
        %1849 = vmatprep.subr.bf16.mxu0 0
        %1850 = vmatpush1.bf16.msra.mxu0 %v1781
        %1851 = vmatprep.subr.bf16.mxu0 0
        %1852 = vmatpush1.bf16.msra.mxu0 %v1782
        %1853 = vmatprep.subr.bf16.mxu0 0
        %1854 = vmatpush1.bf16.msra.mxu0 %v1783
        %1855 = vmatprep.subr.bf16.mxu0 0
        %1856 = vmatpush1.bf16.msra.mxu0 %v1784
        %1857 = vmatprep.subr.bf16.mxu0 0
        %1858 = vmatpush1.bf16.msra.mxu0 %v1785
        %1859 = vmatprep.subr.bf16.mxu0 0
        %1860 = vmatpush1.bf16.msra.mxu0 %v1786
        %1861 = vmatprep.subr.bf16.mxu0 0
        %1862 = vmatpush1.bf16.msra.mxu0 %v1787
        %1863 = vmatprep.subr.bf16.mxu0 0
        %1864 = vmatpush1.bf16.msra.mxu0 %v1788
        %1865 = vmatprep.subr.bf16.mxu0 0
        %1866 = vmatpush1.bf16.msra.mxu0 %v1789
        %1867 = vmatprep.subr.bf16.mxu0 0
        %1868 = vmatpush1.bf16.msra.mxu0 %v1790
        %1869 = vmatprep.subr.bf16.mxu0 0
        %1870 = vmatpush1.bf16.msra.mxu0 %v1791
        %1871 = vmatprep.subr.bf16.mxu0 0
        %1872 = vmatpush1.bf16.msra.mxu0 %v1792
        %1873 = vmatprep.mubr.bf16.mxu0 %v1163
        %1874 = vmatmul.mubr.bf16.gmra.mrb[0].mxu0 %v1162
        %v1875 = vpop.f32.mrb[0].mxu0
        %v1876 = vadd.f32 %v1619, %v1875
        %v1877 = vpop.f32.mrb[0].mxu0
        %v1878 = vpop.f32.mrb[0].mxu0
        %v1879 = vadd.f32 %v1622, %v1878
        %v1880 = vpop.f32.mrb[0].mxu0
        %1881 = vmatprep.mubr.bf16.mxu0 %v1167
        %1882 = vmatmul.mubr.bf16.gmra.mrb[0].mxu0 %v1166
        %v1883 = vpop.f32.mrb[0].mxu0
        %v1884 = vadd.f32 %v1627, %v1883
        %v1885 = vpop.f32.mrb[0].mxu0
        %v1886 = vpop.f32.mrb[0].mxu0
        %v1887 = vadd.f32 %v1630, %v1886
        %v1888 = vpop.f32.mrb[0].mxu0
        %1889 = vmatprep.mubr.bf16.mxu0 %v1171
        %1890 = vmatmul.mubr.bf16.gmra.mrb[0].mxu0 %v1170
        %v1891 = vpop.f32.mrb[0].mxu0
        %v1892 = vadd.f32 %v1635, %v1891
        %v1893 = vpop.f32.mrb[0].mxu0
        %v1894 = vpop.f32.mrb[0].mxu0
        %v1895 = vadd.f32 %v1638, %v1894
        %v1896 = vpop.f32.mrb[0].mxu0
        %1897 = vmatprep.mubr.bf16.mxu0 %v1175
        %1898 = vmatmul.mubr.bf16.gmra.mrb[0].mxu0 %v1174
        %v1899 = vpop.f32.mrb[0].mxu0
        %v1900 = vadd.f32 %v1643, %v1899
        %v1901 = vpop.f32.mrb[0].mxu0
        %v1902 = vpop.f32.mrb[0].mxu0
        %v1903 = vadd.f32 %v1646, %v1902
        %v1904 = vpop.f32.mrb[0].mxu0
        %1905 = vdwg.mxu0
        %1906 = vmatprep.subr.bf16.mxu0 0
        %1907 = vmatpush1.bf16.msra.mxu0 %v1793
        %1908 = vmatprep.subr.bf16.mxu0 0
        %1909 = vmatpush1.bf16.msra.mxu0 %v1794
        %1910 = vmatprep.subr.bf16.mxu0 0
        %1911 = vmatpush1.bf16.msra.mxu0 %v1795
        %1912 = vmatprep.subr.bf16.mxu0 0
        %1913 = vmatpush1.bf16.msra.mxu0 %v1796
        %1914 = vmatprep.subr.bf16.mxu0 0
        %1915 = vmatpush1.bf16.msra.mxu0 %v1797
        %1916 = vmatprep.subr.bf16.mxu0 0
        %1917 = vmatpush1.bf16.msra.mxu0 %v1798
        %1918 = vmatprep.subr.bf16.mxu0 0
        %1919 = vmatpush1.bf16.msra.mxu0 %v1799
        %1920 = vmatprep.subr.bf16.mxu0 0
        %1921 = vmatpush1.bf16.msra.mxu0 %v1800
        %1922 = vmatprep.subr.bf16.mxu0 0
        %1923 = vmatpush1.bf16.msra.mxu0 %v1801
        %1924 = vmatprep.subr.bf16.mxu0 0
        %1925 = vmatpush1.bf16.msra.mxu0 %v1802
        %1926 = vmatprep.subr.bf16.mxu0 0
        %1927 = vmatpush1.bf16.msra.mxu0 %v1803
        %1928 = vmatprep.subr.bf16.mxu0 0
        %1929 = vmatpush1.bf16.msra.mxu0 %v1804
        %1930 = vmatprep.subr.bf16.mxu0 0
        %1931 = vmatpush1.bf16.msra.mxu0 %v1805
        %1932 = vmatprep.subr.bf16.mxu0 0
        %1933 = vmatpush1.bf16.msra.mxu0 %v1806
        %1934 = vmatprep.subr.bf16.mxu0 0
        %1935 = vmatpush1.bf16.msra.mxu0 %v1807
        %1936 = vmatprep.subr.bf16.mxu0 0
        %1937 = vmatpush1.bf16.msra.mxu0 %v1808
        %1938 = vmatprep.mubr.bf16.mxu0 %v1165
        %1939 = vmatmul.mubr.bf16.gmra.mrb[0].mxu0 %v1164
        %v1940 = vpop.f32.mrb[0].mxu0
        %v1941 = vadd.f32 %v1876, %v1940
        %v1942 = vpop.f32.mrb[0].mxu0
        %v1943 = vpop.f32.mrb[0].mxu0
        %v1944 = vadd.f32 %v1879, %v1943
        %v1945 = vpop.f32.mrb[0].mxu0
        %1946 = vmatprep.mubr.bf16.mxu0 %v1169
        %1947 = vmatmul.mubr.bf16.gmra.mrb[0].mxu0 %v1168
        %v1948 = vpop.f32.mrb[0].mxu0
        %v1949 = vadd.f32 %v1884, %v1948
        %v1950 = vpop.f32.mrb[0].mxu0
        %v1951 = vpop.f32.mrb[0].mxu0
        %v1952 = vadd.f32 %v1887, %v1951
        %v1953 = vpop.f32.mrb[0].mxu0
        %1954 = vmatprep.mubr.bf16.mxu0 %v1173
        %1955 = vmatmul.mubr.bf16.gmra.mrb[0].mxu0 %v1172
        %v1956 = vpop.f32.mrb[0].mxu0
        %v1957 = vadd.f32 %v1892, %v1956
        %v1958 = vpop.f32.mrb[0].mxu0
        %v1959 = vpop.f32.mrb[0].mxu0
        %v1960 = vadd.f32 %v1895, %v1959
        %v1961 = vpop.f32.mrb[0].mxu0
        %1962 = vmatprep.mubr.bf16.mxu0 %v1177
        %1963 = vmatmul.mubr.bf16.gmra.mrb[0].mxu0 %v1176
        %v1964 = vpop.f32.mrb[0].mxu0
        %v1965 = vadd.f32 %v1900, %v1964
        %v1966 = vpop.f32.mrb[0].mxu0
        %v1967 = vpop.f32.mrb[0].mxu0
        %v1968 = vadd.f32 %v1903, %v1967
        %v1969 = vpop.f32.mrb[0].mxu0
        %1970 = vdwg.mxu0
        %v1971 = vld [vmem:[#allocation2 + $0x20] sm:$0xfe]
        %v1972 = vld [vmem:[#allocation2 + $0x28] sm:$0xfe]
        %v1973 = vld [vmem:[#allocation2 + $0x30] sm:$0xfe]
        %v1974 = vld [vmem:[#allocation2 + $0x38] sm:$0xfe]
        %v1975 = vld [vmem:[#allocation2 + $0x40] sm:$0xff]
        %v1976 = vld [vmem:[#allocation2 + $0x48] sm:$0xff]
        %v1977 = vld [vmem:[#allocation2 + $0x50] sm:$0xff]
        %v1978 = vld [vmem:[#allocation2 + $0x58] sm:$0xff]
        %v1979 = vld [vmem:[#allocation2 + $0x60] sm:$0xff]
        %v1980 = vld [vmem:[#allocation2 + $0x68] sm:$0xff]
        %v1981 = vld [vmem:[#allocation2 + $0x70] sm:$0xff]
        %v1982 = vld [vmem:[#allocation2 + $0x78] sm:$0xff]
        %v1983 = vld [vmem:[#allocation2 + $0x80] sm:$0xff]
        %v1984 = vld [vmem:[#allocation2 + $0x88] sm:$0xff]
        %v1985 = vld [vmem:[#allocation2 + $0x90] sm:$0xff]
        %v1986 = vld [vmem:[#allocation2 + $0x98] sm:$0xff]
        %v1987 = vld [vmem:[#allocation2 + $0xa0] sm:$0xff]
        %v1988 = vld [vmem:[#allocation2 + $0xa8] sm:$0xff]
        %v1989 = vld [vmem:[#allocation2 + $0xb0] sm:$0xff]
        %v1990 = vld [vmem:[#allocation2 + $0xb8] sm:$0xff]
        %v1991 = vld [vmem:[#allocation2 + $0xc0] sm:$0xff]
        %v1992 = vld [vmem:[#allocation2 + $0xc8] sm:$0xff]
        %v1993 = vld [vmem:[#allocation2 + $0xd0] sm:$0xff]
        %v1994 = vld [vmem:[#allocation2 + $0xd8] sm:$0xff]
        %v1995 = vld [vmem:[#allocation2 + $0xe0] sm:$0xff]
        %v1996 = vld [vmem:[#allocation2 + $0xe8] sm:$0xff]
        %v1997 = vld [vmem:[#allocation2 + $0xf0] sm:$0xff]
        %v1998 = vld [vmem:[#allocation2 + $0xf8] sm:$0xff]
        %v1999 = vld [vmem:[#allocation2 + $0x100] sm:$0xff]
        %v2000 = vld [vmem:[#allocation2 + $0x108] sm:$0xff]
        %v2001 = vld [vmem:[#allocation2 + $0x110] sm:$0xff]
        %v2002 = vld [vmem:[#allocation2 + $0x118] sm:$0xff]
        %v2003 = vld [vmem:[#allocation2 + $0x120] sm:$0x1]
        %v2004 = vld [vmem:[#allocation2 + $0x128] sm:$0x1]
        %v2005 = vld [vmem:[#allocation2 + $0x130] sm:$0x1]
        %v2006 = vld [vmem:[#allocation2 + $0x138] sm:$0x1]
        %vm2007 = vcmp.le.s32.totalorder %v925, 6
        %vm2008 = vcmp.le.s32.totalorder %v926, 6
        %vm2009 = vcmp.le.s32.totalorder %v927, 6
        %vm2010 = vcmp.le.s32.totalorder %v928, 6
        %vm2011 = vcmp.le.s32.totalorder %v929, 6
        %vm2012 = vcmp.le.s32.totalorder %v930, 6
        %vm2013 = vcmp.le.s32.totalorder %v931, 6
        %vm2014 = vcmp.le.s32.totalorder %v932, 6
        %v2015 = vsel %vm2007, 1, 0
        %v2016 = vsel %vm2008, 1, 0
        %v2017 = vsel %vm2009, 1, 0
        %v2018 = vsel %vm2010, 1, 0
        %v2019 = vsel %vm2011, 1, 0
        %v2020 = vsel %vm2012, 1, 0
        %v2021 = vsel %vm2013, 1, 0
        %v2022 = vsel %vm2014, 1, 0
        %vm2023 = vcmp.eq.s32.totalorder %v2015, 1
        %vm2024 = vcmp.eq.s32.totalorder %v2016, 1
        %vm2025 = vcmp.eq.s32.totalorder %v2017, 1
        %vm2026 = vcmp.eq.s32.totalorder %v2018, 1
        %vm2027 = vcmp.eq.s32.totalorder %v2019, 1
        %vm2028 = vcmp.eq.s32.totalorder %v2020, 1
        %vm2029 = vcmp.eq.s32.totalorder %v2021, 1
        %vm2030 = vcmp.eq.s32.totalorder %v2022, 1
        %vm2067 = vcmask 1046528
        %v2068 = vrot.slane %v1971, 1
        %v2069 = vrot.slane %v1975, 1
        %v2070 = vsel %vm2067, %v2068, %v2069
        %v2071 = vrot.slane %v1972, 1
        %v2072 = vrot.slane %v1976, 1
        %v2073 = vsel %vm2067, %v2071, %v2072
        %v2074 = vrot.slane %v1973, 1
        %v2075 = vrot.slane %v1977, 1
        %v2076 = vsel %vm2067, %v2074, %v2075
        %v2077 = vrot.slane %v1974, 1
        %v2078 = vrot.slane %v1978, 1
        %v2079 = vsel %vm2067, %v2077, %v2078
        %v2080 = vrot.slane %v1979, 1
        %v2081 = vsel %vm2067, %v2069, %v2080
        %v2082 = vrot.slane %v1980, 1
        %v2083 = vsel %vm2067, %v2072, %v2082
        %v2084 = vrot.slane %v1981, 1
        %v2085 = vsel %vm2067, %v2075, %v2084
        %v2086 = vrot.slane %v1982, 1
        %v2087 = vsel %vm2067, %v2078, %v2086
        %v2088 = vrot.slane %v1983, 1
        %v2089 = vsel %vm2067, %v2080, %v2088
        %v2090 = vrot.slane %v1984, 1
        %v2091 = vsel %vm2067, %v2082, %v2090
        %v2092 = vrot.slane %v1985, 1
        %v2093 = vsel %vm2067, %v2084, %v2092
        %v2094 = vrot.slane %v1986, 1
        %v2095 = vsel %vm2067, %v2086, %v2094
        %v2096 = vrot.slane %v1987, 1
        %v2097 = vsel %vm2067, %v2088, %v2096
        %v2098 = vrot.slane %v1988, 1
        %v2099 = vsel %vm2067, %v2090, %v2098
        %v2100 = vrot.slane %v1989, 1
        %v2101 = vsel %vm2067, %v2092, %v2100
        %v2102 = vrot.slane %v1990, 1
        %v2103 = vsel %vm2067, %v2094, %v2102
        %v2104 = vrot.slane %v1991, 1
        %v2105 = vsel %vm2067, %v2096, %v2104
        %v2106 = vrot.slane %v1992, 1
        %v2107 = vsel %vm2067, %v2098, %v2106
        %v2108 = vrot.slane %v1993, 1
        %v2109 = vsel %vm2067, %v2100, %v2108
        %v2110 = vrot.slane %v1994, 1
        %v2111 = vsel %vm2067, %v2102, %v2110
        %v2112 = vrot.slane %v1995, 1
        %v2113 = vsel %vm2067, %v2104, %v2112
        %v2114 = vrot.slane %v1996, 1
        %v2115 = vsel %vm2067, %v2106, %v2114
        %v2116 = vrot.slane %v1997, 1
        %v2117 = vsel %vm2067, %v2108, %v2116
        %v2118 = vrot.slane %v1998, 1
        %v2119 = vsel %vm2067, %v2110, %v2118
        %v2120 = vrot.slane %v1999, 1
        %v2121 = vsel %vm2067, %v2112, %v2120
        %v2122 = vrot.slane %v2000, 1
        %v2123 = vsel %vm2067, %v2114, %v2122
        %v2124 = vrot.slane %v2001, 1
        %v2125 = vsel %vm2067, %v2116, %v2124
        %v2126 = vrot.slane %v2002, 1
        %v2127 = vsel %vm2067, %v2118, %v2126
        %v2128 = vrot.slane %v2003, 1
        %v2129 = vsel %vm2067, %v2120, %v2128
        %v2130 = vrot.slane %v2004, 1
        %v2131 = vsel %vm2067, %v2122, %v2130
        %v2132 = vrot.slane %v2005, 1
        %v2133 = vsel %vm2067, %v2124, %v2132
        %v2134 = vrot.slane %v2006, 1
        %v2135 = vsel %vm2067, %v2126, %v2134
        %v2168 = vsel %vm2023, %v2070, 0.0
        %v2169 = vsel %vm2023, %v2073, 0.0
        %v2170 = vsel %vm2023, %v2076, 0.0
        %v2171 = vsel %vm2023, %v2079, 0.0
        %v2172 = vsel %vm2024, %v2081, 0.0
        %v2173 = vsel %vm2024, %v2083, 0.0
        %v2174 = vsel %vm2024, %v2085, 0.0
        %v2175 = vsel %vm2024, %v2087, 0.0
        %v2176 = vsel %vm2025, %v2089, 0.0
        %v2177 = vsel %vm2025, %v2091, 0.0
        %v2178 = vsel %vm2025, %v2093, 0.0
        %v2179 = vsel %vm2025, %v2095, 0.0
        %v2180 = vsel %vm2026, %v2097, 0.0
        %v2181 = vsel %vm2026, %v2099, 0.0
        %v2182 = vsel %vm2026, %v2101, 0.0
        %v2183 = vsel %vm2026, %v2103, 0.0
        %v2184 = vsel %vm2027, %v2105, 0.0
        %v2185 = vsel %vm2027, %v2107, 0.0
        %v2186 = vsel %vm2027, %v2109, 0.0
        %v2187 = vsel %vm2027, %v2111, 0.0
        %v2188 = vsel %vm2028, %v2113, 0.0
        %v2189 = vsel %vm2028, %v2115, 0.0
        %v2190 = vsel %vm2028, %v2117, 0.0
        %v2191 = vsel %vm2028, %v2119, 0.0
        %v2192 = vsel %vm2029, %v2121, 0.0
        %v2193 = vsel %vm2029, %v2123, 0.0
        %v2194 = vsel %vm2029, %v2125, 0.0
        %v2195 = vsel %vm2029, %v2127, 0.0
        %v2196 = vsel %vm2030, %v2129, 0.0
        %v2197 = vsel %vm2030, %v2131, 0.0
        %v2198 = vsel %vm2030, %v2133, 0.0
        %v2199 = vsel %vm2030, %v2135, 0.0
        %v2200 = vpack.c.bf16 %v2172, %v2168
        %v2201 = vpack.c.bf16 %v2173, %v2169
        %v2202 = vpack.c.bf16 %v2174, %v2170
        %v2203 = vpack.c.bf16 %v2175, %v2171
        %v2204 = vpack.c.bf16 %v2180, %v2176
        %v2205 = vpack.c.bf16 %v2181, %v2177
        %v2206 = vpack.c.bf16 %v2182, %v2178
        %v2207 = vpack.c.bf16 %v2183, %v2179
        %v2208 = vpack.c.bf16 %v2188, %v2184
        %v2209 = vpack.c.bf16 %v2189, %v2185
        %v2210 = vpack.c.bf16 %v2190, %v2186
        %v2211 = vpack.c.bf16 %v2191, %v2187
        %v2212 = vpack.c.bf16 %v2196, %v2192
        %v2213 = vpack.c.bf16 %v2197, %v2193
        %v2214 = vpack.c.bf16 %v2198, %v2194
        %v2215 = vpack.c.bf16 %v2199, %v2195
        %s2216 = scalar_lea.vmem [#allocation12], 512
        %v2217 = vld [vmem:[%s2216] sm:$0xf]
        %v2218 = vld [vmem:[%s2216 + $0x4] sm:$0xf]
        %v2219 = vld [vmem:[%s2216 + $0x8] sm:$0xf]
        %v2220 = vld [vmem:[%s2216 + $0xc] sm:$0xf]
        %v2221 = vld [vmem:[%s2216 + $0x10] sm:$0xf]
        %v2222 = vld [vmem:[%s2216 + $0x14] sm:$0xf]
        %v2223 = vld [vmem:[%s2216 + $0x18] sm:$0xf]
        %v2224 = vld [vmem:[%s2216 + $0x1c] sm:$0xf]
        %v2225 = vld [vmem:[%s2216 + $0x20] sm:$0xf]
        %v2226 = vld [vmem:[%s2216 + $0x24] sm:$0xf]
        %v2227 = vld [vmem:[%s2216 + $0x28] sm:$0xf]
        %v2228 = vld [vmem:[%s2216 + $0x2c] sm:$0xf]
        %v2229 = vld [vmem:[%s2216 + $0x30] sm:$0xf]
        %v2230 = vld [vmem:[%s2216 + $0x34] sm:$0xf]
        %v2231 = vld [vmem:[%s2216 + $0x38] sm:$0xf]
        %v2232 = vld [vmem:[%s2216 + $0x3c] sm:$0xf]
        %v2233 = vld [vmem:[%s2216 + $0x40] sm:$0xf]
        %v2234 = vld [vmem:[%s2216 + $0x44] sm:$0xf]
        %v2235 = vld [vmem:[%s2216 + $0x48] sm:$0xf]
        %v2236 = vld [vmem:[%s2216 + $0x4c] sm:$0xf]
        %v2237 = vld [vmem:[%s2216 + $0x50] sm:$0xf]
        %v2238 = vld [vmem:[%s2216 + $0x54] sm:$0xf]
        %v2239 = vld [vmem:[%s2216 + $0x58] sm:$0xf]
        %v2240 = vld [vmem:[%s2216 + $0x5c] sm:$0xf]
        %v2241 = vld [vmem:[%s2216 + $0x60] sm:$0xf]
        %v2242 = vld [vmem:[%s2216 + $0x64] sm:$0xf]
        %v2243 = vld [vmem:[%s2216 + $0x68] sm:$0xf]
        %v2244 = vld [vmem:[%s2216 + $0x6c] sm:$0xf]
        %v2245 = vld [vmem:[%s2216 + $0x70] sm:$0xf]
        %v2246 = vld [vmem:[%s2216 + $0x74] sm:$0xf]
        %v2247 = vld [vmem:[%s2216 + $0x78] sm:$0xf]
        %v2248 = vld [vmem:[%s2216 + $0x7c] sm:$0xf]
        %v2249 = vld [vmem:[%s2216 + $0x80] sm:$0xf]
        %v2250 = vld [vmem:[%s2216 + $0x84] sm:$0xf]
        %v2251 = vld [vmem:[%s2216 + $0x88] sm:$0xf]
        %v2252 = vld [vmem:[%s2216 + $0x8c] sm:$0xf]
        %v2253 = vld [vmem:[%s2216 + $0x90] sm:$0xf]
        %v2254 = vld [vmem:[%s2216 + $0x94] sm:$0xf]
        %v2255 = vld [vmem:[%s2216 + $0x98] sm:$0xf]
        %v2256 = vld [vmem:[%s2216 + $0x9c] sm:$0xf]
        %v2257 = vld [vmem:[%s2216 + $0xa0] sm:$0xf]
        %v2258 = vld [vmem:[%s2216 + $0xa4] sm:$0xf]
        %v2259 = vld [vmem:[%s2216 + $0xa8] sm:$0xf]
        %v2260 = vld [vmem:[%s2216 + $0xac] sm:$0xf]
        %v2261 = vld [vmem:[%s2216 + $0xb0] sm:$0xf]
        %v2262 = vld [vmem:[%s2216 + $0xb4] sm:$0xf]
        %v2263 = vld [vmem:[%s2216 + $0xb8] sm:$0xf]
        %v2264 = vld [vmem:[%s2216 + $0xbc] sm:$0xf]
        %v2265 = vld [vmem:[%s2216 + $0xc0] sm:$0xf]
        %v2266 = vld [vmem:[%s2216 + $0xc4] sm:$0xf]
        %v2267 = vld [vmem:[%s2216 + $0xc8] sm:$0xf]
        %v2268 = vld [vmem:[%s2216 + $0xcc] sm:$0xf]
        %v2269 = vld [vmem:[%s2216 + $0xd0] sm:$0xf]
        %v2270 = vld [vmem:[%s2216 + $0xd4] sm:$0xf]
        %v2271 = vld [vmem:[%s2216 + $0xd8] sm:$0xf]
        %v2272 = vld [vmem:[%s2216 + $0xdc] sm:$0xf]
        %v2273 = vld [vmem:[%s2216 + $0xe0] sm:$0xf]
        %v2274 = vld [vmem:[%s2216 + $0xe4] sm:$0xf]
        %v2275 = vld [vmem:[%s2216 + $0xe8] sm:$0xf]
        %v2276 = vld [vmem:[%s2216 + $0xec] sm:$0xf]
        %v2277 = vld [vmem:[%s2216 + $0xf0] sm:$0xf]
        %v2278 = vld [vmem:[%s2216 + $0xf4] sm:$0xf]
        %v2279 = vld [vmem:[%s2216 + $0xf8] sm:$0xf]
        %v2280 = vld [vmem:[%s2216 + $0xfc] sm:$0xf]
        %v2345 = vunpack.c.l.b16 %v2217
        %v2346 = vunpack.c.l.b16 %v2218
        %v2347 = vunpack.c.l.b16 %v2219
        %v2348 = vunpack.c.l.b16 %v2220
        %v2349 = vunpack.c.l.b16 %v2221
        %v2350 = vunpack.c.l.b16 %v2222
        %v2351 = vunpack.c.l.b16 %v2223
        %v2352 = vunpack.c.l.b16 %v2224
        %v2353 = vunpack.c.l.b16 %v2225
        %v2354 = vunpack.c.l.b16 %v2226
        %v2355 = vunpack.c.l.b16 %v2227
        %v2356 = vunpack.c.l.b16 %v2228
        %v2357 = vunpack.c.l.b16 %v2229
        %v2358 = vunpack.c.l.b16 %v2230
        %v2359 = vunpack.c.l.b16 %v2231
        %v2360 = vunpack.c.l.b16 %v2232
        %v2361 = vunpack.c.l.b16 %v2233
        %v2362 = vunpack.c.l.b16 %v2234
        %v2363 = vunpack.c.l.b16 %v2235
        %v2364 = vunpack.c.l.b16 %v2236
        %v2365 = vunpack.c.l.b16 %v2237
        %v2366 = vunpack.c.l.b16 %v2238
        %v2367 = vunpack.c.l.b16 %v2239
        %v2368 = vunpack.c.l.b16 %v2240
        %v2369 = vunpack.c.l.b16 %v2241
        %v2370 = vunpack.c.l.b16 %v2242
        %v2371 = vunpack.c.l.b16 %v2243
        %v2372 = vunpack.c.l.b16 %v2244
        %v2373 = vunpack.c.l.b16 %v2245
        %v2374 = vunpack.c.l.b16 %v2246
        %v2375 = vunpack.c.l.b16 %v2247
        %v2376 = vunpack.c.l.b16 %v2248
        %v2377 = vunpack.c.l.b16 %v2249
        %v2378 = vunpack.c.l.b16 %v2250
        %v2379 = vunpack.c.l.b16 %v2251
        %v2380 = vunpack.c.l.b16 %v2252
        %v2381 = vunpack.c.l.b16 %v2253
        %v2382 = vunpack.c.l.b16 %v2254
        %v2383 = vunpack.c.l.b16 %v2255
        %v2384 = vunpack.c.l.b16 %v2256
        %v2385 = vunpack.c.l.b16 %v2257
        %v2386 = vunpack.c.l.b16 %v2258
        %v2387 = vunpack.c.l.b16 %v2259
        %v2388 = vunpack.c.l.b16 %v2260
        %v2389 = vunpack.c.l.b16 %v2261
        %v2390 = vunpack.c.l.b16 %v2262
        %v2391 = vunpack.c.l.b16 %v2263
        %v2392 = vunpack.c.l.b16 %v2264
        %v2393 = vunpack.c.l.b16 %v2265
        %v2394 = vunpack.c.l.b16 %v2266
        %v2395 = vunpack.c.l.b16 %v2267
        %v2396 = vunpack.c.l.b16 %v2268
        %v2397 = vunpack.c.l.b16 %v2269
        %v2398 = vunpack.c.l.b16 %v2270
        %v2399 = vunpack.c.l.b16 %v2271
        %v2400 = vunpack.c.l.b16 %v2272
        %v2401 = vunpack.c.l.b16 %v2273
        %v2402 = vunpack.c.l.b16 %v2274
        %v2403 = vunpack.c.l.b16 %v2275
        %v2404 = vunpack.c.l.b16 %v2276
        %v2405 = vunpack.c.l.b16 %v2277
        %v2406 = vunpack.c.l.b16 %v2278
        %v2407 = vunpack.c.l.b16 %v2279
        %v2408 = vunpack.c.l.b16 %v2280
        %v2409 = vpack.c.b16 %v2346, %v2345
        %v2410 = vpack.c.b16 %v2348, %v2347
        %v2411 = vpack.c.b16 %v2350, %v2349
        %v2412 = vpack.c.b16 %v2352, %v2351
        %v2413 = vpack.c.b16 %v2354, %v2353
        %v2414 = vpack.c.b16 %v2356, %v2355
        %v2415 = vpack.c.b16 %v2358, %v2357
        %v2416 = vpack.c.b16 %v2360, %v2359
        %v2417 = vpack.c.b16 %v2362, %v2361
        %v2418 = vpack.c.b16 %v2364, %v2363
        %v2419 = vpack.c.b16 %v2366, %v2365
        %v2420 = vpack.c.b16 %v2368, %v2367
        %v2421 = vpack.c.b16 %v2370, %v2369
        %v2422 = vpack.c.b16 %v2372, %v2371
        %v2423 = vpack.c.b16 %v2374, %v2373
        %v2424 = vpack.c.b16 %v2376, %v2375
        %v2425 = vpack.c.b16 %v2378, %v2377
        %v2426 = vpack.c.b16 %v2380, %v2379
        %v2427 = vpack.c.b16 %v2382, %v2381
        %v2428 = vpack.c.b16 %v2384, %v2383
        %v2429 = vpack.c.b16 %v2386, %v2385
        %v2430 = vpack.c.b16 %v2388, %v2387
        %v2431 = vpack.c.b16 %v2390, %v2389
        %v2432 = vpack.c.b16 %v2392, %v2391
        %v2433 = vpack.c.b16 %v2394, %v2393
        %v2434 = vpack.c.b16 %v2396, %v2395
        %v2435 = vpack.c.b16 %v2398, %v2397
        %v2436 = vpack.c.b16 %v2400, %v2399
        %v2437 = vpack.c.b16 %v2402, %v2401
        %v2438 = vpack.c.b16 %v2404, %v2403
        %v2439 = vpack.c.b16 %v2406, %v2405
        %v2440 = vpack.c.b16 %v2408, %v2407
        %2473 = vmatprep.subr.bf16.mxu0 0
        %2474 = vmatpush1.bf16.msra.mxu0 %v2409
        %2475 = vmatprep.subr.bf16.mxu0 0
        %2476 = vmatpush1.bf16.msra.mxu0 %v2410
        %2477 = vmatprep.subr.bf16.mxu0 0
        %2478 = vmatpush1.bf16.msra.mxu0 %v2411
        %2479 = vmatprep.subr.bf16.mxu0 0
        %2480 = vmatpush1.bf16.msra.mxu0 %v2412
        %2481 = vmatprep.subr.bf16.mxu0 0
        %2482 = vmatpush1.bf16.msra.mxu0 %v2413
        %2483 = vmatprep.subr.bf16.mxu0 0
        %2484 = vmatpush1.bf16.msra.mxu0 %v2414
        %2485 = vmatprep.subr.bf16.mxu0 0
        %2486 = vmatpush1.bf16.msra.mxu0 %v2415
        %2487 = vmatprep.subr.bf16.mxu0 0
        %2488 = vmatpush1.bf16.msra.mxu0 %v2416
        %2489 = vmatprep.subr.bf16.mxu0 0
        %2490 = vmatpush1.bf16.msra.mxu0 %v2417
        %2491 = vmatprep.subr.bf16.mxu0 0
        %2492 = vmatpush1.bf16.msra.mxu0 %v2418
        %2493 = vmatprep.subr.bf16.mxu0 0
        %2494 = vmatpush1.bf16.msra.mxu0 %v2419
        %2495 = vmatprep.subr.bf16.mxu0 0
        %2496 = vmatpush1.bf16.msra.mxu0 %v2420
        %2497 = vmatprep.subr.bf16.mxu0 0
        %2498 = vmatpush1.bf16.msra.mxu0 %v2421
        %2499 = vmatprep.subr.bf16.mxu0 0
        %2500 = vmatpush1.bf16.msra.mxu0 %v2422
        %2501 = vmatprep.subr.bf16.mxu0 0
        %2502 = vmatpush1.bf16.msra.mxu0 %v2423
        %2503 = vmatprep.subr.bf16.mxu0 0
        %2504 = vmatpush1.bf16.msra.mxu0 %v2424
        %2505 = vmatprep.mubr.bf16.mxu0 %v2201
        %2506 = vmatmul.mubr.bf16.gmra.mrb[0].mxu0 %v2200
        %v2507 = vpop.f32.mrb[0].mxu0
        %v2508 = vadd.f32 0.0, %v2507
        %v2509 = vpop.f32.mrb[0].mxu0
        %v2510 = vpop.f32.mrb[0].mxu0
        %v2511 = vadd.f32 0.0, %v2510
        %v2512 = vpop.f32.mrb[0].mxu0
        %2513 = vmatprep.mubr.bf16.mxu0 %v2205
        %2514 = vmatmul.mubr.bf16.gmra.mrb[0].mxu0 %v2204
        %v2515 = vpop.f32.mrb[0].mxu0
        %v2516 = vadd.f32 0.0, %v2515
        %v2517 = vpop.f32.mrb[0].mxu0
        %v2518 = vpop.f32.mrb[0].mxu0
        %v2519 = vadd.f32 0.0, %v2518
        %v2520 = vpop.f32.mrb[0].mxu0
        %2521 = vmatprep.mubr.bf16.mxu0 %v2209
        %2522 = vmatmul.mubr.bf16.gmra.mrb[0].mxu0 %v2208
        %v2523 = vpop.f32.mrb[0].mxu0
        %v2524 = vadd.f32 0.0, %v2523
        %v2525 = vpop.f32.mrb[0].mxu0
        %v2526 = vpop.f32.mrb[0].mxu0
        %v2527 = vadd.f32 0.0, %v2526
        %v2528 = vpop.f32.mrb[0].mxu0
        %2529 = vmatprep.mubr.bf16.mxu0 %v2213
        %2530 = vmatmul.mubr.bf16.gmra.mrb[0].mxu0 %v2212
        %v2531 = vpop.f32.mrb[0].mxu0
        %v2532 = vadd.f32 0.0, %v2531
        %v2533 = vpop.f32.mrb[0].mxu0
        %v2534 = vpop.f32.mrb[0].mxu0
        %v2535 = vadd.f32 0.0, %v2534
        %v2536 = vpop.f32.mrb[0].mxu0
        %2537 = vdwg.mxu0
        %2538 = vmatprep.subr.bf16.mxu0 0
        %2539 = vmatpush1.bf16.msra.mxu0 %v2425
        %2540 = vmatprep.subr.bf16.mxu0 0
        %2541 = vmatpush1.bf16.msra.mxu0 %v2426
        %2542 = vmatprep.subr.bf16.mxu0 0
        %2543 = vmatpush1.bf16.msra.mxu0 %v2427
        %2544 = vmatprep.subr.bf16.mxu0 0
        %2545 = vmatpush1.bf16.msra.mxu0 %v2428
        %2546 = vmatprep.subr.bf16.mxu0 0
        %2547 = vmatpush1.bf16.msra.mxu0 %v2429
        %2548 = vmatprep.subr.bf16.mxu0 0
        %2549 = vmatpush1.bf16.msra.mxu0 %v2430
        %2550 = vmatprep.subr.bf16.mxu0 0
        %2551 = vmatpush1.bf16.msra.mxu0 %v2431
        %2552 = vmatprep.subr.bf16.mxu0 0
        %2553 = vmatpush1.bf16.msra.mxu0 %v2432
        %2554 = vmatprep.subr.bf16.mxu0 0
        %2555 = vmatpush1.bf16.msra.mxu0 %v2433
        %2556 = vmatprep.subr.bf16.mxu0 0
        %2557 = vmatpush1.bf16.msra.mxu0 %v2434
        %2558 = vmatprep.subr.bf16.mxu0 0
        %2559 = vmatpush1.bf16.msra.mxu0 %v2435
        %2560 = vmatprep.subr.bf16.mxu0 0
        %2561 = vmatpush1.bf16.msra.mxu0 %v2436
        %2562 = vmatprep.subr.bf16.mxu0 0
        %2563 = vmatpush1.bf16.msra.mxu0 %v2437
        %2564 = vmatprep.subr.bf16.mxu0 0
        %2565 = vmatpush1.bf16.msra.mxu0 %v2438
        %2566 = vmatprep.subr.bf16.mxu0 0
        %2567 = vmatpush1.bf16.msra.mxu0 %v2439
        %2568 = vmatprep.subr.bf16.mxu0 0
        %2569 = vmatpush1.bf16.msra.mxu0 %v2440
        %2570 = vmatprep.mubr.bf16.mxu0 %v2203
        %2571 = vmatmul.mubr.bf16.gmra.mrb[0].mxu0 %v2202
        %v2572 = vpop.f32.mrb[0].mxu0
        %v2573 = vadd.f32 %v2508, %v2572
        %v2574 = vpop.f32.mrb[0].mxu0
        %v2575 = vpop.f32.mrb[0].mxu0
        %v2576 = vadd.f32 %v2511, %v2575
        %v2577 = vpop.f32.mrb[0].mxu0
        %2578 = vmatprep.mubr.bf16.mxu0 %v2207
        %2579 = vmatmul.mubr.bf16.gmra.mrb[0].mxu0 %v2206
        %v2580 = vpop.f32.mrb[0].mxu0
        %v2581 = vadd.f32 %v2516, %v2580
        %v2582 = vpop.f32.mrb[0].mxu0
        %v2583 = vpop.f32.mrb[0].mxu0
        %v2584 = vadd.f32 %v2519, %v2583
        %v2585 = vpop.f32.mrb[0].mxu0
        %2586 = vmatprep.mubr.bf16.mxu0 %v2211
        %2587 = vmatmul.mubr.bf16.gmra.mrb[0].mxu0 %v2210
        %v2588 = vpop.f32.mrb[0].mxu0
        %v2589 = vadd.f32 %v2524, %v2588
        %v2590 = vpop.f32.mrb[0].mxu0
        %v2591 = vpop.f32.mrb[0].mxu0
        %v2592 = vadd.f32 %v2527, %v2591
        %v2593 = vpop.f32.mrb[0].mxu0
        %2594 = vmatprep.mubr.bf16.mxu0 %v2215
        %2595 = vmatmul.mubr.bf16.gmra.mrb[0].mxu0 %v2214
        %v2596 = vpop.f32.mrb[0].mxu0
        %v2597 = vadd.f32 %v2532, %v2596
        %v2598 = vpop.f32.mrb[0].mxu0
        %v2599 = vpop.f32.mrb[0].mxu0
        %v2600 = vadd.f32 %v2535, %v2599
        %v2601 = vpop.f32.mrb[0].mxu0
        %2602 = vdwg.mxu0
        %v2603 = vadd.f32 %v1941, %v2573
        %v2604 = vadd.f32 %v1944, %v2576
        %v2605 = vadd.f32 %v1949, %v2581
        %v2606 = vadd.f32 %v1952, %v2584
        %v2607 = vadd.f32 %v1957, %v2589
        %v2608 = vadd.f32 %v1960, %v2592
        %v2609 = vadd.f32 %v1965, %v2597
        %v2610 = vadd.f32 %v1968, %v2600
        %v2611 = vld [vmem:[#allocation2 + $0x20] sm:$0x80]
        %v2612 = vld [vmem:[#allocation2 + $0x28] sm:$0x80]
        %v2613 = vld [vmem:[#allocation2 + $0x30] sm:$0x80]
        %v2614 = vld [vmem:[#allocation2 + $0x38] sm:$0x80]
        %v2615 = vld [vmem:[#allocation2 + $0x120] sm:$0x7f]
        %v2616 = vld [vmem:[#allocation2 + $0x128] sm:$0x7f]
        %v2617 = vld [vmem:[#allocation2 + $0x130] sm:$0x7f]
        %v2618 = vld [vmem:[#allocation2 + $0x138] sm:$0x7f]
        %v2627 = vrot.slane %v2611, 7
        %v2628 = vrot.slane %v1975, 7
        %v2629 = vsel %vm1029, %v2627, %v2628
        %v2630 = vrot.slane %v2612, 7
        %v2631 = vrot.slane %v1976, 7
        %v2632 = vsel %vm1029, %v2630, %v2631
        %v2633 = vrot.slane %v2613, 7
        %v2634 = vrot.slane %v1977, 7
        %v2635 = vsel %vm1029, %v2633, %v2634
        %v2636 = vrot.slane %v2614, 7
        %v2637 = vrot.slane %v1978, 7
        %v2638 = vsel %vm1029, %v2636, %v2637
        %v2639 = vrot.slane %v1979, 7
        %v2640 = vsel %vm1029, %v2628, %v2639
        %v2641 = vrot.slane %v1980, 7
        %v2642 = vsel %vm1029, %v2631, %v2641
        %v2643 = vrot.slane %v1981, 7
        %v2644 = vsel %vm1029, %v2634, %v2643
        %v2645 = vrot.slane %v1982, 7
        %v2646 = vsel %vm1029, %v2637, %v2645
        %v2647 = vrot.slane %v1983, 7
        %v2648 = vsel %vm1029, %v2639, %v2647
        %v2649 = vrot.slane %v1984, 7
        %v2650 = vsel %vm1029, %v2641, %v2649
        %v2651 = vrot.slane %v1985, 7
        %v2652 = vsel %vm1029, %v2643, %v2651
        %v2653 = vrot.slane %v1986, 7
        %v2654 = vsel %vm1029, %v2645, %v2653
        %v2655 = vrot.slane %v1987, 7
        %v2656 = vsel %vm1029, %v2647, %v2655
        %v2657 = vrot.slane %v1988, 7
        %v2658 = vsel %vm1029, %v2649, %v2657
        %v2659 = vrot.slane %v1989, 7
        %v2660 = vsel %vm1029, %v2651, %v2659
        %v2661 = vrot.slane %v1990, 7
        %v2662 = vsel %vm1029, %v2653, %v2661
        %v2663 = vrot.slane %v1991, 7
        %v2664 = vsel %vm1029, %v2655, %v2663
        %v2665 = vrot.slane %v1992, 7
        %v2666 = vsel %vm1029, %v2657, %v2665
        %v2667 = vrot.slane %v1993, 7
        %v2668 = vsel %vm1029, %v2659, %v2667
        %v2669 = vrot.slane %v1994, 7
        %v2670 = vsel %vm1029, %v2661, %v2669
        %v2671 = vrot.slane %v1995, 7
        %v2672 = vsel %vm1029, %v2663, %v2671
        %v2673 = vrot.slane %v1996, 7
        %v2674 = vsel %vm1029, %v2665, %v2673
        %v2675 = vrot.slane %v1997, 7
        %v2676 = vsel %vm1029, %v2667, %v2675
        %v2677 = vrot.slane %v1998, 7
        %v2678 = vsel %vm1029, %v2669, %v2677
        %v2679 = vrot.slane %v1999, 7
        %v2680 = vsel %vm1029, %v2671, %v2679
        %v2681 = vrot.slane %v2000, 7
        %v2682 = vsel %vm1029, %v2673, %v2681
        %v2683 = vrot.slane %v2001, 7
        %v2684 = vsel %vm1029, %v2675, %v2683
        %v2685 = vrot.slane %v2002, 7
        %v2686 = vsel %vm1029, %v2677, %v2685
        %v2687 = vrot.slane %v2615, 7
        %v2688 = vsel %vm1029, %v2679, %v2687
        %v2689 = vrot.slane %v2616, 7
        %v2690 = vsel %vm1029, %v2681, %v2689
        %v2691 = vrot.slane %v2617, 7
        %v2692 = vsel %vm1029, %v2683, %v2691
        %v2693 = vrot.slane %v2618, 7
        %v2694 = vsel %vm1029, %v2685, %v2693
        %v2727 = vsel %vm985, %v2629, 0.0
        %v2728 = vsel %vm985, %v2632, 0.0
        %v2729 = vsel %vm985, %v2635, 0.0
        %v2730 = vsel %vm985, %v2638, 0.0
        %v2731 = vsel %vm986, %v2640, 0.0
        %v2732 = vsel %vm986, %v2642, 0.0
        %v2733 = vsel %vm986, %v2644, 0.0
        %v2734 = vsel %vm986, %v2646, 0.0
        %v2735 = vsel %vm987, %v2648, 0.0
        %v2736 = vsel %vm987, %v2650, 0.0
        %v2737 = vsel %vm987, %v2652, 0.0
        %v2738 = vsel %vm987, %v2654, 0.0
        %v2739 = vsel %vm988, %v2656, 0.0
        %v2740 = vsel %vm988, %v2658, 0.0
        %v2741 = vsel %vm988, %v2660, 0.0
        %v2742 = vsel %vm988, %v2662, 0.0
        %v2743 = vsel %vm989, %v2664, 0.0
        %v2744 = vsel %vm989, %v2666, 0.0
        %v2745 = vsel %vm989, %v2668, 0.0
        %v2746 = vsel %vm989, %v2670, 0.0
        %v2747 = vsel %vm990, %v2672, 0.0
        %v2748 = vsel %vm990, %v2674, 0.0
        %v2749 = vsel %vm990, %v2676, 0.0
        %v2750 = vsel %vm990, %v2678, 0.0
        %v2751 = vsel %vm991, %v2680, 0.0
        %v2752 = vsel %vm991, %v2682, 0.0
        %v2753 = vsel %vm991, %v2684, 0.0
        %v2754 = vsel %vm991, %v2686, 0.0
        %v2755 = vsel %vm992, %v2688, 0.0
        %v2756 = vsel %vm992, %v2690, 0.0
        %v2757 = vsel %vm992, %v2692, 0.0
        %v2758 = vsel %vm992, %v2694, 0.0
        %v2759 = vpack.c.bf16 %v2731, %v2727
        %v2760 = vpack.c.bf16 %v2732, %v2728
        %v2761 = vpack.c.bf16 %v2733, %v2729
        %v2762 = vpack.c.bf16 %v2734, %v2730
        %v2763 = vpack.c.bf16 %v2739, %v2735
        %v2764 = vpack.c.bf16 %v2740, %v2736
        %v2765 = vpack.c.bf16 %v2741, %v2737
        %v2766 = vpack.c.bf16 %v2742, %v2738
        %v2767 = vpack.c.bf16 %v2747, %v2743
        %v2768 = vpack.c.bf16 %v2748, %v2744
        %v2769 = vpack.c.bf16 %v2749, %v2745
        %v2770 = vpack.c.bf16 %v2750, %v2746
        %v2771 = vpack.c.bf16 %v2755, %v2751
        %v2772 = vpack.c.bf16 %v2756, %v2752
        %v2773 = vpack.c.bf16 %v2757, %v2753
        %v2774 = vpack.c.bf16 %v2758, %v2754
        %s2775 = scalar_lea.vmem [#allocation12], 768
        %v2776 = vld [vmem:[%s2775] sm:$0xf]
        %v2777 = vld [vmem:[%s2775 + $0x4] sm:$0xf]
        %v2778 = vld [vmem:[%s2775 + $0x8] sm:$0xf]
        %v2779 = vld [vmem:[%s2775 + $0xc] sm:$0xf]
        %v2780 = vld [vmem:[%s2775 + $0x10] sm:$0xf]
        %v2781 = vld [vmem:[%s2775 + $0x14] sm:$0xf]
        %v2782 = vld [vmem:[%s2775 + $0x18] sm:$0xf]
        %v2783 = vld [vmem:[%s2775 + $0x1c] sm:$0xf]
        %v2784 = vld [vmem:[%s2775 + $0x20] sm:$0xf]
        %v2785 = vld [vmem:[%s2775 + $0x24] sm:$0xf]
        %v2786 = vld [vmem:[%s2775 + $0x28] sm:$0xf]
        %v2787 = vld [vmem:[%s2775 + $0x2c] sm:$0xf]
        %v2788 = vld [vmem:[%s2775 + $0x30] sm:$0xf]
        %v2789 = vld [vmem:[%s2775 + $0x34] sm:$0xf]
        %v2790 = vld [vmem:[%s2775 + $0x38] sm:$0xf]
        %v2791 = vld [vmem:[%s2775 + $0x3c] sm:$0xf]
        %v2792 = vld [vmem:[%s2775 + $0x40] sm:$0xf]
        %v2793 = vld [vmem:[%s2775 + $0x44] sm:$0xf]
        %v2794 = vld [vmem:[%s2775 + $0x48] sm:$0xf]
        %v2795 = vld [vmem:[%s2775 + $0x4c] sm:$0xf]
        %v2796 = vld [vmem:[%s2775 + $0x50] sm:$0xf]
        %v2797 = vld [vmem:[%s2775 + $0x54] sm:$0xf]
        %v2798 = vld [vmem:[%s2775 + $0x58] sm:$0xf]
        %v2799 = vld [vmem:[%s2775 + $0x5c] sm:$0xf]
        %v2800 = vld [vmem:[%s2775 + $0x60] sm:$0xf]
        %v2801 = vld [vmem:[%s2775 + $0x64] sm:$0xf]
        %v2802 = vld [vmem:[%s2775 + $0x68] sm:$0xf]
        %v2803 = vld [vmem:[%s2775 + $0x6c] sm:$0xf]
        %v2804 = vld [vmem:[%s2775 + $0x70] sm:$0xf]
        %v2805 = vld [vmem:[%s2775 + $0x74] sm:$0xf]
        %v2806 = vld [vmem:[%s2775 + $0x78] sm:$0xf]
        %v2807 = vld [vmem:[%s2775 + $0x7c] sm:$0xf]
        %v2808 = vld [vmem:[%s2775 + $0x80] sm:$0xf]
        %v2809 = vld [vmem:[%s2775 + $0x84] sm:$0xf]
        %v2810 = vld [vmem:[%s2775 + $0x88] sm:$0xf]
        %v2811 = vld [vmem:[%s2775 + $0x8c] sm:$0xf]
        %v2812 = vld [vmem:[%s2775 + $0x90] sm:$0xf]
        %v2813 = vld [vmem:[%s2775 + $0x94] sm:$0xf]
        %v2814 = vld [vmem:[%s2775 + $0x98] sm:$0xf]
        %v2815 = vld [vmem:[%s2775 + $0x9c] sm:$0xf]
        %v2816 = vld [vmem:[%s2775 + $0xa0] sm:$0xf]
        %v2817 = vld [vmem:[%s2775 + $0xa4] sm:$0xf]
        %v2818 = vld [vmem:[%s2775 + $0xa8] sm:$0xf]
        %v2819 = vld [vmem:[%s2775 + $0xac] sm:$0xf]
        %v2820 = vld [vmem:[%s2775 + $0xb0] sm:$0xf]
        %v2821 = vld [vmem:[%s2775 + $0xb4] sm:$0xf]
        %v2822 = vld [vmem:[%s2775 + $0xb8] sm:$0xf]
        %v2823 = vld [vmem:[%s2775 + $0xbc] sm:$0xf]
        %v2824 = vld [vmem:[%s2775 + $0xc0] sm:$0xf]
        %v2825 = vld [vmem:[%s2775 + $0xc4] sm:$0xf]
        %v2826 = vld [vmem:[%s2775 + $0xc8] sm:$0xf]
        %v2827 = vld [vmem:[%s2775 + $0xcc] sm:$0xf]
        %v2828 = vld [vmem:[%s2775 + $0xd0] sm:$0xf]
        %v2829 = vld [vmem:[%s2775 + $0xd4] sm:$0xf]
        %v2830 = vld [vmem:[%s2775 + $0xd8] sm:$0xf]
        %v2831 = vld [vmem:[%s2775 + $0xdc] sm:$0xf]
        %v2832 = vld [vmem:[%s2775 + $0xe0] sm:$0xf]
        %v2833 = vld [vmem:[%s2775 + $0xe4] sm:$0xf]
        %v2834 = vld [vmem:[%s2775 + $0xe8] sm:$0xf]
        %v2835 = vld [vmem:[%s2775 + $0xec] sm:$0xf]
        %v2836 = vld [vmem:[%s2775 + $0xf0] sm:$0xf]
        %v2837 = vld [vmem:[%s2775 + $0xf4] sm:$0xf]
        %v2838 = vld [vmem:[%s2775 + $0xf8] sm:$0xf]
        %v2839 = vld [vmem:[%s2775 + $0xfc] sm:$0xf]
        %v2904 = vunpack.c.l.b16 %v2776
        %v2905 = vunpack.c.l.b16 %v2777
        %v2906 = vunpack.c.l.b16 %v2778
        %v2907 = vunpack.c.l.b16 %v2779
        %v2908 = vunpack.c.l.b16 %v2780
        %v2909 = vunpack.c.l.b16 %v2781
        %v2910 = vunpack.c.l.b16 %v2782
        %v2911 = vunpack.c.l.b16 %v2783
        %v2912 = vunpack.c.l.b16 %v2784
        %v2913 = vunpack.c.l.b16 %v2785
        %v2914 = vunpack.c.l.b16 %v2786
        %v2915 = vunpack.c.l.b16 %v2787
        %v2916 = vunpack.c.l.b16 %v2788
        %v2917 = vunpack.c.l.b16 %v2789
        %v2918 = vunpack.c.l.b16 %v2790
        %v2919 = vunpack.c.l.b16 %v2791
        %v2920 = vunpack.c.l.b16 %v2792
        %v2921 = vunpack.c.l.b16 %v2793
        %v2922 = vunpack.c.l.b16 %v2794
        %v2923 = vunpack.c.l.b16 %v2795
        %v2924 = vunpack.c.l.b16 %v2796
        %v2925 = vunpack.c.l.b16 %v2797
        %v2926 = vunpack.c.l.b16 %v2798
        %v2927 = vunpack.c.l.b16 %v2799
        %v2928 = vunpack.c.l.b16 %v2800
        %v2929 = vunpack.c.l.b16 %v2801
        %v2930 = vunpack.c.l.b16 %v2802
        %v2931 = vunpack.c.l.b16 %v2803
        %v2932 = vunpack.c.l.b16 %v2804
        %v2933 = vunpack.c.l.b16 %v2805
        %v2934 = vunpack.c.l.b16 %v2806
        %v2935 = vunpack.c.l.b16 %v2807
        %v2936 = vunpack.c.l.b16 %v2808
        %v2937 = vunpack.c.l.b16 %v2809
        %v2938 = vunpack.c.l.b16 %v2810
        %v2939 = vunpack.c.l.b16 %v2811
        %v2940 = vunpack.c.l.b16 %v2812
        %v2941 = vunpack.c.l.b16 %v2813
        %v2942 = vunpack.c.l.b16 %v2814
        %v2943 = vunpack.c.l.b16 %v2815
        %v2944 = vunpack.c.l.b16 %v2816
        %v2945 = vunpack.c.l.b16 %v2817
        %v2946 = vunpack.c.l.b16 %v2818
        %v2947 = vunpack.c.l.b16 %v2819
        %v2948 = vunpack.c.l.b16 %v2820
        %v2949 = vunpack.c.l.b16 %v2821
        %v2950 = vunpack.c.l.b16 %v2822
        %v2951 = vunpack.c.l.b16 %v2823
        %v2952 = vunpack.c.l.b16 %v2824
        %v2953 = vunpack.c.l.b16 %v2825
        %v2954 = vunpack.c.l.b16 %v2826
        %v2955 = vunpack.c.l.b16 %v2827
        %v2956 = vunpack.c.l.b16 %v2828
        %v2957 = vunpack.c.l.b16 %v2829
        %v2958 = vunpack.c.l.b16 %v2830
        %v2959 = vunpack.c.l.b16 %v2831
        %v2960 = vunpack.c.l.b16 %v2832
        %v2961 = vunpack.c.l.b16 %v2833
        %v2962 = vunpack.c.l.b16 %v2834
        %v2963 = vunpack.c.l.b16 %v2835
        %v2964 = vunpack.c.l.b16 %v2836
        %v2965 = vunpack.c.l.b16 %v2837
        %v2966 = vunpack.c.l.b16 %v2838
        %v2967 = vunpack.c.l.b16 %v2839
        %v2968 = vpack.c.b16 %v2905, %v2904
        %v2969 = vpack.c.b16 %v2907, %v2906
        %v2970 = vpack.c.b16 %v2909, %v2908
        %v2971 = vpack.c.b16 %v2911, %v2910
        %v2972 = vpack.c.b16 %v2913, %v2912
        %v2973 = vpack.c.b16 %v2915, %v2914
        %v2974 = vpack.c.b16 %v2917, %v2916
        %v2975 = vpack.c.b16 %v2919, %v2918
        %v2976 = vpack.c.b16 %v2921, %v2920
        %v2977 = vpack.c.b16 %v2923, %v2922
        %v2978 = vpack.c.b16 %v2925, %v2924
        %v2979 = vpack.c.b16 %v2927, %v2926
        %v2980 = vpack.c.b16 %v2929, %v2928
        %v2981 = vpack.c.b16 %v2931, %v2930
        %v2982 = vpack.c.b16 %v2933, %v2932
        %v2983 = vpack.c.b16 %v2935, %v2934
        %v2984 = vpack.c.b16 %v2937, %v2936
        %v2985 = vpack.c.b16 %v2939, %v2938
        %v2986 = vpack.c.b16 %v2941, %v2940
        %v2987 = vpack.c.b16 %v2943, %v2942
        %v2988 = vpack.c.b16 %v2945, %v2944
        %v2989 = vpack.c.b16 %v2947, %v2946
        %v2990 = vpack.c.b16 %v2949, %v2948
        %v2991 = vpack.c.b16 %v2951, %v2950
        %v2992 = vpack.c.b16 %v2953, %v2952
        %v2993 = vpack.c.b16 %v2955, %v2954
        %v2994 = vpack.c.b16 %v2957, %v2956
        %v2995 = vpack.c.b16 %v2959, %v2958
        %v2996 = vpack.c.b16 %v2961, %v2960
        %v2997 = vpack.c.b16 %v2963, %v2962
        %v2998 = vpack.c.b16 %v2965, %v2964
        %v2999 = vpack.c.b16 %v2967, %v2966
        %3032 = vmatprep.subr.bf16.mxu0 0
        %3033 = vmatpush1.bf16.msra.mxu0 %v2968
        %3034 = vmatprep.subr.bf16.mxu0 0
        %3035 = vmatpush1.bf16.msra.mxu0 %v2969
        %3036 = vmatprep.subr.bf16.mxu0 0
        %3037 = vmatpush1.bf16.msra.mxu0 %v2970
        %3038 = vmatprep.subr.bf16.mxu0 0
        %3039 = vmatpush1.bf16.msra.mxu0 %v2971
        %3040 = vmatprep.subr.bf16.mxu0 0
        %3041 = vmatpush1.bf16.msra.mxu0 %v2972
        %3042 = vmatprep.subr.bf16.mxu0 0
        %3043 = vmatpush1.bf16.msra.mxu0 %v2973
        %3044 = vmatprep.subr.bf16.mxu0 0
        %3045 = vmatpush1.bf16.msra.mxu0 %v2974
        %3046 = vmatprep.subr.bf16.mxu0 0
        %3047 = vmatpush1.bf16.msra.mxu0 %v2975
        %3048 = vmatprep.subr.bf16.mxu0 0
        %3049 = vmatpush1.bf16.msra.mxu0 %v2976
        %3050 = vmatprep.subr.bf16.mxu0 0
        %3051 = vmatpush1.bf16.msra.mxu0 %v2977
        %3052 = vmatprep.subr.bf16.mxu0 0
        %3053 = vmatpush1.bf16.msra.mxu0 %v2978
        %3054 = vmatprep.subr.bf16.mxu0 0
        %3055 = vmatpush1.bf16.msra.mxu0 %v2979
        %3056 = vmatprep.subr.bf16.mxu0 0
        %3057 = vmatpush1.bf16.msra.mxu0 %v2980
        %3058 = vmatprep.subr.bf16.mxu0 0
        %3059 = vmatpush1.bf16.msra.mxu0 %v2981
        %3060 = vmatprep.subr.bf16.mxu0 0
        %3061 = vmatpush1.bf16.msra.mxu0 %v2982
        %3062 = vmatprep.subr.bf16.mxu0 0
        %3063 = vmatpush1.bf16.msra.mxu0 %v2983
        %3064 = vmatprep.mubr.bf16.mxu0 %v2760
        %3065 = vmatmul.mubr.bf16.gmra.mrb[0].mxu0 %v2759
        %v3066 = vpop.f32.mrb[0].mxu0
        %v3067 = vadd.f32 0.0, %v3066
        %v3068 = vpop.f32.mrb[0].mxu0
        %v3069 = vpop.f32.mrb[0].mxu0
        %v3070 = vadd.f32 0.0, %v3069
        %v3071 = vpop.f32.mrb[0].mxu0
        %3072 = vmatprep.mubr.bf16.mxu0 %v2764
        %3073 = vmatmul.mubr.bf16.gmra.mrb[0].mxu0 %v2763
        %v3074 = vpop.f32.mrb[0].mxu0
        %v3075 = vadd.f32 0.0, %v3074
        %v3076 = vpop.f32.mrb[0].mxu0
        %v3077 = vpop.f32.mrb[0].mxu0
        %v3078 = vadd.f32 0.0, %v3077
        %v3079 = vpop.f32.mrb[0].mxu0
        %3080 = vmatprep.mubr.bf16.mxu0 %v2768
        %3081 = vmatmul.mubr.bf16.gmra.mrb[0].mxu0 %v2767
        %v3082 = vpop.f32.mrb[0].mxu0
        %v3083 = vadd.f32 0.0, %v3082
        %v3084 = vpop.f32.mrb[0].mxu0
        %v3085 = vpop.f32.mrb[0].mxu0
        %v3086 = vadd.f32 0.0, %v3085
        %v3087 = vpop.f32.mrb[0].mxu0
        %3088 = vmatprep.mubr.bf16.mxu0 %v2772
        %3089 = vmatmul.mubr.bf16.gmra.mrb[0].mxu0 %v2771
        %v3090 = vpop.f32.mrb[0].mxu0
        %v3091 = vadd.f32 0.0, %v3090
        %v3092 = vpop.f32.mrb[0].mxu0
        %v3093 = vpop.f32.mrb[0].mxu0
        %v3094 = vadd.f32 0.0, %v3093
        %v3095 = vpop.f32.mrb[0].mxu0
        %3096 = vdwg.mxu0
        %3097 = vmatprep.subr.bf16.mxu0 0
        %3098 = vmatpush1.bf16.msra.mxu0 %v2984
        %3099 = vmatprep.subr.bf16.mxu0 0
        %3100 = vmatpush1.bf16.msra.mxu0 %v2985
        %3101 = vmatprep.subr.bf16.mxu0 0
        %3102 = vmatpush1.bf16.msra.mxu0 %v2986
        %3103 = vmatprep.subr.bf16.mxu0 0
        %3104 = vmatpush1.bf16.msra.mxu0 %v2987
        %3105 = vmatprep.subr.bf16.mxu0 0
        %3106 = vmatpush1.bf16.msra.mxu0 %v2988
        %3107 = vmatprep.subr.bf16.mxu0 0
        %3108 = vmatpush1.bf16.msra.mxu0 %v2989
        %3109 = vmatprep.subr.bf16.mxu0 0
        %3110 = vmatpush1.bf16.msra.mxu0 %v2990
        %3111 = vmatprep.subr.bf16.mxu0 0
        %3112 = vmatpush1.bf16.msra.mxu0 %v2991
        %3113 = vmatprep.subr.bf16.mxu0 0
        %3114 = vmatpush1.bf16.msra.mxu0 %v2992
        %3115 = vmatprep.subr.bf16.mxu0 0
        %3116 = vmatpush1.bf16.msra.mxu0 %v2993
        %3117 = vmatprep.subr.bf16.mxu0 0
        %3118 = vmatpush1.bf16.msra.mxu0 %v2994
        %3119 = vmatprep.subr.bf16.mxu0 0
        %3120 = vmatpush1.bf16.msra.mxu0 %v2995
        %3121 = vmatprep.subr.bf16.mxu0 0
        %3122 = vmatpush1.bf16.msra.mxu0 %v2996
        %3123 = vmatprep.subr.bf16.mxu0 0
        %3124 = vmatpush1.bf16.msra.mxu0 %v2997
        %3125 = vmatprep.subr.bf16.mxu0 0
        %3126 = vmatpush1.bf16.msra.mxu0 %v2998
        %3127 = vmatprep.subr.bf16.mxu0 0
        %3128 = vmatpush1.bf16.msra.mxu0 %v2999
        %3129 = vmatprep.mubr.bf16.mxu0 %v2762
        %3130 = vmatmul.mubr.bf16.gmra.mrb[0].mxu0 %v2761
        %v3131 = vpop.f32.mrb[0].mxu0
        %v3132 = vadd.f32 %v3067, %v3131
        %v3133 = vpop.f32.mrb[0].mxu0
        %v3134 = vpop.f32.mrb[0].mxu0
        %v3135 = vadd.f32 %v3070, %v3134
        %v3136 = vpop.f32.mrb[0].mxu0
        %3137 = vmatprep.mubr.bf16.mxu0 %v2766
        %3138 = vmatmul.mubr.bf16.gmra.mrb[0].mxu0 %v2765
        %v3139 = vpop.f32.mrb[0].mxu0
        %v3140 = vadd.f32 %v3075, %v3139
        %v3141 = vpop.f32.mrb[0].mxu0
        %v3142 = vpop.f32.mrb[0].mxu0
        %v3143 = vadd.f32 %v3078, %v3142
        %v3144 = vpop.f32.mrb[0].mxu0
        %3145 = vmatprep.mubr.bf16.mxu0 %v2770
        %3146 = vmatmul.mubr.bf16.gmra.mrb[0].mxu0 %v2769
        %v3147 = vpop.f32.mrb[0].mxu0
        %v3148 = vadd.f32 %v3083, %v3147
        %v3149 = vpop.f32.mrb[0].mxu0
        %v3150 = vpop.f32.mrb[0].mxu0
        %v3151 = vadd.f32 %v3086, %v3150
        %v3152 = vpop.f32.mrb[0].mxu0
        %3153 = vmatprep.mubr.bf16.mxu0 %v2774
        %3154 = vmatmul.mubr.bf16.gmra.mrb[0].mxu0 %v2773
        %v3155 = vpop.f32.mrb[0].mxu0
        %v3156 = vadd.f32 %v3091, %v3155
        %v3157 = vpop.f32.mrb[0].mxu0
        %v3158 = vpop.f32.mrb[0].mxu0
        %v3159 = vadd.f32 %v3094, %v3158
        %v3160 = vpop.f32.mrb[0].mxu0
        %3161 = vdwg.mxu0
        %v3162 = vadd.f32 %v2603, %v3132
        %v3163 = vadd.f32 %v2604, %v3135
        %v3164 = vadd.f32 %v2605, %v3140
        %v3165 = vadd.f32 %v2606, %v3143
        %v3166 = vadd.f32 %v2607, %v3148
        %v3167 = vadd.f32 %v2608, %v3151
        %v3168 = vadd.f32 %v2609, %v3156
        %v3169 = vadd.f32 %v2610, %v3159
        %v3170 = vld [vmem:[#allocation2 + $0x120] sm:$0xff]
        %v3171 = vld [vmem:[#allocation2 + $0x128] sm:$0xff]
        %v3172 = vld [vmem:[#allocation2 + $0x130] sm:$0xff]
        %v3173 = vld [vmem:[#allocation2 + $0x138] sm:$0xff]
        %v3174 = vpack.c.bf16 %v1979, %v1975
        %v3175 = vpack.c.bf16 %v1980, %v1976
        %v3176 = vpack.c.bf16 %v1981, %v1977
        %v3177 = vpack.c.bf16 %v1982, %v1978
        %v3178 = vpack.c.bf16 %v1987, %v1983
        %v3179 = vpack.c.bf16 %v1988, %v1984
        %v3180 = vpack.c.bf16 %v1989, %v1985
        %v3181 = vpack.c.bf16 %v1990, %v1986
        %v3182 = vpack.c.bf16 %v1995, %v1991
        %v3183 = vpack.c.bf16 %v1996, %v1992
        %v3184 = vpack.c.bf16 %v1997, %v1993
        %v3185 = vpack.c.bf16 %v1998, %v1994
        %v3186 = vpack.c.bf16 %v3170, %v1999
        %v3187 = vpack.c.bf16 %v3171, %v2000
        %v3188 = vpack.c.bf16 %v3172, %v2001
        %v3189 = vpack.c.bf16 %v3173, %v2002
        %s3190 = scalar_lea.vmem [#allocation12], 1024
        %v3191 = vld [vmem:[%s3190] sm:$0xf]
        %v3192 = vld [vmem:[%s3190 + $0x4] sm:$0xf]
        %v3193 = vld [vmem:[%s3190 + $0x8] sm:$0xf]
        %v3194 = vld [vmem:[%s3190 + $0xc] sm:$0xf]
        %v3195 = vld [vmem:[%s3190 + $0x10] sm:$0xf]
        %v3196 = vld [vmem:[%s3190 + $0x14] sm:$0xf]
        %v3197 = vld [vmem:[%s3190 + $0x18] sm:$0xf]
        %v3198 = vld [vmem:[%s3190 + $0x1c] sm:$0xf]
        %v3199 = vld [vmem:[%s3190 + $0x20] sm:$0xf]
        %v3200 = vld [vmem:[%s3190 + $0x24] sm:$0xf]
        %v3201 = vld [vmem:[%s3190 + $0x28] sm:$0xf]
        %v3202 = vld [vmem:[%s3190 + $0x2c] sm:$0xf]
        %v3203 = vld [vmem:[%s3190 + $0x30] sm:$0xf]
        %v3204 = vld [vmem:[%s3190 + $0x34] sm:$0xf]
        %v3205 = vld [vmem:[%s3190 + $0x38] sm:$0xf]
        %v3206 = vld [vmem:[%s3190 + $0x3c] sm:$0xf]
        %v3207 = vld [vmem:[%s3190 + $0x40] sm:$0xf]
        %v3208 = vld [vmem:[%s3190 + $0x44] sm:$0xf]
        %v3209 = vld [vmem:[%s3190 + $0x48] sm:$0xf]
        %v3210 = vld [vmem:[%s3190 + $0x4c] sm:$0xf]
        %v3211 = vld [vmem:[%s3190 + $0x50] sm:$0xf]
        %v3212 = vld [vmem:[%s3190 + $0x54] sm:$0xf]
        %v3213 = vld [vmem:[%s3190 + $0x58] sm:$0xf]
        %v3214 = vld [vmem:[%s3190 + $0x5c] sm:$0xf]
        %v3215 = vld [vmem:[%s3190 + $0x60] sm:$0xf]
        %v3216 = vld [vmem:[%s3190 + $0x64] sm:$0xf]
        %v3217 = vld [vmem:[%s3190 + $0x68] sm:$0xf]
        %v3218 = vld [vmem:[%s3190 + $0x6c] sm:$0xf]
        %v3219 = vld [vmem:[%s3190 + $0x70] sm:$0xf]
        %v3220 = vld [vmem:[%s3190 + $0x74] sm:$0xf]
        %v3221 = vld [vmem:[%s3190 + $0x78] sm:$0xf]
        %v3222 = vld [vmem:[%s3190 + $0x7c] sm:$0xf]
        %v3223 = vld [vmem:[%s3190 + $0x80] sm:$0xf]
        %v3224 = vld [vmem:[%s3190 + $0x84] sm:$0xf]
        %v3225 = vld [vmem:[%s3190 + $0x88] sm:$0xf]
        %v3226 = vld [vmem:[%s3190 + $0x8c] sm:$0xf]
        %v3227 = vld [vmem:[%s3190 + $0x90] sm:$0xf]
        %v3228 = vld [vmem:[%s3190 + $0x94] sm:$0xf]
        %v3229 = vld [vmem:[%s3190 + $0x98] sm:$0xf]
        %v3230 = vld [vmem:[%s3190 + $0x9c] sm:$0xf]
        %v3231 = vld [vmem:[%s3190 + $0xa0] sm:$0xf]
        %v3232 = vld [vmem:[%s3190 + $0xa4] sm:$0xf]
        %v3233 = vld [vmem:[%s3190 + $0xa8] sm:$0xf]
        %v3234 = vld [vmem:[%s3190 + $0xac] sm:$0xf]
        %v3235 = vld [vmem:[%s3190 + $0xb0] sm:$0xf]
        %v3236 = vld [vmem:[%s3190 + $0xb4] sm:$0xf]
        %v3237 = vld [vmem:[%s3190 + $0xb8] sm:$0xf]
        %v3238 = vld [vmem:[%s3190 + $0xbc] sm:$0xf]
        %v3239 = vld [vmem:[%s3190 + $0xc0] sm:$0xf]
        %v3240 = vld [vmem:[%s3190 + $0xc4] sm:$0xf]
        %v3241 = vld [vmem:[%s3190 + $0xc8] sm:$0xf]
        %v3242 = vld [vmem:[%s3190 + $0xcc] sm:$0xf]
        %v3243 = vld [vmem:[%s3190 + $0xd0] sm:$0xf]
        %v3244 = vld [vmem:[%s3190 + $0xd4] sm:$0xf]
        %v3245 = vld [vmem:[%s3190 + $0xd8] sm:$0xf]
        %v3246 = vld [vmem:[%s3190 + $0xdc] sm:$0xf]
        %v3247 = vld [vmem:[%s3190 + $0xe0] sm:$0xf]
        %v3248 = vld [vmem:[%s3190 + $0xe4] sm:$0xf]
        %v3249 = vld [vmem:[%s3190 + $0xe8] sm:$0xf]
        %v3250 = vld [vmem:[%s3190 + $0xec] sm:$0xf]
        %v3251 = vld [vmem:[%s3190 + $0xf0] sm:$0xf]
        %v3252 = vld [vmem:[%s3190 + $0xf4] sm:$0xf]
        %v3253 = vld [vmem:[%s3190 + $0xf8] sm:$0xf]
        %v3254 = vld [vmem:[%s3190 + $0xfc] sm:$0xf]
        %v3319 = vunpack.c.l.b16 %v3191
        %v3320 = vunpack.c.l.b16 %v3192
        %v3321 = vunpack.c.l.b16 %v3193
        %v3322 = vunpack.c.l.b16 %v3194
        %v3323 = vunpack.c.l.b16 %v3195
        %v3324 = vunpack.c.l.b16 %v3196
        %v3325 = vunpack.c.l.b16 %v3197
        %v3326 = vunpack.c.l.b16 %v3198
        %v3327 = vunpack.c.l.b16 %v3199
        %v3328 = vunpack.c.l.b16 %v3200
        %v3329 = vunpack.c.l.b16 %v3201
        %v3330 = vunpack.c.l.b16 %v3202
        %v3331 = vunpack.c.l.b16 %v3203
        %v3332 = vunpack.c.l.b16 %v3204
        %v3333 = vunpack.c.l.b16 %v3205
        %v3334 = vunpack.c.l.b16 %v3206
        %v3335 = vunpack.c.l.b16 %v3207
        %v3336 = vunpack.c.l.b16 %v3208
        %v3337 = vunpack.c.l.b16 %v3209
        %v3338 = vunpack.c.l.b16 %v3210
        %v3339 = vunpack.c.l.b16 %v3211
        %v3340 = vunpack.c.l.b16 %v3212
        %v3341 = vunpack.c.l.b16 %v3213
        %v3342 = vunpack.c.l.b16 %v3214
        %v3343 = vunpack.c.l.b16 %v3215
        %v3344 = vunpack.c.l.b16 %v3216
        %v3345 = vunpack.c.l.b16 %v3217
        %v3346 = vunpack.c.l.b16 %v3218
        %v3347 = vunpack.c.l.b16 %v3219
        %v3348 = vunpack.c.l.b16 %v3220
        %v3349 = vunpack.c.l.b16 %v3221
        %v3350 = vunpack.c.l.b16 %v3222
        %v3351 = vunpack.c.l.b16 %v3223
        %v3352 = vunpack.c.l.b16 %v3224
        %v3353 = vunpack.c.l.b16 %v3225
        %v3354 = vunpack.c.l.b16 %v3226
        %v3355 = vunpack.c.l.b16 %v3227
        %v3356 = vunpack.c.l.b16 %v3228
        %v3357 = vunpack.c.l.b16 %v3229
        %v3358 = vunpack.c.l.b16 %v3230
        %v3359 = vunpack.c.l.b16 %v3231
        %v3360 = vunpack.c.l.b16 %v3232
        %v3361 = vunpack.c.l.b16 %v3233
        %v3362 = vunpack.c.l.b16 %v3234
        %v3363 = vunpack.c.l.b16 %v3235
        %v3364 = vunpack.c.l.b16 %v3236
        %v3365 = vunpack.c.l.b16 %v3237
        %v3366 = vunpack.c.l.b16 %v3238
        %v3367 = vunpack.c.l.b16 %v3239
        %v3368 = vunpack.c.l.b16 %v3240
        %v3369 = vunpack.c.l.b16 %v3241
        %v3370 = vunpack.c.l.b16 %v3242
        %v3371 = vunpack.c.l.b16 %v3243
        %v3372 = vunpack.c.l.b16 %v3244
        %v3373 = vunpack.c.l.b16 %v3245
        %v3374 = vunpack.c.l.b16 %v3246
        %v3375 = vunpack.c.l.b16 %v3247
        %v3376 = vunpack.c.l.b16 %v3248
        %v3377 = vunpack.c.l.b16 %v3249
        %v3378 = vunpack.c.l.b16 %v3250
        %v3379 = vunpack.c.l.b16 %v3251
        %v3380 = vunpack.c.l.b16 %v3252
        %v3381 = vunpack.c.l.b16 %v3253
        %v3382 = vunpack.c.l.b16 %v3254
        %v3383 = vpack.c.b16 %v3320, %v3319
        %v3384 = vpack.c.b16 %v3322, %v3321
        %v3385 = vpack.c.b16 %v3324, %v3323
        %v3386 = vpack.c.b16 %v3326, %v3325
        %v3387 = vpack.c.b16 %v3328, %v3327
        %v3388 = vpack.c.b16 %v3330, %v3329
        %v3389 = vpack.c.b16 %v3332, %v3331
        %v3390 = vpack.c.b16 %v3334, %v3333
        %v3391 = vpack.c.b16 %v3336, %v3335
        %v3392 = vpack.c.b16 %v3338, %v3337
        %v3393 = vpack.c.b16 %v3340, %v3339
        %v3394 = vpack.c.b16 %v3342, %v3341
        %v3395 = vpack.c.b16 %v3344, %v3343
        %v3396 = vpack.c.b16 %v3346, %v3345
        %v3397 = vpack.c.b16 %v3348, %v3347
        %v3398 = vpack.c.b16 %v3350, %v3349
        %v3399 = vpack.c.b16 %v3352, %v3351
        %v3400 = vpack.c.b16 %v3354, %v3353
        %v3401 = vpack.c.b16 %v3356, %v3355
        %v3402 = vpack.c.b16 %v3358, %v3357
        %v3403 = vpack.c.b16 %v3360, %v3359
        %v3404 = vpack.c.b16 %v3362, %v3361
        %v3405 = vpack.c.b16 %v3364, %v3363
        %v3406 = vpack.c.b16 %v3366, %v3365
        %v3407 = vpack.c.b16 %v3368, %v3367
        %v3408 = vpack.c.b16 %v3370, %v3369
        %v3409 = vpack.c.b16 %v3372, %v3371
        %v3410 = vpack.c.b16 %v3374, %v3373
        %v3411 = vpack.c.b16 %v3376, %v3375
        %v3412 = vpack.c.b16 %v3378, %v3377
        %v3413 = vpack.c.b16 %v3380, %v3379
        %v3414 = vpack.c.b16 %v3382, %v3381
        %3447 = vmatprep.subr.bf16.mxu0 0
        %3448 = vmatpush1.bf16.msra.mxu0 %v3383
        %3449 = vmatprep.subr.bf16.mxu0 0
        %3450 = vmatpush1.bf16.msra.mxu0 %v3384
        %3451 = vmatprep.subr.bf16.mxu0 0
        %3452 = vmatpush1.bf16.msra.mxu0 %v3385
        %3453 = vmatprep.subr.bf16.mxu0 0
        %3454 = vmatpush1.bf16.msra.mxu0 %v3386
        %3455 = vmatprep.subr.bf16.mxu0 0
        %3456 = vmatpush1.bf16.msra.mxu0 %v3387
        %3457 = vmatprep.subr.bf16.mxu0 0
        %3458 = vmatpush1.bf16.msra.mxu0 %v3388
        %3459 = vmatprep.subr.bf16.mxu0 0
        %3460 = vmatpush1.bf16.msra.mxu0 %v3389
        %3461 = vmatprep.subr.bf16.mxu0 0
        %3462 = vmatpush1.bf16.msra.mxu0 %v3390
        %3463 = vmatprep.subr.bf16.mxu0 0
        %3464 = vmatpush1.bf16.msra.mxu0 %v3391
        %3465 = vmatprep.subr.bf16.mxu0 0
        %3466 = vmatpush1.bf16.msra.mxu0 %v3392
        %3467 = vmatprep.subr.bf16.mxu0 0
        %3468 = vmatpush1.bf16.msra.mxu0 %v3393
        %3469 = vmatprep.subr.bf16.mxu0 0
        %3470 = vmatpush1.bf16.msra.mxu0 %v3394
        %3471 = vmatprep.subr.bf16.mxu0 0
        %3472 = vmatpush1.bf16.msra.mxu0 %v3395
        %3473 = vmatprep.subr.bf16.mxu0 0
        %3474 = vmatpush1.bf16.msra.mxu0 %v3396
        %3475 = vmatprep.subr.bf16.mxu0 0
        %3476 = vmatpush1.bf16.msra.mxu0 %v3397
        %3477 = vmatprep.subr.bf16.mxu0 0
        %3478 = vmatpush1.bf16.msra.mxu0 %v3398
        %3479 = vmatprep.mubr.bf16.mxu0 %v3175
        %3480 = vmatmul.mubr.bf16.gmra.mrb[0].mxu0 %v3174
        %v3481 = vpop.f32.mrb[0].mxu0
        %v3482 = vadd.f32 0.0, %v3481
        %v3483 = vpop.f32.mrb[0].mxu0
        %v3484 = vpop.f32.mrb[0].mxu0
        %v3485 = vadd.f32 0.0, %v3484
        %v3486 = vpop.f32.mrb[0].mxu0
        %3487 = vmatprep.mubr.bf16.mxu0 %v3179
        %3488 = vmatmul.mubr.bf16.gmra.mrb[0].mxu0 %v3178
        %v3489 = vpop.f32.mrb[0].mxu0
        %v3490 = vadd.f32 0.0, %v3489
        %v3491 = vpop.f32.mrb[0].mxu0
        %v3492 = vpop.f32.mrb[0].mxu0
        %v3493 = vadd.f32 0.0, %v3492
        %v3494 = vpop.f32.mrb[0].mxu0
        %3495 = vmatprep.mubr.bf16.mxu0 %v3183
        %3496 = vmatmul.mubr.bf16.gmra.mrb[0].mxu0 %v3182
        %v3497 = vpop.f32.mrb[0].mxu0
        %v3498 = vadd.f32 0.0, %v3497
        %v3499 = vpop.f32.mrb[0].mxu0
        %v3500 = vpop.f32.mrb[0].mxu0
        %v3501 = vadd.f32 0.0, %v3500
        %v3502 = vpop.f32.mrb[0].mxu0
        %3503 = vmatprep.mubr.bf16.mxu0 %v3187
        %3504 = vmatmul.mubr.bf16.gmra.mrb[0].mxu0 %v3186
        %v3505 = vpop.f32.mrb[0].mxu0
        %v3506 = vadd.f32 0.0, %v3505
        %v3507 = vpop.f32.mrb[0].mxu0
        %v3508 = vpop.f32.mrb[0].mxu0
        %v3509 = vadd.f32 0.0, %v3508
        %v3510 = vpop.f32.mrb[0].mxu0
        %3511 = vdwg.mxu0
        %3512 = vmatprep.subr.bf16.mxu0 0
        %3513 = vmatpush1.bf16.msra.mxu0 %v3399
        %3514 = vmatprep.subr.bf16.mxu0 0
        %3515 = vmatpush1.bf16.msra.mxu0 %v3400
        %3516 = vmatprep.subr.bf16.mxu0 0
        %3517 = vmatpush1.bf16.msra.mxu0 %v3401
        %3518 = vmatprep.subr.bf16.mxu0 0
        %3519 = vmatpush1.bf16.msra.mxu0 %v3402
        %3520 = vmatprep.subr.bf16.mxu0 0
        %3521 = vmatpush1.bf16.msra.mxu0 %v3403
        %3522 = vmatprep.subr.bf16.mxu0 0
        %3523 = vmatpush1.bf16.msra.mxu0 %v3404
        %3524 = vmatprep.subr.bf16.mxu0 0
        %3525 = vmatpush1.bf16.msra.mxu0 %v3405
        %3526 = vmatprep.subr.bf16.mxu0 0
        %3527 = vmatpush1.bf16.msra.mxu0 %v3406
        %3528 = vmatprep.subr.bf16.mxu0 0
        %3529 = vmatpush1.bf16.msra.mxu0 %v3407
        %3530 = vmatprep.subr.bf16.mxu0 0
        %3531 = vmatpush1.bf16.msra.mxu0 %v3408
        %3532 = vmatprep.subr.bf16.mxu0 0
        %3533 = vmatpush1.bf16.msra.mxu0 %v3409
        %3534 = vmatprep.subr.bf16.mxu0 0
        %3535 = vmatpush1.bf16.msra.mxu0 %v3410
        %3536 = vmatprep.subr.bf16.mxu0 0
        %3537 = vmatpush1.bf16.msra.mxu0 %v3411
        %3538 = vmatprep.subr.bf16.mxu0 0
        %3539 = vmatpush1.bf16.msra.mxu0 %v3412
        %3540 = vmatprep.subr.bf16.mxu0 0
        %3541 = vmatpush1.bf16.msra.mxu0 %v3413
        %3542 = vmatprep.subr.bf16.mxu0 0
        %3543 = vmatpush1.bf16.msra.mxu0 %v3414
        %3544 = vmatprep.mubr.bf16.mxu0 %v3177
        %3545 = vmatmul.mubr.bf16.gmra.mrb[0].mxu0 %v3176
        %v3546 = vpop.f32.mrb[0].mxu0
        %v3547 = vadd.f32 %v3482, %v3546
        %v3548 = vpop.f32.mrb[0].mxu0
        %v3549 = vpop.f32.mrb[0].mxu0
        %v3550 = vadd.f32 %v3485, %v3549
        %v3551 = vpop.f32.mrb[0].mxu0
        %3552 = vmatprep.mubr.bf16.mxu0 %v3181
        %3553 = vmatmul.mubr.bf16.gmra.mrb[0].mxu0 %v3180
        %v3554 = vpop.f32.mrb[0].mxu0
        %v3555 = vadd.f32 %v3490, %v3554
        %v3556 = vpop.f32.mrb[0].mxu0
        %v3557 = vpop.f32.mrb[0].mxu0
        %v3558 = vadd.f32 %v3493, %v3557
        %v3559 = vpop.f32.mrb[0].mxu0
        %3560 = vmatprep.mubr.bf16.mxu0 %v3185
        %3561 = vmatmul.mubr.bf16.gmra.mrb[0].mxu0 %v3184
        %v3562 = vpop.f32.mrb[0].mxu0
        %v3563 = vadd.f32 %v3498, %v3562
        %v3564 = vpop.f32.mrb[0].mxu0
        %v3565 = vpop.f32.mrb[0].mxu0
        %v3566 = vadd.f32 %v3501, %v3565
        %v3567 = vpop.f32.mrb[0].mxu0
        %3568 = vmatprep.mubr.bf16.mxu0 %v3189
        %3569 = vmatmul.mubr.bf16.gmra.mrb[0].mxu0 %v3188
        %v3570 = vpop.f32.mrb[0].mxu0
        %v3571 = vadd.f32 %v3506, %v3570
        %v3572 = vpop.f32.mrb[0].mxu0
        %v3573 = vpop.f32.mrb[0].mxu0
        %v3574 = vadd.f32 %v3509, %v3573
        %v3575 = vpop.f32.mrb[0].mxu0
        %3576 = vdwg.mxu0
        %v3577 = vadd.f32 %v3162, %v3547
        %v3578 = vadd.f32 %v3163, %v3550
        %v3579 = vadd.f32 %v3164, %v3555
        %v3580 = vadd.f32 %v3165, %v3558
        %v3581 = vadd.f32 %v3166, %v3563
        %v3582 = vadd.f32 %v3167, %v3566
        %v3583 = vadd.f32 %v3168, %v3571
        %v3584 = vadd.f32 %v3169, %v3574
        %v3585 = vld [vmem:[#allocation2 + $0x40] sm:$0xfe]
        %v3586 = vld [vmem:[#allocation2 + $0x48] sm:$0xfe]
        %v3587 = vld [vmem:[#allocation2 + $0x50] sm:$0xfe]
        %v3588 = vld [vmem:[#allocation2 + $0x58] sm:$0xfe]
        %v3589 = vld [vmem:[#allocation2 + $0x60] sm:$0xff]
        %v3590 = vld [vmem:[#allocation2 + $0x68] sm:$0xff]
        %v3591 = vld [vmem:[#allocation2 + $0x70] sm:$0xff]
        %v3592 = vld [vmem:[#allocation2 + $0x78] sm:$0xff]
        %v3593 = vld [vmem:[#allocation2 + $0x80] sm:$0xff]
        %v3594 = vld [vmem:[#allocation2 + $0x88] sm:$0xff]
        %v3595 = vld [vmem:[#allocation2 + $0x90] sm:$0xff]
        %v3596 = vld [vmem:[#allocation2 + $0x98] sm:$0xff]
        %v3597 = vld [vmem:[#allocation2 + $0xa0] sm:$0xff]
        %v3598 = vld [vmem:[#allocation2 + $0xa8] sm:$0xff]
        %v3599 = vld [vmem:[#allocation2 + $0xb0] sm:$0xff]
        %v3600 = vld [vmem:[#allocation2 + $0xb8] sm:$0xff]
        %v3601 = vld [vmem:[#allocation2 + $0xc0] sm:$0xff]
        %v3602 = vld [vmem:[#allocation2 + $0xc8] sm:$0xff]
        %v3603 = vld [vmem:[#allocation2 + $0xd0] sm:$0xff]
        %v3604 = vld [vmem:[#allocation2 + $0xd8] sm:$0xff]
        %v3605 = vld [vmem:[#allocation2 + $0xe0] sm:$0xff]
        %v3606 = vld [vmem:[#allocation2 + $0xe8] sm:$0xff]
        %v3607 = vld [vmem:[#allocation2 + $0xf0] sm:$0xff]
        %v3608 = vld [vmem:[#allocation2 + $0xf8] sm:$0xff]
        %v3609 = vld [vmem:[#allocation2 + $0x100] sm:$0xff]
        %v3610 = vld [vmem:[#allocation2 + $0x108] sm:$0xff]
        %v3611 = vld [vmem:[#allocation2 + $0x110] sm:$0xff]
        %v3612 = vld [vmem:[#allocation2 + $0x118] sm:$0xff]
        %v3613 = vld [vmem:[#allocation2 + $0x120] sm:$0xff]
        %v3614 = vld [vmem:[#allocation2 + $0x128] sm:$0xff]
        %v3615 = vld [vmem:[#allocation2 + $0x130] sm:$0xff]
        %v3616 = vld [vmem:[#allocation2 + $0x138] sm:$0xff]
        %v3617 = vld [vmem:[#allocation2 + $0x140] sm:$0x1]
        %v3618 = vld [vmem:[#allocation2 + $0x148] sm:$0x1]
        %v3619 = vld [vmem:[#allocation2 + $0x150] sm:$0x1]
        %v3620 = vld [vmem:[#allocation2 + $0x158] sm:$0x1]
        %v3657 = vrot.slane %v3585, 1
        %v3658 = vrot.slane %v3589, 1
        %v3659 = vsel %vm2067, %v3657, %v3658
        %v3660 = vrot.slane %v3586, 1
        %v3661 = vrot.slane %v3590, 1
        %v3662 = vsel %vm2067, %v3660, %v3661
        %v3663 = vrot.slane %v3587, 1
        %v3664 = vrot.slane %v3591, 1
        %v3665 = vsel %vm2067, %v3663, %v3664
        %v3666 = vrot.slane %v3588, 1
        %v3667 = vrot.slane %v3592, 1
        %v3668 = vsel %vm2067, %v3666, %v3667
        %v3669 = vrot.slane %v3593, 1
        %v3670 = vsel %vm2067, %v3658, %v3669
        %v3671 = vrot.slane %v3594, 1
        %v3672 = vsel %vm2067, %v3661, %v3671
        %v3673 = vrot.slane %v3595, 1
        %v3674 = vsel %vm2067, %v3664, %v3673
        %v3675 = vrot.slane %v3596, 1
        %v3676 = vsel %vm2067, %v3667, %v3675
        %v3677 = vrot.slane %v3597, 1
        %v3678 = vsel %vm2067, %v3669, %v3677
        %v3679 = vrot.slane %v3598, 1
        %v3680 = vsel %vm2067, %v3671, %v3679
        %v3681 = vrot.slane %v3599, 1
        %v3682 = vsel %vm2067, %v3673, %v3681
        %v3683 = vrot.slane %v3600, 1
        %v3684 = vsel %vm2067, %v3675, %v3683
        %v3685 = vrot.slane %v3601, 1
        %v3686 = vsel %vm2067, %v3677, %v3685
        %v3687 = vrot.slane %v3602, 1
        %v3688 = vsel %vm2067, %v3679, %v3687
        %v3689 = vrot.slane %v3603, 1
        %v3690 = vsel %vm2067, %v3681, %v3689
        %v3691 = vrot.slane %v3604, 1
        %v3692 = vsel %vm2067, %v3683, %v3691
        %v3693 = vrot.slane %v3605, 1
        %v3694 = vsel %vm2067, %v3685, %v3693
        %v3695 = vrot.slane %v3606, 1
        %v3696 = vsel %vm2067, %v3687, %v3695
        %v3697 = vrot.slane %v3607, 1
        %v3698 = vsel %vm2067, %v3689, %v3697
        %v3699 = vrot.slane %v3608, 1
        %v3700 = vsel %vm2067, %v3691, %v3699
        %v3701 = vrot.slane %v3609, 1
        %v3702 = vsel %vm2067, %v3693, %v3701
        %v3703 = vrot.slane %v3610, 1
        %v3704 = vsel %vm2067, %v3695, %v3703
        %v3705 = vrot.slane %v3611, 1
        %v3706 = vsel %vm2067, %v3697, %v3705
        %v3707 = vrot.slane %v3612, 1
        %v3708 = vsel %vm2067, %v3699, %v3707
        %v3709 = vrot.slane %v3613, 1
        %v3710 = vsel %vm2067, %v3701, %v3709
        %v3711 = vrot.slane %v3614, 1
        %v3712 = vsel %vm2067, %v3703, %v3711
        %v3713 = vrot.slane %v3615, 1
        %v3714 = vsel %vm2067, %v3705, %v3713
        %v3715 = vrot.slane %v3616, 1
        %v3716 = vsel %vm2067, %v3707, %v3715
        %v3717 = vrot.slane %v3617, 1
        %v3718 = vsel %vm2067, %v3709, %v3717
        %v3719 = vrot.slane %v3618, 1
        %v3720 = vsel %vm2067, %v3711, %v3719
        %v3721 = vrot.slane %v3619, 1
        %v3722 = vsel %vm2067, %v3713, %v3721
        %v3723 = vrot.slane %v3620, 1
        %v3724 = vsel %vm2067, %v3715, %v3723
        %v3757 = vsel %vm2023, %v3659, 0.0
        %v3758 = vsel %vm2023, %v3662, 0.0
        %v3759 = vsel %vm2023, %v3665, 0.0
        %v3760 = vsel %vm2023, %v3668, 0.0
        %v3761 = vsel %vm2024, %v3670, 0.0
        %v3762 = vsel %vm2024, %v3672, 0.0
        %v3763 = vsel %vm2024, %v3674, 0.0
        %v3764 = vsel %vm2024, %v3676, 0.0
        %v3765 = vsel %vm2025, %v3678, 0.0
        %v3766 = vsel %vm2025, %v3680, 0.0
        %v3767 = vsel %vm2025, %v3682, 0.0
        %v3768 = vsel %vm2025, %v3684, 0.0
        %v3769 = vsel %vm2026, %v3686, 0.0
        %v3770 = vsel %vm2026, %v3688, 0.0
        %v3771 = vsel %vm2026, %v3690, 0.0
        %v3772 = vsel %vm2026, %v3692, 0.0
        %v3773 = vsel %vm2027, %v3694, 0.0
        %v3774 = vsel %vm2027, %v3696, 0.0
        %v3775 = vsel %vm2027, %v3698, 0.0
        %v3776 = vsel %vm2027, %v3700, 0.0
        %v3777 = vsel %vm2028, %v3702, 0.0
        %v3778 = vsel %vm2028, %v3704, 0.0
        %v3779 = vsel %vm2028, %v3706, 0.0
        %v3780 = vsel %vm2028, %v3708, 0.0
        %v3781 = vsel %vm2029, %v3710, 0.0
        %v3782 = vsel %vm2029, %v3712, 0.0
        %v3783 = vsel %vm2029, %v3714, 0.0
        %v3784 = vsel %vm2029, %v3716, 0.0
        %v3785 = vsel %vm2030, %v3718, 0.0
        %v3786 = vsel %vm2030, %v3720, 0.0
        %v3787 = vsel %vm2030, %v3722, 0.0
        %v3788 = vsel %vm2030, %v3724, 0.0
        %v3789 = vpack.c.bf16 %v3761, %v3757
        %v3790 = vpack.c.bf16 %v3762, %v3758
        %v3791 = vpack.c.bf16 %v3763, %v3759
        %v3792 = vpack.c.bf16 %v3764, %v3760
        %v3793 = vpack.c.bf16 %v3769, %v3765
        %v3794 = vpack.c.bf16 %v3770, %v3766
        %v3795 = vpack.c.bf16 %v3771, %v3767
        %v3796 = vpack.c.bf16 %v3772, %v3768
        %v3797 = vpack.c.bf16 %v3777, %v3773
        %v3798 = vpack.c.bf16 %v3778, %v3774
        %v3799 = vpack.c.bf16 %v3779, %v3775
        %v3800 = vpack.c.bf16 %v3780, %v3776
        %v3801 = vpack.c.bf16 %v3785, %v3781
        %v3802 = vpack.c.bf16 %v3786, %v3782
        %v3803 = vpack.c.bf16 %v3787, %v3783
        %v3804 = vpack.c.bf16 %v3788, %v3784
        %s3805 = scalar_lea.vmem [#allocation12], 1280
        %v3806 = vld [vmem:[%s3805] sm:$0xf]
        %v3807 = vld [vmem:[%s3805 + $0x4] sm:$0xf]
        %v3808 = vld [vmem:[%s3805 + $0x8] sm:$0xf]
        %v3809 = vld [vmem:[%s3805 + $0xc] sm:$0xf]
        %v3810 = vld [vmem:[%s3805 + $0x10] sm:$0xf]
        %v3811 = vld [vmem:[%s3805 + $0x14] sm:$0xf]
        %v3812 = vld [vmem:[%s3805 + $0x18] sm:$0xf]
        %v3813 = vld [vmem:[%s3805 + $0x1c] sm:$0xf]
        %v3814 = vld [vmem:[%s3805 + $0x20] sm:$0xf]
        %v3815 = vld [vmem:[%s3805 + $0x24] sm:$0xf]
        %v3816 = vld [vmem:[%s3805 + $0x28] sm:$0xf]
        %v3817 = vld [vmem:[%s3805 + $0x2c] sm:$0xf]
        %v3818 = vld [vmem:[%s3805 + $0x30] sm:$0xf]
        %v3819 = vld [vmem:[%s3805 + $0x34] sm:$0xf]
        %v3820 = vld [vmem:[%s3805 + $0x38] sm:$0xf]
        %v3821 = vld [vmem:[%s3805 + $0x3c] sm:$0xf]
        %v3822 = vld [vmem:[%s3805 + $0x40] sm:$0xf]
        %v3823 = vld [vmem:[%s3805 + $0x44] sm:$0xf]
        %v3824 = vld [vmem:[%s3805 + $0x48] sm:$0xf]
        %v3825 = vld [vmem:[%s3805 + $0x4c] sm:$0xf]
        %v3826 = vld [vmem:[%s3805 + $0x50] sm:$0xf]
        %v3827 = vld [vmem:[%s3805 + $0x54] sm:$0xf]
        %v3828 = vld [vmem:[%s3805 + $0x58] sm:$0xf]
        %v3829 = vld [vmem:[%s3805 + $0x5c] sm:$0xf]
        %v3830 = vld [vmem:[%s3805 + $0x60] sm:$0xf]
        %v3831 = vld [vmem:[%s3805 + $0x64] sm:$0xf]
        %v3832 = vld [vmem:[%s3805 + $0x68] sm:$0xf]
        %v3833 = vld [vmem:[%s3805 + $0x6c] sm:$0xf]
        %v3834 = vld [vmem:[%s3805 + $0x70] sm:$0xf]
        %v3835 = vld [vmem:[%s3805 + $0x74] sm:$0xf]
        %v3836 = vld [vmem:[%s3805 + $0x78] sm:$0xf]
        %v3837 = vld [vmem:[%s3805 + $0x7c] sm:$0xf]
        %v3838 = vld [vmem:[%s3805 + $0x80] sm:$0xf]
        %v3839 = vld [vmem:[%s3805 + $0x84] sm:$0xf]
        %v3840 = vld [vmem:[%s3805 + $0x88] sm:$0xf]
        %v3841 = vld [vmem:[%s3805 + $0x8c] sm:$0xf]
        %v3842 = vld [vmem:[%s3805 + $0x90] sm:$0xf]
        %v3843 = vld [vmem:[%s3805 + $0x94] sm:$0xf]
        %v3844 = vld [vmem:[%s3805 + $0x98] sm:$0xf]
        %v3845 = vld [vmem:[%s3805 + $0x9c] sm:$0xf]
        %v3846 = vld [vmem:[%s3805 + $0xa0] sm:$0xf]
        %v3847 = vld [vmem:[%s3805 + $0xa4] sm:$0xf]
        %v3848 = vld [vmem:[%s3805 + $0xa8] sm:$0xf]
        %v3849 = vld [vmem:[%s3805 + $0xac] sm:$0xf]
        %v3850 = vld [vmem:[%s3805 + $0xb0] sm:$0xf]
        %v3851 = vld [vmem:[%s3805 + $0xb4] sm:$0xf]
        %v3852 = vld [vmem:[%s3805 + $0xb8] sm:$0xf]
        %v3853 = vld [vmem:[%s3805 + $0xbc] sm:$0xf]
        %v3854 = vld [vmem:[%s3805 + $0xc0] sm:$0xf]
        %v3855 = vld [vmem:[%s3805 + $0xc4] sm:$0xf]
        %v3856 = vld [vmem:[%s3805 + $0xc8] sm:$0xf]
        %v3857 = vld [vmem:[%s3805 + $0xcc] sm:$0xf]
        %v3858 = vld [vmem:[%s3805 + $0xd0] sm:$0xf]
        %v3859 = vld [vmem:[%s3805 + $0xd4] sm:$0xf]
        %v3860 = vld [vmem:[%s3805 + $0xd8] sm:$0xf]
        %v3861 = vld [vmem:[%s3805 + $0xdc] sm:$0xf]
        %v3862 = vld [vmem:[%s3805 + $0xe0] sm:$0xf]
        %v3863 = vld [vmem:[%s3805 + $0xe4] sm:$0xf]
        %v3864 = vld [vmem:[%s3805 + $0xe8] sm:$0xf]
        %v3865 = vld [vmem:[%s3805 + $0xec] sm:$0xf]
        %v3866 = vld [vmem:[%s3805 + $0xf0] sm:$0xf]
        %v3867 = vld [vmem:[%s3805 + $0xf4] sm:$0xf]
        %v3868 = vld [vmem:[%s3805 + $0xf8] sm:$0xf]
        %v3869 = vld [vmem:[%s3805 + $0xfc] sm:$0xf]
        %v3934 = vunpack.c.l.b16 %v3806
        %v3935 = vunpack.c.l.b16 %v3807
        %v3936 = vunpack.c.l.b16 %v3808
        %v3937 = vunpack.c.l.b16 %v3809
        %v3938 = vunpack.c.l.b16 %v3810
        %v3939 = vunpack.c.l.b16 %v3811
        %v3940 = vunpack.c.l.b16 %v3812
        %v3941 = vunpack.c.l.b16 %v3813
        %v3942 = vunpack.c.l.b16 %v3814
        %v3943 = vunpack.c.l.b16 %v3815
        %v3944 = vunpack.c.l.b16 %v3816
        %v3945 = vunpack.c.l.b16 %v3817
        %v3946 = vunpack.c.l.b16 %v3818
        %v3947 = vunpack.c.l.b16 %v3819
        %v3948 = vunpack.c.l.b16 %v3820
        %v3949 = vunpack.c.l.b16 %v3821
        %v3950 = vunpack.c.l.b16 %v3822
        %v3951 = vunpack.c.l.b16 %v3823
        %v3952 = vunpack.c.l.b16 %v3824
        %v3953 = vunpack.c.l.b16 %v3825
        %v3954 = vunpack.c.l.b16 %v3826
        %v3955 = vunpack.c.l.b16 %v3827
        %v3956 = vunpack.c.l.b16 %v3828
        %v3957 = vunpack.c.l.b16 %v3829
        %v3958 = vunpack.c.l.b16 %v3830
        %v3959 = vunpack.c.l.b16 %v3831
        %v3960 = vunpack.c.l.b16 %v3832
        %v3961 = vunpack.c.l.b16 %v3833
        %v3962 = vunpack.c.l.b16 %v3834
        %v3963 = vunpack.c.l.b16 %v3835
        %v3964 = vunpack.c.l.b16 %v3836
        %v3965 = vunpack.c.l.b16 %v3837
        %v3966 = vunpack.c.l.b16 %v3838
        %v3967 = vunpack.c.l.b16 %v3839
        %v3968 = vunpack.c.l.b16 %v3840
        %v3969 = vunpack.c.l.b16 %v3841
        %v3970 = vunpack.c.l.b16 %v3842
        %v3971 = vunpack.c.l.b16 %v3843
        %v3972 = vunpack.c.l.b16 %v3844
        %v3973 = vunpack.c.l.b16 %v3845
        %v3974 = vunpack.c.l.b16 %v3846
        %v3975 = vunpack.c.l.b16 %v3847
        %v3976 = vunpack.c.l.b16 %v3848
        %v3977 = vunpack.c.l.b16 %v3849
        %v3978 = vunpack.c.l.b16 %v3850
        %v3979 = vunpack.c.l.b16 %v3851
        %v3980 = vunpack.c.l.b16 %v3852
        %v3981 = vunpack.c.l.b16 %v3853
        %v3982 = vunpack.c.l.b16 %v3854
        %v3983 = vunpack.c.l.b16 %v3855
        %v3984 = vunpack.c.l.b16 %v3856
        %v3985 = vunpack.c.l.b16 %v3857
        %v3986 = vunpack.c.l.b16 %v3858
        %v3987 = vunpack.c.l.b16 %v3859
        %v3988 = vunpack.c.l.b16 %v3860
        %v3989 = vunpack.c.l.b16 %v3861
        %v3990 = vunpack.c.l.b16 %v3862
        %v3991 = vunpack.c.l.b16 %v3863
        %v3992 = vunpack.c.l.b16 %v3864
        %v3993 = vunpack.c.l.b16 %v3865
        %v3994 = vunpack.c.l.b16 %v3866
        %v3995 = vunpack.c.l.b16 %v3867
        %v3996 = vunpack.c.l.b16 %v3868
        %v3997 = vunpack.c.l.b16 %v3869
        %v3998 = vpack.c.b16 %v3935, %v3934
        %v3999 = vpack.c.b16 %v3937, %v3936
        %v4000 = vpack.c.b16 %v3939, %v3938
        %v4001 = vpack.c.b16 %v3941, %v3940
        %v4002 = vpack.c.b16 %v3943, %v3942
        %v4003 = vpack.c.b16 %v3945, %v3944
        %v4004 = vpack.c.b16 %v3947, %v3946
        %v4005 = vpack.c.b16 %v3949, %v3948
        %v4006 = vpack.c.b16 %v3951, %v3950
        %v4007 = vpack.c.b16 %v3953, %v3952
        %v4008 = vpack.c.b16 %v3955, %v3954
        %v4009 = vpack.c.b16 %v3957, %v3956
        %v4010 = vpack.c.b16 %v3959, %v3958
        %v4011 = vpack.c.b16 %v3961, %v3960
        %v4012 = vpack.c.b16 %v3963, %v3962
        %v4013 = vpack.c.b16 %v3965, %v3964
        %v4014 = vpack.c.b16 %v3967, %v3966
        %v4015 = vpack.c.b16 %v3969, %v3968
        %v4016 = vpack.c.b16 %v3971, %v3970
        %v4017 = vpack.c.b16 %v3973, %v3972
        %v4018 = vpack.c.b16 %v3975, %v3974
        %v4019 = vpack.c.b16 %v3977, %v3976
        %v4020 = vpack.c.b16 %v3979, %v3978
        %v4021 = vpack.c.b16 %v3981, %v3980
        %v4022 = vpack.c.b16 %v3983, %v3982
        %v4023 = vpack.c.b16 %v3985, %v3984
        %v4024 = vpack.c.b16 %v3987, %v3986
        %v4025 = vpack.c.b16 %v3989, %v3988
        %v4026 = vpack.c.b16 %v3991, %v3990
        %v4027 = vpack.c.b16 %v3993, %v3992
        %v4028 = vpack.c.b16 %v3995, %v3994
        %v4029 = vpack.c.b16 %v3997, %v3996
        %4062 = vmatprep.subr.bf16.mxu0 0
        %4063 = vmatpush1.bf16.msra.mxu0 %v3998
        %4064 = vmatprep.subr.bf16.mxu0 0
        %4065 = vmatpush1.bf16.msra.mxu0 %v3999
        %4066 = vmatprep.subr.bf16.mxu0 0
        %4067 = vmatpush1.bf16.msra.mxu0 %v4000
        %4068 = vmatprep.subr.bf16.mxu0 0
        %4069 = vmatpush1.bf16.msra.mxu0 %v4001
        %4070 = vmatprep.subr.bf16.mxu0 0
        %4071 = vmatpush1.bf16.msra.mxu0 %v4002
        %4072 = vmatprep.subr.bf16.mxu0 0
        %4073 = vmatpush1.bf16.msra.mxu0 %v4003
        %4074 = vmatprep.subr.bf16.mxu0 0
        %4075 = vmatpush1.bf16.msra.mxu0 %v4004
        %4076 = vmatprep.subr.bf16.mxu0 0
        %4077 = vmatpush1.bf16.msra.mxu0 %v4005
        %4078 = vmatprep.subr.bf16.mxu0 0
        %4079 = vmatpush1.bf16.msra.mxu0 %v4006
        %4080 = vmatprep.subr.bf16.mxu0 0
        %4081 = vmatpush1.bf16.msra.mxu0 %v4007
        %4082 = vmatprep.subr.bf16.mxu0 0
        %4083 = vmatpush1.bf16.msra.mxu0 %v4008
        %4084 = vmatprep.subr.bf16.mxu0 0
        %4085 = vmatpush1.bf16.msra.mxu0 %v4009
        %4086 = vmatprep.subr.bf16.mxu0 0
        %4087 = vmatpush1.bf16.msra.mxu0 %v4010
        %4088 = vmatprep.subr.bf16.mxu0 0
        %4089 = vmatpush1.bf16.msra.mxu0 %v4011
        %4090 = vmatprep.subr.bf16.mxu0 0
        %4091 = vmatpush1.bf16.msra.mxu0 %v4012
        %4092 = vmatprep.subr.bf16.mxu0 0
        %4093 = vmatpush1.bf16.msra.mxu0 %v4013
        %4094 = vmatprep.mubr.bf16.mxu0 %v3790
        %4095 = vmatmul.mubr.bf16.gmra.mrb[0].mxu0 %v3789
        %v4096 = vpop.f32.mrb[0].mxu0
        %v4097 = vadd.f32 0.0, %v4096
        %v4098 = vpop.f32.mrb[0].mxu0
        %v4099 = vpop.f32.mrb[0].mxu0
        %v4100 = vadd.f32 0.0, %v4099
        %v4101 = vpop.f32.mrb[0].mxu0
        %4102 = vmatprep.mubr.bf16.mxu0 %v3794
        %4103 = vmatmul.mubr.bf16.gmra.mrb[0].mxu0 %v3793
        %v4104 = vpop.f32.mrb[0].mxu0
        %v4105 = vadd.f32 0.0, %v4104
        %v4106 = vpop.f32.mrb[0].mxu0
        %v4107 = vpop.f32.mrb[0].mxu0
        %v4108 = vadd.f32 0.0, %v4107
        %v4109 = vpop.f32.mrb[0].mxu0
        %4110 = vmatprep.mubr.bf16.mxu0 %v3798
        %4111 = vmatmul.mubr.bf16.gmra.mrb[0].mxu0 %v3797
        %v4112 = vpop.f32.mrb[0].mxu0
        %v4113 = vadd.f32 0.0, %v4112
        %v4114 = vpop.f32.mrb[0].mxu0
        %v4115 = vpop.f32.mrb[0].mxu0
        %v4116 = vadd.f32 0.0, %v4115
        %v4117 = vpop.f32.mrb[0].mxu0
        %4118 = vmatprep.mubr.bf16.mxu0 %v3802
        %4119 = vmatmul.mubr.bf16.gmra.mrb[0].mxu0 %v3801
        %v4120 = vpop.f32.mrb[0].mxu0
        %v4121 = vadd.f32 0.0, %v4120
        %v4122 = vpop.f32.mrb[0].mxu0
        %v4123 = vpop.f32.mrb[0].mxu0
        %v4124 = vadd.f32 0.0, %v4123
        %v4125 = vpop.f32.mrb[0].mxu0
        %4126 = vdwg.mxu0
        %4127 = vmatprep.subr.bf16.mxu0 0
        %4128 = vmatpush1.bf16.msra.mxu0 %v4014
        %4129 = vmatprep.subr.bf16.mxu0 0
        %4130 = vmatpush1.bf16.msra.mxu0 %v4015
        %4131 = vmatprep.subr.bf16.mxu0 0
        %4132 = vmatpush1.bf16.msra.mxu0 %v4016
        %4133 = vmatprep.subr.bf16.mxu0 0
        %4134 = vmatpush1.bf16.msra.mxu0 %v4017
        %4135 = vmatprep.subr.bf16.mxu0 0
        %4136 = vmatpush1.bf16.msra.mxu0 %v4018
        %4137 = vmatprep.subr.bf16.mxu0 0
        %4138 = vmatpush1.bf16.msra.mxu0 %v4019
        %4139 = vmatprep.subr.bf16.mxu0 0
        %4140 = vmatpush1.bf16.msra.mxu0 %v4020
        %4141 = vmatprep.subr.bf16.mxu0 0
        %4142 = vmatpush1.bf16.msra.mxu0 %v4021
        %4143 = vmatprep.subr.bf16.mxu0 0
        %4144 = vmatpush1.bf16.msra.mxu0 %v4022
        %4145 = vmatprep.subr.bf16.mxu0 0
        %4146 = vmatpush1.bf16.msra.mxu0 %v4023
        %4147 = vmatprep.subr.bf16.mxu0 0
        %4148 = vmatpush1.bf16.msra.mxu0 %v4024
        %4149 = vmatprep.subr.bf16.mxu0 0
        %4150 = vmatpush1.bf16.msra.mxu0 %v4025
        %4151 = vmatprep.subr.bf16.mxu0 0
        %4152 = vmatpush1.bf16.msra.mxu0 %v4026
        %4153 = vmatprep.subr.bf16.mxu0 0
        %4154 = vmatpush1.bf16.msra.mxu0 %v4027
        %4155 = vmatprep.subr.bf16.mxu0 0
        %4156 = vmatpush1.bf16.msra.mxu0 %v4028
        %4157 = vmatprep.subr.bf16.mxu0 0
        %4158 = vmatpush1.bf16.msra.mxu0 %v4029
        %4159 = vmatprep.mubr.bf16.mxu0 %v3792
        %4160 = vmatmul.mubr.bf16.gmra.mrb[0].mxu0 %v3791
        %v4161 = vpop.f32.mrb[0].mxu0
        %v4162 = vadd.f32 %v4097, %v4161
        %v4163 = vpop.f32.mrb[0].mxu0
        %v4164 = vpop.f32.mrb[0].mxu0
        %v4165 = vadd.f32 %v4100, %v4164
        %v4166 = vpop.f32.mrb[0].mxu0
        %4167 = vmatprep.mubr.bf16.mxu0 %v3796
        %4168 = vmatmul.mubr.bf16.gmra.mrb[0].mxu0 %v3795
        %v4169 = vpop.f32.mrb[0].mxu0
        %v4170 = vadd.f32 %v4105, %v4169
        %v4171 = vpop.f32.mrb[0].mxu0
        %v4172 = vpop.f32.mrb[0].mxu0
        %v4173 = vadd.f32 %v4108, %v4172
        %v4174 = vpop.f32.mrb[0].mxu0
        %4175 = vmatprep.mubr.bf16.mxu0 %v3800
        %4176 = vmatmul.mubr.bf16.gmra.mrb[0].mxu0 %v3799
        %v4177 = vpop.f32.mrb[0].mxu0
        %v4178 = vadd.f32 %v4113, %v4177
        %v4179 = vpop.f32.mrb[0].mxu0
        %v4180 = vpop.f32.mrb[0].mxu0
        %v4181 = vadd.f32 %v4116, %v4180
        %v4182 = vpop.f32.mrb[0].mxu0
        %4183 = vmatprep.mubr.bf16.mxu0 %v3804
        %4184 = vmatmul.mubr.bf16.gmra.mrb[0].mxu0 %v3803
        %v4185 = vpop.f32.mrb[0].mxu0
        %v4186 = vadd.f32 %v4121, %v4185
        %v4187 = vpop.f32.mrb[0].mxu0
        %v4188 = vpop.f32.mrb[0].mxu0
        %v4189 = vadd.f32 %v4124, %v4188
        %v4190 = vpop.f32.mrb[0].mxu0
        %4191 = vdwg.mxu0
        %v4192 = vadd.f32 %v3577, %v4162
        %v4193 = vadd.f32 %v3578, %v4165
        %v4194 = vadd.f32 %v3579, %v4170
        %v4195 = vadd.f32 %v3580, %v4173
        %v4196 = vadd.f32 %v3581, %v4178
        %v4197 = vadd.f32 %v3582, %v4181
        %v4198 = vadd.f32 %v3583, %v4186
        %v4199 = vadd.f32 %v3584, %v4189
        %v4200 = vld [vmem:[#allocation2 + $0x40] sm:$0x80]
        %v4201 = vld [vmem:[#allocation2 + $0x48] sm:$0x80]
        %v4202 = vld [vmem:[#allocation2 + $0x50] sm:$0x80]
        %v4203 = vld [vmem:[#allocation2 + $0x58] sm:$0x80]
        %v4204 = vld [vmem:[#allocation2 + $0x140] sm:$0x7f]
        %v4205 = vld [vmem:[#allocation2 + $0x148] sm:$0x7f]
        %v4206 = vld [vmem:[#allocation2 + $0x150] sm:$0x7f]
        %v4207 = vld [vmem:[#allocation2 + $0x158] sm:$0x7f]
        %v4216 = vrot.slane %v4200, 7
        %v4217 = vrot.slane %v3589, 7
        %v4218 = vsel %vm1029, %v4216, %v4217
        %v4219 = vrot.slane %v4201, 7
        %v4220 = vrot.slane %v3590, 7
        %v4221 = vsel %vm1029, %v4219, %v4220
        %v4222 = vrot.slane %v4202, 7
        %v4223 = vrot.slane %v3591, 7
        %v4224 = vsel %vm1029, %v4222, %v4223
        %v4225 = vrot.slane %v4203, 7
        %v4226 = vrot.slane %v3592, 7
        %v4227 = vsel %vm1029, %v4225, %v4226
        %v4228 = vrot.slane %v3593, 7
        %v4229 = vsel %vm1029, %v4217, %v4228
        %v4230 = vrot.slane %v3594, 7
        %v4231 = vsel %vm1029, %v4220, %v4230
        %v4232 = vrot.slane %v3595, 7
        %v4233 = vsel %vm1029, %v4223, %v4232
        %v4234 = vrot.slane %v3596, 7
        %v4235 = vsel %vm1029, %v4226, %v4234
        %v4236 = vrot.slane %v3597, 7
        %v4237 = vsel %vm1029, %v4228, %v4236
        %v4238 = vrot.slane %v3598, 7
        %v4239 = vsel %vm1029, %v4230, %v4238
        %v4240 = vrot.slane %v3599, 7
        %v4241 = vsel %vm1029, %v4232, %v4240
        %v4242 = vrot.slane %v3600, 7
        %v4243 = vsel %vm1029, %v4234, %v4242
        %v4244 = vrot.slane %v3601, 7
        %v4245 = vsel %vm1029, %v4236, %v4244
        %v4246 = vrot.slane %v3602, 7
        %v4247 = vsel %vm1029, %v4238, %v4246
        %v4248 = vrot.slane %v3603, 7
        %v4249 = vsel %vm1029, %v4240, %v4248
        %v4250 = vrot.slane %v3604, 7
        %v4251 = vsel %vm1029, %v4242, %v4250
        %v4252 = vrot.slane %v3605, 7
        %v4253 = vsel %vm1029, %v4244, %v4252
        %v4254 = vrot.slane %v3606, 7
        %v4255 = vsel %vm1029, %v4246, %v4254
        %v4256 = vrot.slane %v3607, 7
        %v4257 = vsel %vm1029, %v4248, %v4256
        %v4258 = vrot.slane %v3608, 7
        %v4259 = vsel %vm1029, %v4250, %v4258
        %v4260 = vrot.slane %v3609, 7
        %v4261 = vsel %vm1029, %v4252, %v4260
        %v4262 = vrot.slane %v3610, 7
        %v4263 = vsel %vm1029, %v4254, %v4262
        %v4264 = vrot.slane %v3611, 7
        %v4265 = vsel %vm1029, %v4256, %v4264
        %v4266 = vrot.slane %v3612, 7
        %v4267 = vsel %vm1029, %v4258, %v4266
        %v4268 = vrot.slane %v3613, 7
        %v4269 = vsel %vm1029, %v4260, %v4268
        %v4270 = vrot.slane %v3614, 7
        %v4271 = vsel %vm1029, %v4262, %v4270
        %v4272 = vrot.slane %v3615, 7
        %v4273 = vsel %vm1029, %v4264, %v4272
        %v4274 = vrot.slane %v3616, 7
        %v4275 = vsel %vm1029, %v4266, %v4274
        %v4276 = vrot.slane %v4204, 7
        %v4277 = vsel %vm1029, %v4268, %v4276
        %v4278 = vrot.slane %v4205, 7
        %v4279 = vsel %vm1029, %v4270, %v4278
        %v4280 = vrot.slane %v4206, 7
        %v4281 = vsel %vm1029, %v4272, %v4280
        %v4282 = vrot.slane %v4207, 7
        %v4283 = vsel %vm1029, %v4274, %v4282
        %v4316 = vsel %vm985, %v4218, 0.0
        %v4317 = vsel %vm985, %v4221, 0.0
        %v4318 = vsel %vm985, %v4224, 0.0
        %v4319 = vsel %vm985, %v4227, 0.0
        %v4320 = vsel %vm986, %v4229, 0.0
        %v4321 = vsel %vm986, %v4231, 0.0
        %v4322 = vsel %vm986, %v4233, 0.0
        %v4323 = vsel %vm986, %v4235, 0.0
        %v4324 = vsel %vm987, %v4237, 0.0
        %v4325 = vsel %vm987, %v4239, 0.0
        %v4326 = vsel %vm987, %v4241, 0.0
        %v4327 = vsel %vm987, %v4243, 0.0
        %v4328 = vsel %vm988, %v4245, 0.0
        %v4329 = vsel %vm988, %v4247, 0.0
        %v4330 = vsel %vm988, %v4249, 0.0
        %v4331 = vsel %vm988, %v4251, 0.0
        %v4332 = vsel %vm989, %v4253, 0.0
        %v4333 = vsel %vm989, %v4255, 0.0
        %v4334 = vsel %vm989, %v4257, 0.0
        %v4335 = vsel %vm989, %v4259, 0.0
        %v4336 = vsel %vm990, %v4261, 0.0
        %v4337 = vsel %vm990, %v4263, 0.0
        %v4338 = vsel %vm990, %v4265, 0.0
        %v4339 = vsel %vm990, %v4267, 0.0
        %v4340 = vsel %vm991, %v4269, 0.0
        %v4341 = vsel %vm991, %v4271, 0.0
        %v4342 = vsel %vm991, %v4273, 0.0
        %v4343 = vsel %vm991, %v4275, 0.0
        %v4344 = vsel %vm992, %v4277, 0.0
        %v4345 = vsel %vm992, %v4279, 0.0
        %v4346 = vsel %vm992, %v4281, 0.0
        %v4347 = vsel %vm992, %v4283, 0.0
        %v4348 = vpack.c.bf16 %v4320, %v4316
        %v4349 = vpack.c.bf16 %v4321, %v4317
        %v4350 = vpack.c.bf16 %v4322, %v4318
        %v4351 = vpack.c.bf16 %v4323, %v4319
        %v4352 = vpack.c.bf16 %v4328, %v4324
        %v4353 = vpack.c.bf16 %v4329, %v4325
        %v4354 = vpack.c.bf16 %v4330, %v4326
        %v4355 = vpack.c.bf16 %v4331, %v4327
        %v4356 = vpack.c.bf16 %v4336, %v4332
        %v4357 = vpack.c.bf16 %v4337, %v4333
        %v4358 = vpack.c.bf16 %v4338, %v4334
        %v4359 = vpack.c.bf16 %v4339, %v4335
        %v4360 = vpack.c.bf16 %v4344, %v4340
        %v4361 = vpack.c.bf16 %v4345, %v4341
        %v4362 = vpack.c.bf16 %v4346, %v4342
        %v4363 = vpack.c.bf16 %v4347, %v4343
        %s4364 = scalar_lea.vmem [#allocation12], 1536
        %v4365 = vld [vmem:[%s4364] sm:$0xf]
        %v4366 = vld [vmem:[%s4364 + $0x4] sm:$0xf]
        %v4367 = vld [vmem:[%s4364 + $0x8] sm:$0xf]
        %v4368 = vld [vmem:[%s4364 + $0xc] sm:$0xf]
        %v4369 = vld [vmem:[%s4364 + $0x10] sm:$0xf]
        %v4370 = vld [vmem:[%s4364 + $0x14] sm:$0xf]
        %v4371 = vld [vmem:[%s4364 + $0x18] sm:$0xf]
        %v4372 = vld [vmem:[%s4364 + $0x1c] sm:$0xf]
        %v4373 = vld [vmem:[%s4364 + $0x20] sm:$0xf]
        %v4374 = vld [vmem:[%s4364 + $0x24] sm:$0xf]
        %v4375 = vld [vmem:[%s4364 + $0x28] sm:$0xf]
        %v4376 = vld [vmem:[%s4364 + $0x2c] sm:$0xf]
        %v4377 = vld [vmem:[%s4364 + $0x30] sm:$0xf]
        %v4378 = vld [vmem:[%s4364 + $0x34] sm:$0xf]
        %v4379 = vld [vmem:[%s4364 + $0x38] sm:$0xf]
        %v4380 = vld [vmem:[%s4364 + $0x3c] sm:$0xf]
        %v4381 = vld [vmem:[%s4364 + $0x40] sm:$0xf]
        %v4382 = vld [vmem:[%s4364 + $0x44] sm:$0xf]
        %v4383 = vld [vmem:[%s4364 + $0x48] sm:$0xf]
        %v4384 = vld [vmem:[%s4364 + $0x4c] sm:$0xf]
        %v4385 = vld [vmem:[%s4364 + $0x50] sm:$0xf]
        %v4386 = vld [vmem:[%s4364 + $0x54] sm:$0xf]
        %v4387 = vld [vmem:[%s4364 + $0x58] sm:$0xf]
        %v4388 = vld [vmem:[%s4364 + $0x5c] sm:$0xf]
        %v4389 = vld [vmem:[%s4364 + $0x60] sm:$0xf]
        %v4390 = vld [vmem:[%s4364 + $0x64] sm:$0xf]
        %v4391 = vld [vmem:[%s4364 + $0x68] sm:$0xf]
        %v4392 = vld [vmem:[%s4364 + $0x6c] sm:$0xf]
        %v4393 = vld [vmem:[%s4364 + $0x70] sm:$0xf]
        %v4394 = vld [vmem:[%s4364 + $0x74] sm:$0xf]
        %v4395 = vld [vmem:[%s4364 + $0x78] sm:$0xf]
        %v4396 = vld [vmem:[%s4364 + $0x7c] sm:$0xf]
        %v4397 = vld [vmem:[%s4364 + $0x80] sm:$0xf]
        %v4398 = vld [vmem:[%s4364 + $0x84] sm:$0xf]
        %v4399 = vld [vmem:[%s4364 + $0x88] sm:$0xf]
        %v4400 = vld [vmem:[%s4364 + $0x8c] sm:$0xf]
        %v4401 = vld [vmem:[%s4364 + $0x90] sm:$0xf]
        %v4402 = vld [vmem:[%s4364 + $0x94] sm:$0xf]
        %v4403 = vld [vmem:[%s4364 + $0x98] sm:$0xf]
        %v4404 = vld [vmem:[%s4364 + $0x9c] sm:$0xf]
        %v4405 = vld [vmem:[%s4364 + $0xa0] sm:$0xf]
        %v4406 = vld [vmem:[%s4364 + $0xa4] sm:$0xf]
        %v4407 = vld [vmem:[%s4364 + $0xa8] sm:$0xf]
        %v4408 = vld [vmem:[%s4364 + $0xac] sm:$0xf]
        %v4409 = vld [vmem:[%s4364 + $0xb0] sm:$0xf]
        %v4410 = vld [vmem:[%s4364 + $0xb4] sm:$0xf]
        %v4411 = vld [vmem:[%s4364 + $0xb8] sm:$0xf]
        %v4412 = vld [vmem:[%s4364 + $0xbc] sm:$0xf]
        %v4413 = vld [vmem:[%s4364 + $0xc0] sm:$0xf]
        %v4414 = vld [vmem:[%s4364 + $0xc4] sm:$0xf]
        %v4415 = vld [vmem:[%s4364 + $0xc8] sm:$0xf]
        %v4416 = vld [vmem:[%s4364 + $0xcc] sm:$0xf]
        %v4417 = vld [vmem:[%s4364 + $0xd0] sm:$0xf]
        %v4418 = vld [vmem:[%s4364 + $0xd4] sm:$0xf]
        %v4419 = vld [vmem:[%s4364 + $0xd8] sm:$0xf]
        %v4420 = vld [vmem:[%s4364 + $0xdc] sm:$0xf]
        %v4421 = vld [vmem:[%s4364 + $0xe0] sm:$0xf]
        %v4422 = vld [vmem:[%s4364 + $0xe4] sm:$0xf]
        %v4423 = vld [vmem:[%s4364 + $0xe8] sm:$0xf]
        %v4424 = vld [vmem:[%s4364 + $0xec] sm:$0xf]
        %v4425 = vld [vmem:[%s4364 + $0xf0] sm:$0xf]
        %v4426 = vld [vmem:[%s4364 + $0xf4] sm:$0xf]
        %v4427 = vld [vmem:[%s4364 + $0xf8] sm:$0xf]
        %v4428 = vld [vmem:[%s4364 + $0xfc] sm:$0xf]
        %v4493 = vunpack.c.l.b16 %v4365
        %v4494 = vunpack.c.l.b16 %v4366
        %v4495 = vunpack.c.l.b16 %v4367
        %v4496 = vunpack.c.l.b16 %v4368
        %v4497 = vunpack.c.l.b16 %v4369
        %v4498 = vunpack.c.l.b16 %v4370
        %v4499 = vunpack.c.l.b16 %v4371
        %v4500 = vunpack.c.l.b16 %v4372
        %v4501 = vunpack.c.l.b16 %v4373
        %v4502 = vunpack.c.l.b16 %v4374
        %v4503 = vunpack.c.l.b16 %v4375
        %v4504 = vunpack.c.l.b16 %v4376
        %v4505 = vunpack.c.l.b16 %v4377
        %v4506 = vunpack.c.l.b16 %v4378
        %v4507 = vunpack.c.l.b16 %v4379
        %v4508 = vunpack.c.l.b16 %v4380
        %v4509 = vunpack.c.l.b16 %v4381
        %v4510 = vunpack.c.l.b16 %v4382
        %v4511 = vunpack.c.l.b16 %v4383
        %v4512 = vunpack.c.l.b16 %v4384
        %v4513 = vunpack.c.l.b16 %v4385
        %v4514 = vunpack.c.l.b16 %v4386
        %v4515 = vunpack.c.l.b16 %v4387
        %v4516 = vunpack.c.l.b16 %v4388
        %v4517 = vunpack.c.l.b16 %v4389
        %v4518 = vunpack.c.l.b16 %v4390
        %v4519 = vunpack.c.l.b16 %v4391
        %v4520 = vunpack.c.l.b16 %v4392
        %v4521 = vunpack.c.l.b16 %v4393
        %v4522 = vunpack.c.l.b16 %v4394
        %v4523 = vunpack.c.l.b16 %v4395
        %v4524 = vunpack.c.l.b16 %v4396
        %v4525 = vunpack.c.l.b16 %v4397
        %v4526 = vunpack.c.l.b16 %v4398
        %v4527 = vunpack.c.l.b16 %v4399
        %v4528 = vunpack.c.l.b16 %v4400
        %v4529 = vunpack.c.l.b16 %v4401
        %v4530 = vunpack.c.l.b16 %v4402
        %v4531 = vunpack.c.l.b16 %v4403
        %v4532 = vunpack.c.l.b16 %v4404
        %v4533 = vunpack.c.l.b16 %v4405
        %v4534 = vunpack.c.l.b16 %v4406
        %v4535 = vunpack.c.l.b16 %v4407
        %v4536 = vunpack.c.l.b16 %v4408
        %v4537 = vunpack.c.l.b16 %v4409
        %v4538 = vunpack.c.l.b16 %v4410
        %v4539 = vunpack.c.l.b16 %v4411
        %v4540 = vunpack.c.l.b16 %v4412
        %v4541 = vunpack.c.l.b16 %v4413
        %v4542 = vunpack.c.l.b16 %v4414
        %v4543 = vunpack.c.l.b16 %v4415
        %v4544 = vunpack.c.l.b16 %v4416
        %v4545 = vunpack.c.l.b16 %v4417
        %v4546 = vunpack.c.l.b16 %v4418
        %v4547 = vunpack.c.l.b16 %v4419
        %v4548 = vunpack.c.l.b16 %v4420
        %v4549 = vunpack.c.l.b16 %v4421
        %v4550 = vunpack.c.l.b16 %v4422
        %v4551 = vunpack.c.l.b16 %v4423
        %v4552 = vunpack.c.l.b16 %v4424
        %v4553 = vunpack.c.l.b16 %v4425
        %v4554 = vunpack.c.l.b16 %v4426
        %v4555 = vunpack.c.l.b16 %v4427
        %v4556 = vunpack.c.l.b16 %v4428
        %v4557 = vpack.c.b16 %v4494, %v4493
        %v4558 = vpack.c.b16 %v4496, %v4495
        %v4559 = vpack.c.b16 %v4498, %v4497
        %v4560 = vpack.c.b16 %v4500, %v4499
        %v4561 = vpack.c.b16 %v4502, %v4501
        %v4562 = vpack.c.b16 %v4504, %v4503
        %v4563 = vpack.c.b16 %v4506, %v4505
        %v4564 = vpack.c.b16 %v4508, %v4507
        %v4565 = vpack.c.b16 %v4510, %v4509
        %v4566 = vpack.c.b16 %v4512, %v4511
        %v4567 = vpack.c.b16 %v4514, %v4513
        %v4568 = vpack.c.b16 %v4516, %v4515
        %v4569 = vpack.c.b16 %v4518, %v4517
        %v4570 = vpack.c.b16 %v4520, %v4519
        %v4571 = vpack.c.b16 %v4522, %v4521
        %v4572 = vpack.c.b16 %v4524, %v4523
        %v4573 = vpack.c.b16 %v4526, %v4525
        %v4574 = vpack.c.b16 %v4528, %v4527
        %v4575 = vpack.c.b16 %v4530, %v4529
        %v4576 = vpack.c.b16 %v4532, %v4531
        %v4577 = vpack.c.b16 %v4534, %v4533
        %v4578 = vpack.c.b16 %v4536, %v4535
        %v4579 = vpack.c.b16 %v4538, %v4537
        %v4580 = vpack.c.b16 %v4540, %v4539
        %v4581 = vpack.c.b16 %v4542, %v4541
        %v4582 = vpack.c.b16 %v4544, %v4543
        %v4583 = vpack.c.b16 %v4546, %v4545
        %v4584 = vpack.c.b16 %v4548, %v4547
        %v4585 = vpack.c.b16 %v4550, %v4549
        %v4586 = vpack.c.b16 %v4552, %v4551
        %v4587 = vpack.c.b16 %v4554, %v4553
        %v4588 = vpack.c.b16 %v4556, %v4555
        %4621 = vmatprep.subr.bf16.mxu0 0
        %4622 = vmatpush1.bf16.msra.mxu0 %v4557
        %4623 = vmatprep.subr.bf16.mxu0 0
        %4624 = vmatpush1.bf16.msra.mxu0 %v4558
        %4625 = vmatprep.subr.bf16.mxu0 0
        %4626 = vmatpush1.bf16.msra.mxu0 %v4559
        %4627 = vmatprep.subr.bf16.mxu0 0
        %4628 = vmatpush1.bf16.msra.mxu0 %v4560
        %4629 = vmatprep.subr.bf16.mxu0 0
        %4630 = vmatpush1.bf16.msra.mxu0 %v4561
        %4631 = vmatprep.subr.bf16.mxu0 0
        %4632 = vmatpush1.bf16.msra.mxu0 %v4562
        %4633 = vmatprep.subr.bf16.mxu0 0
        %4634 = vmatpush1.bf16.msra.mxu0 %v4563
        %4635 = vmatprep.subr.bf16.mxu0 0
        %4636 = vmatpush1.bf16.msra.mxu0 %v4564
        %4637 = vmatprep.subr.bf16.mxu0 0
        %4638 = vmatpush1.bf16.msra.mxu0 %v4565
        %4639 = vmatprep.subr.bf16.mxu0 0
        %4640 = vmatpush1.bf16.msra.mxu0 %v4566
        %4641 = vmatprep.subr.bf16.mxu0 0
        %4642 = vmatpush1.bf16.msra.mxu0 %v4567
        %4643 = vmatprep.subr.bf16.mxu0 0
        %4644 = vmatpush1.bf16.msra.mxu0 %v4568
        %4645 = vmatprep.subr.bf16.mxu0 0
        %4646 = vmatpush1.bf16.msra.mxu0 %v4569
        %4647 = vmatprep.subr.bf16.mxu0 0
        %4648 = vmatpush1.bf16.msra.mxu0 %v4570
        %4649 = vmatprep.subr.bf16.mxu0 0
        %4650 = vmatpush1.bf16.msra.mxu0 %v4571
        %4651 = vmatprep.subr.bf16.mxu0 0
        %4652 = vmatpush1.bf16.msra.mxu0 %v4572
        %4653 = vmatprep.mubr.bf16.mxu0 %v4349
        %4654 = vmatmul.mubr.bf16.gmra.mrb[0].mxu0 %v4348
        %v4655 = vpop.f32.mrb[0].mxu0
        %v4656 = vadd.f32 0.0, %v4655
        %v4657 = vpop.f32.mrb[0].mxu0
        %v4658 = vpop.f32.mrb[0].mxu0
        %v4659 = vadd.f32 0.0, %v4658
        %v4660 = vpop.f32.mrb[0].mxu0
        %4661 = vmatprep.mubr.bf16.mxu0 %v4353
        %4662 = vmatmul.mubr.bf16.gmra.mrb[0].mxu0 %v4352
        %v4663 = vpop.f32.mrb[0].mxu0
        %v4664 = vadd.f32 0.0, %v4663
        %v4665 = vpop.f32.mrb[0].mxu0
        %v4666 = vpop.f32.mrb[0].mxu0
        %v4667 = vadd.f32 0.0, %v4666
        %v4668 = vpop.f32.mrb[0].mxu0
        %4669 = vmatprep.mubr.bf16.mxu0 %v4357
        %4670 = vmatmul.mubr.bf16.gmra.mrb[0].mxu0 %v4356
        %v4671 = vpop.f32.mrb[0].mxu0
        %v4672 = vadd.f32 0.0, %v4671
        %v4673 = vpop.f32.mrb[0].mxu0
        %v4674 = vpop.f32.mrb[0].mxu0
        %v4675 = vadd.f32 0.0, %v4674
        %v4676 = vpop.f32.mrb[0].mxu0
        %4677 = vmatprep.mubr.bf16.mxu0 %v4361
        %4678 = vmatmul.mubr.bf16.gmra.mrb[0].mxu0 %v4360
        %v4679 = vpop.f32.mrb[0].mxu0
        %v4680 = vadd.f32 0.0, %v4679
        %v4681 = vpop.f32.mrb[0].mxu0
        %v4682 = vpop.f32.mrb[0].mxu0
        %v4683 = vadd.f32 0.0, %v4682
        %v4684 = vpop.f32.mrb[0].mxu0
        %4685 = vdwg.mxu0
        %4686 = vmatprep.subr.bf16.mxu0 0
        %4687 = vmatpush1.bf16.msra.mxu0 %v4573
        %4688 = vmatprep.subr.bf16.mxu0 0
        %4689 = vmatpush1.bf16.msra.mxu0 %v4574
        %4690 = vmatprep.subr.bf16.mxu0 0
        %4691 = vmatpush1.bf16.msra.mxu0 %v4575
        %4692 = vmatprep.subr.bf16.mxu0 0
        %4693 = vmatpush1.bf16.msra.mxu0 %v4576
        %4694 = vmatprep.subr.bf16.mxu0 0
        %4695 = vmatpush1.bf16.msra.mxu0 %v4577
        %4696 = vmatprep.subr.bf16.mxu0 0
        %4697 = vmatpush1.bf16.msra.mxu0 %v4578
        %4698 = vmatprep.subr.bf16.mxu0 0
        %4699 = vmatpush1.bf16.msra.mxu0 %v4579
        %4700 = vmatprep.subr.bf16.mxu0 0
        %4701 = vmatpush1.bf16.msra.mxu0 %v4580
        %4702 = vmatprep.subr.bf16.mxu0 0
        %4703 = vmatpush1.bf16.msra.mxu0 %v4581
        %4704 = vmatprep.subr.bf16.mxu0 0
        %4705 = vmatpush1.bf16.msra.mxu0 %v4582
        %4706 = vmatprep.subr.bf16.mxu0 0
        %4707 = vmatpush1.bf16.msra.mxu0 %v4583
        %4708 = vmatprep.subr.bf16.mxu0 0
        %4709 = vmatpush1.bf16.msra.mxu0 %v4584
        %4710 = vmatprep.subr.bf16.mxu0 0
        %4711 = vmatpush1.bf16.msra.mxu0 %v4585
        %4712 = vmatprep.subr.bf16.mxu0 0
        %4713 = vmatpush1.bf16.msra.mxu0 %v4586
        %4714 = vmatprep.subr.bf16.mxu0 0
        %4715 = vmatpush1.bf16.msra.mxu0 %v4587
        %4716 = vmatprep.subr.bf16.mxu0 0
        %4717 = vmatpush1.bf16.msra.mxu0 %v4588
        %4718 = vmatprep.mubr.bf16.mxu0 %v4351
        %4719 = vmatmul.mubr.bf16.gmra.mrb[0].mxu0 %v4350
        %v4720 = vpop.f32.mrb[0].mxu0
        %v4721 = vadd.f32 %v4656, %v4720
        %v4722 = vpop.f32.mrb[0].mxu0
        %v4723 = vpop.f32.mrb[0].mxu0
        %v4724 = vadd.f32 %v4659, %v4723
        %v4725 = vpop.f32.mrb[0].mxu0
        %4726 = vmatprep.mubr.bf16.mxu0 %v4355
        %4727 = vmatmul.mubr.bf16.gmra.mrb[0].mxu0 %v4354
        %v4728 = vpop.f32.mrb[0].mxu0
        %v4729 = vadd.f32 %v4664, %v4728
        %v4730 = vpop.f32.mrb[0].mxu0
        %v4731 = vpop.f32.mrb[0].mxu0
        %v4732 = vadd.f32 %v4667, %v4731
        %v4733 = vpop.f32.mrb[0].mxu0
        %4734 = vmatprep.mubr.bf16.mxu0 %v4359
        %4735 = vmatmul.mubr.bf16.gmra.mrb[0].mxu0 %v4358
        %v4736 = vpop.f32.mrb[0].mxu0
        %v4737 = vadd.f32 %v4672, %v4736
        %v4738 = vpop.f32.mrb[0].mxu0
        %v4739 = vpop.f32.mrb[0].mxu0
        %v4740 = vadd.f32 %v4675, %v4739
        %v4741 = vpop.f32.mrb[0].mxu0
        %4742 = vmatprep.mubr.bf16.mxu0 %v4363
        %4743 = vmatmul.mubr.bf16.gmra.mrb[0].mxu0 %v4362
        %v4744 = vpop.f32.mrb[0].mxu0
        %v4745 = vadd.f32 %v4680, %v4744
        %v4746 = vpop.f32.mrb[0].mxu0
        %v4747 = vpop.f32.mrb[0].mxu0
        %v4748 = vadd.f32 %v4683, %v4747
        %v4749 = vpop.f32.mrb[0].mxu0
        %4750 = vdwg.mxu0
        %v4751 = vadd.f32 %v4192, %v4721
        %v4752 = vadd.f32 %v4193, %v4724
        %v4753 = vadd.f32 %v4194, %v4729
        %v4754 = vadd.f32 %v4195, %v4732
        %v4755 = vadd.f32 %v4196, %v4737
        %v4756 = vadd.f32 %v4197, %v4740
        %v4757 = vadd.f32 %v4198, %v4745
        %v4758 = vadd.f32 %v4199, %v4748
        %v4759 = vld [vmem:[#allocation2 + $0x140] sm:$0xff]
        %v4760 = vld [vmem:[#allocation2 + $0x148] sm:$0xff]
        %v4761 = vld [vmem:[#allocation2 + $0x150] sm:$0xff]
        %v4762 = vld [vmem:[#allocation2 + $0x158] sm:$0xff]
        %v4763 = vpack.c.bf16 %v3593, %v3589
        %v4764 = vpack.c.bf16 %v3594, %v3590
        %v4765 = vpack.c.bf16 %v3595, %v3591
        %v4766 = vpack.c.bf16 %v3596, %v3592
        %v4767 = vpack.c.bf16 %v3601, %v3597
        %v4768 = vpack.c.bf16 %v3602, %v3598
        %v4769 = vpack.c.bf16 %v3603, %v3599
        %v4770 = vpack.c.bf16 %v3604, %v3600
        %v4771 = vpack.c.bf16 %v3609, %v3605
        %v4772 = vpack.c.bf16 %v3610, %v3606
        %v4773 = vpack.c.bf16 %v3611, %v3607
        %v4774 = vpack.c.bf16 %v3612, %v3608
        %v4775 = vpack.c.bf16 %v4759, %v3613
        %v4776 = vpack.c.bf16 %v4760, %v3614
        %v4777 = vpack.c.bf16 %v4761, %v3615
        %v4778 = vpack.c.bf16 %v4762, %v3616
        %s4779 = scalar_lea.vmem [#allocation12], 1792
        %v4780 = vld [vmem:[%s4779] sm:$0xf]
        %v4781 = vld [vmem:[%s4779 + $0x4] sm:$0xf]
        %v4782 = vld [vmem:[%s4779 + $0x8] sm:$0xf]
        %v4783 = vld [vmem:[%s4779 + $0xc] sm:$0xf]
        %v4784 = vld [vmem:[%s4779 + $0x10] sm:$0xf]
        %v4785 = vld [vmem:[%s4779 + $0x14] sm:$0xf]
        %v4786 = vld [vmem:[%s4779 + $0x18] sm:$0xf]
        %v4787 = vld [vmem:[%s4779 + $0x1c] sm:$0xf]
        %v4788 = vld [vmem:[%s4779 + $0x20] sm:$0xf]
        %v4789 = vld [vmem:[%s4779 + $0x24] sm:$0xf]
        %v4790 = vld [vmem:[%s4779 + $0x28] sm:$0xf]
        %v4791 = vld [vmem:[%s4779 + $0x2c] sm:$0xf]
        %v4792 = vld [vmem:[%s4779 + $0x30] sm:$0xf]
        %v4793 = vld [vmem:[%s4779 + $0x34] sm:$0xf]
        %v4794 = vld [vmem:[%s4779 + $0x38] sm:$0xf]
        %v4795 = vld [vmem:[%s4779 + $0x3c] sm:$0xf]
        %v4796 = vld [vmem:[%s4779 + $0x40] sm:$0xf]
        %v4797 = vld [vmem:[%s4779 + $0x44] sm:$0xf]
        %v4798 = vld [vmem:[%s4779 + $0x48] sm:$0xf]
        %v4799 = vld [vmem:[%s4779 + $0x4c] sm:$0xf]
        %v4800 = vld [vmem:[%s4779 + $0x50] sm:$0xf]
        %v4801 = vld [vmem:[%s4779 + $0x54] sm:$0xf]
        %v4802 = vld [vmem:[%s4779 + $0x58] sm:$0xf]
        %v4803 = vld [vmem:[%s4779 + $0x5c] sm:$0xf]
        %v4804 = vld [vmem:[%s4779 + $0x60] sm:$0xf]
        %v4805 = vld [vmem:[%s4779 + $0x64] sm:$0xf]
        %v4806 = vld [vmem:[%s4779 + $0x68] sm:$0xf]
        %v4807 = vld [vmem:[%s4779 + $0x6c] sm:$0xf]
        %v4808 = vld [vmem:[%s4779 + $0x70] sm:$0xf]
        %v4809 = vld [vmem:[%s4779 + $0x74] sm:$0xf]
        %v4810 = vld [vmem:[%s4779 + $0x78] sm:$0xf]
        %v4811 = vld [vmem:[%s4779 + $0x7c] sm:$0xf]
        %v4812 = vld [vmem:[%s4779 + $0x80] sm:$0xf]
        %v4813 = vld [vmem:[%s4779 + $0x84] sm:$0xf]
        %v4814 = vld [vmem:[%s4779 + $0x88] sm:$0xf]
        %v4815 = vld [vmem:[%s4779 + $0x8c] sm:$0xf]
        %v4816 = vld [vmem:[%s4779 + $0x90] sm:$0xf]
        %v4817 = vld [vmem:[%s4779 + $0x94] sm:$0xf]
        %v4818 = vld [vmem:[%s4779 + $0x98] sm:$0xf]
        %v4819 = vld [vmem:[%s4779 + $0x9c] sm:$0xf]
        %v4820 = vld [vmem:[%s4779 + $0xa0] sm:$0xf]
        %v4821 = vld [vmem:[%s4779 + $0xa4] sm:$0xf]
        %v4822 = vld [vmem:[%s4779 + $0xa8] sm:$0xf]
        %v4823 = vld [vmem:[%s4779 + $0xac] sm:$0xf]
        %v4824 = vld [vmem:[%s4779 + $0xb0] sm:$0xf]
        %v4825 = vld [vmem:[%s4779 + $0xb4] sm:$0xf]
        %v4826 = vld [vmem:[%s4779 + $0xb8] sm:$0xf]
        %v4827 = vld [vmem:[%s4779 + $0xbc] sm:$0xf]
        %v4828 = vld [vmem:[%s4779 + $0xc0] sm:$0xf]
        %v4829 = vld [vmem:[%s4779 + $0xc4] sm:$0xf]
        %v4830 = vld [vmem:[%s4779 + $0xc8] sm:$0xf]
        %v4831 = vld [vmem:[%s4779 + $0xcc] sm:$0xf]
        %v4832 = vld [vmem:[%s4779 + $0xd0] sm:$0xf]
        %v4833 = vld [vmem:[%s4779 + $0xd4] sm:$0xf]
        %v4834 = vld [vmem:[%s4779 + $0xd8] sm:$0xf]
        %v4835 = vld [vmem:[%s4779 + $0xdc] sm:$0xf]
        %v4836 = vld [vmem:[%s4779 + $0xe0] sm:$0xf]
        %v4837 = vld [vmem:[%s4779 + $0xe4] sm:$0xf]
        %v4838 = vld [vmem:[%s4779 + $0xe8] sm:$0xf]
        %v4839 = vld [vmem:[%s4779 + $0xec] sm:$0xf]
        %v4840 = vld [vmem:[%s4779 + $0xf0] sm:$0xf]
        %v4841 = vld [vmem:[%s4779 + $0xf4] sm:$0xf]
        %v4842 = vld [vmem:[%s4779 + $0xf8] sm:$0xf]
        %v4843 = vld [vmem:[%s4779 + $0xfc] sm:$0xf]
        %v4908 = vunpack.c.l.b16 %v4780
        %v4909 = vunpack.c.l.b16 %v4781
        %v4910 = vunpack.c.l.b16 %v4782
        %v4911 = vunpack.c.l.b16 %v4783
        %v4912 = vunpack.c.l.b16 %v4784
        %v4913 = vunpack.c.l.b16 %v4785
        %v4914 = vunpack.c.l.b16 %v4786
        %v4915 = vunpack.c.l.b16 %v4787
        %v4916 = vunpack.c.l.b16 %v4788
        %v4917 = vunpack.c.l.b16 %v4789
        %v4918 = vunpack.c.l.b16 %v4790
        %v4919 = vunpack.c.l.b16 %v4791
        %v4920 = vunpack.c.l.b16 %v4792
        %v4921 = vunpack.c.l.b16 %v4793
        %v4922 = vunpack.c.l.b16 %v4794
        %v4923 = vunpack.c.l.b16 %v4795
        %v4924 = vunpack.c.l.b16 %v4796
        %v4925 = vunpack.c.l.b16 %v4797
        %v4926 = vunpack.c.l.b16 %v4798
        %v4927 = vunpack.c.l.b16 %v4799
        %v4928 = vunpack.c.l.b16 %v4800
        %v4929 = vunpack.c.l.b16 %v4801
        %v4930 = vunpack.c.l.b16 %v4802
        %v4931 = vunpack.c.l.b16 %v4803
        %v4932 = vunpack.c.l.b16 %v4804
        %v4933 = vunpack.c.l.b16 %v4805
        %v4934 = vunpack.c.l.b16 %v4806
        %v4935 = vunpack.c.l.b16 %v4807
        %v4936 = vunpack.c.l.b16 %v4808
        %v4937 = vunpack.c.l.b16 %v4809
        %v4938 = vunpack.c.l.b16 %v4810
        %v4939 = vunpack.c.l.b16 %v4811
        %v4940 = vunpack.c.l.b16 %v4812
        %v4941 = vunpack.c.l.b16 %v4813
        %v4942 = vunpack.c.l.b16 %v4814
        %v4943 = vunpack.c.l.b16 %v4815
        %v4944 = vunpack.c.l.b16 %v4816
        %v4945 = vunpack.c.l.b16 %v4817
        %v4946 = vunpack.c.l.b16 %v4818
        %v4947 = vunpack.c.l.b16 %v4819
        %v4948 = vunpack.c.l.b16 %v4820
        %v4949 = vunpack.c.l.b16 %v4821
        %v4950 = vunpack.c.l.b16 %v4822
        %v4951 = vunpack.c.l.b16 %v4823
        %v4952 = vunpack.c.l.b16 %v4824
        %v4953 = vunpack.c.l.b16 %v4825
        %v4954 = vunpack.c.l.b16 %v4826
        %v4955 = vunpack.c.l.b16 %v4827
        %v4956 = vunpack.c.l.b16 %v4828
        %v4957 = vunpack.c.l.b16 %v4829
        %v4958 = vunpack.c.l.b16 %v4830
        %v4959 = vunpack.c.l.b16 %v4831
        %v4960 = vunpack.c.l.b16 %v4832
        %v4961 = vunpack.c.l.b16 %v4833
        %v4962 = vunpack.c.l.b16 %v4834
        %v4963 = vunpack.c.l.b16 %v4835
        %v4964 = vunpack.c.l.b16 %v4836
        %v4965 = vunpack.c.l.b16 %v4837
        %v4966 = vunpack.c.l.b16 %v4838
        %v4967 = vunpack.c.l.b16 %v4839
        %v4968 = vunpack.c.l.b16 %v4840
        %v4969 = vunpack.c.l.b16 %v4841
        %v4970 = vunpack.c.l.b16 %v4842
        %v4971 = vunpack.c.l.b16 %v4843
        %v4972 = vpack.c.b16 %v4909, %v4908
        %v4973 = vpack.c.b16 %v4911, %v4910
        %v4974 = vpack.c.b16 %v4913, %v4912
        %v4975 = vpack.c.b16 %v4915, %v4914
        %v4976 = vpack.c.b16 %v4917, %v4916
        %v4977 = vpack.c.b16 %v4919, %v4918
        %v4978 = vpack.c.b16 %v4921, %v4920
        %v4979 = vpack.c.b16 %v4923, %v4922
        %v4980 = vpack.c.b16 %v4925, %v4924
        %v4981 = vpack.c.b16 %v4927, %v4926
        %v4982 = vpack.c.b16 %v4929, %v4928
        %v4983 = vpack.c.b16 %v4931, %v4930
        %v4984 = vpack.c.b16 %v4933, %v4932
        %v4985 = vpack.c.b16 %v4935, %v4934
        %v4986 = vpack.c.b16 %v4937, %v4936
        %v4987 = vpack.c.b16 %v4939, %v4938
        %v4988 = vpack.c.b16 %v4941, %v4940
        %v4989 = vpack.c.b16 %v4943, %v4942
        %v4990 = vpack.c.b16 %v4945, %v4944
        %v4991 = vpack.c.b16 %v4947, %v4946
        %v4992 = vpack.c.b16 %v4949, %v4948
        %v4993 = vpack.c.b16 %v4951, %v4950
        %v4994 = vpack.c.b16 %v4953, %v4952
        %v4995 = vpack.c.b16 %v4955, %v4954
        %v4996 = vpack.c.b16 %v4957, %v4956
        %v4997 = vpack.c.b16 %v4959, %v4958
        %v4998 = vpack.c.b16 %v4961, %v4960
        %v4999 = vpack.c.b16 %v4963, %v4962
        %v5000 = vpack.c.b16 %v4965, %v4964
        %v5001 = vpack.c.b16 %v4967, %v4966
        %v5002 = vpack.c.b16 %v4969, %v4968
        %v5003 = vpack.c.b16 %v4971, %v4970
        %5036 = vmatprep.subr.bf16.mxu0 0
        %5037 = vmatpush1.bf16.msra.mxu0 %v4972
        %5038 = vmatprep.subr.bf16.mxu0 0
        %5039 = vmatpush1.bf16.msra.mxu0 %v4973
        %5040 = vmatprep.subr.bf16.mxu0 0
        %5041 = vmatpush1.bf16.msra.mxu0 %v4974
        %5042 = vmatprep.subr.bf16.mxu0 0
        %5043 = vmatpush1.bf16.msra.mxu0 %v4975
        %5044 = vmatprep.subr.bf16.mxu0 0
        %5045 = vmatpush1.bf16.msra.mxu0 %v4976
        %5046 = vmatprep.subr.bf16.mxu0 0
        %5047 = vmatpush1.bf16.msra.mxu0 %v4977
        %5048 = vmatprep.subr.bf16.mxu0 0
        %5049 = vmatpush1.bf16.msra.mxu0 %v4978
        %5050 = vmatprep.subr.bf16.mxu0 0
        %5051 = vmatpush1.bf16.msra.mxu0 %v4979
        %5052 = vmatprep.subr.bf16.mxu0 0
        %5053 = vmatpush1.bf16.msra.mxu0 %v4980
        %5054 = vmatprep.subr.bf16.mxu0 0
        %5055 = vmatpush1.bf16.msra.mxu0 %v4981
        %5056 = vmatprep.subr.bf16.mxu0 0
        %5057 = vmatpush1.bf16.msra.mxu0 %v4982
        %5058 = vmatprep.subr.bf16.mxu0 0
        %5059 = vmatpush1.bf16.msra.mxu0 %v4983
        %5060 = vmatprep.subr.bf16.mxu0 0
        %5061 = vmatpush1.bf16.msra.mxu0 %v4984
        %5062 = vmatprep.subr.bf16.mxu0 0
        %5063 = vmatpush1.bf16.msra.mxu0 %v4985
        %5064 = vmatprep.subr.bf16.mxu0 0
        %5065 = vmatpush1.bf16.msra.mxu0 %v4986
        %5066 = vmatprep.subr.bf16.mxu0 0
        %5067 = vmatpush1.bf16.msra.mxu0 %v4987
        %5068 = vmatprep.mubr.bf16.mxu0 %v4764
        %5069 = vmatmul.mubr.bf16.gmra.mrb[0].mxu0 %v4763
        %v5070 = vpop.f32.mrb[0].mxu0
        %v5071 = vadd.f32 0.0, %v5070
        %v5072 = vpop.f32.mrb[0].mxu0
        %v5073 = vpop.f32.mrb[0].mxu0
        %v5074 = vadd.f32 0.0, %v5073
        %v5075 = vpop.f32.mrb[0].mxu0
        %5076 = vmatprep.mubr.bf16.mxu0 %v4768
        %5077 = vmatmul.mubr.bf16.gmra.mrb[0].mxu0 %v4767
        %v5078 = vpop.f32.mrb[0].mxu0
        %v5079 = vadd.f32 0.0, %v5078
        %v5080 = vpop.f32.mrb[0].mxu0
        %v5081 = vpop.f32.mrb[0].mxu0
        %v5082 = vadd.f32 0.0, %v5081
        %v5083 = vpop.f32.mrb[0].mxu0
        %5084 = vmatprep.mubr.bf16.mxu0 %v4772
        %5085 = vmatmul.mubr.bf16.gmra.mrb[0].mxu0 %v4771
        %v5086 = vpop.f32.mrb[0].mxu0
        %v5087 = vadd.f32 0.0, %v5086
        %v5088 = vpop.f32.mrb[0].mxu0
        %v5089 = vpop.f32.mrb[0].mxu0
        %v5090 = vadd.f32 0.0, %v5089
        %v5091 = vpop.f32.mrb[0].mxu0
        %5092 = vmatprep.mubr.bf16.mxu0 %v4776
        %5093 = vmatmul.mubr.bf16.gmra.mrb[0].mxu0 %v4775
        %v5094 = vpop.f32.mrb[0].mxu0
        %v5095 = vadd.f32 0.0, %v5094
        %v5096 = vpop.f32.mrb[0].mxu0
        %v5097 = vpop.f32.mrb[0].mxu0
        %v5098 = vadd.f32 0.0, %v5097
        %v5099 = vpop.f32.mrb[0].mxu0
        %5100 = vdwg.mxu0
        %5101 = vmatprep.subr.bf16.mxu0 0
        %5102 = vmatpush1.bf16.msra.mxu0 %v4988
        %5103 = vmatprep.subr.bf16.mxu0 0
        %5104 = vmatpush1.bf16.msra.mxu0 %v4989
        %5105 = vmatprep.subr.bf16.mxu0 0
        %5106 = vmatpush1.bf16.msra.mxu0 %v4990
        %5107 = vmatprep.subr.bf16.mxu0 0
        %5108 = vmatpush1.bf16.msra.mxu0 %v4991
        %5109 = vmatprep.subr.bf16.mxu0 0
        %5110 = vmatpush1.bf16.msra.mxu0 %v4992
        %5111 = vmatprep.subr.bf16.mxu0 0
        %5112 = vmatpush1.bf16.msra.mxu0 %v4993
        %5113 = vmatprep.subr.bf16.mxu0 0
        %5114 = vmatpush1.bf16.msra.mxu0 %v4994
        %5115 = vmatprep.subr.bf16.mxu0 0
        %5116 = vmatpush1.bf16.msra.mxu0 %v4995
        %5117 = vmatprep.subr.bf16.mxu0 0
        %5118 = vmatpush1.bf16.msra.mxu0 %v4996
        %5119 = vmatprep.subr.bf16.mxu0 0
        %5120 = vmatpush1.bf16.msra.mxu0 %v4997
        %5121 = vmatprep.subr.bf16.mxu0 0
        %5122 = vmatpush1.bf16.msra.mxu0 %v4998
        %5123 = vmatprep.subr.bf16.mxu0 0
        %5124 = vmatpush1.bf16.msra.mxu0 %v4999
        %5125 = vmatprep.subr.bf16.mxu0 0
        %5126 = vmatpush1.bf16.msra.mxu0 %v5000
        %5127 = vmatprep.subr.bf16.mxu0 0
        %5128 = vmatpush1.bf16.msra.mxu0 %v5001
        %5129 = vmatprep.subr.bf16.mxu0 0
        %5130 = vmatpush1.bf16.msra.mxu0 %v5002
        %5131 = vmatprep.subr.bf16.mxu0 0
        %5132 = vmatpush1.bf16.msra.mxu0 %v5003
        %5133 = vmatprep.mubr.bf16.mxu0 %v4766
        %5134 = vmatmul.mubr.bf16.gmra.mrb[0].mxu0 %v4765
        %v5135 = vpop.f32.mrb[0].mxu0
        %v5136 = vadd.f32 %v5071, %v5135
        %v5137 = vpop.f32.mrb[0].mxu0
        %v5138 = vpop.f32.mrb[0].mxu0
        %v5139 = vadd.f32 %v5074, %v5138
        %v5140 = vpop.f32.mrb[0].mxu0
        %5141 = vmatprep.mubr.bf16.mxu0 %v4770
        %5142 = vmatmul.mubr.bf16.gmra.mrb[0].mxu0 %v4769
        %v5143 = vpop.f32.mrb[0].mxu0
        %v5144 = vadd.f32 %v5079, %v5143
        %v5145 = vpop.f32.mrb[0].mxu0
        %v5146 = vpop.f32.mrb[0].mxu0
        %v5147 = vadd.f32 %v5082, %v5146
        %v5148 = vpop.f32.mrb[0].mxu0
        %5149 = vmatprep.mubr.bf16.mxu0 %v4774
        %5150 = vmatmul.mubr.bf16.gmra.mrb[0].mxu0 %v4773
        %v5151 = vpop.f32.mrb[0].mxu0
        %v5152 = vadd.f32 %v5087, %v5151
        %v5153 = vpop.f32.mrb[0].mxu0
        %v5154 = vpop.f32.mrb[0].mxu0
        %v5155 = vadd.f32 %v5090, %v5154
        %v5156 = vpop.f32.mrb[0].mxu0
        %5157 = vmatprep.mubr.bf16.mxu0 %v4778
        %5158 = vmatmul.mubr.bf16.gmra.mrb[0].mxu0 %v4777
        %v5159 = vpop.f32.mrb[0].mxu0
        %v5160 = vadd.f32 %v5095, %v5159
        %v5161 = vpop.f32.mrb[0].mxu0
        %v5162 = vpop.f32.mrb[0].mxu0
        %v5163 = vadd.f32 %v5098, %v5162
        %v5164 = vpop.f32.mrb[0].mxu0
        %5165 = vdwg.mxu0
        %v5166 = vadd.f32 %v4751, %v5136
        %v5167 = vadd.f32 %v4752, %v5139
        %v5168 = vadd.f32 %v4753, %v5144
        %v5169 = vadd.f32 %v4754, %v5147
        %v5170 = vadd.f32 %v4755, %v5152
        %v5171 = vadd.f32 %v4756, %v5155
        %v5172 = vadd.f32 %v4757, %v5160
        %v5173 = vadd.f32 %v4758, %v5163
        %v5174 = vld [vmem:[#allocation2 + $0x60] sm:$0xfe]
        %v5175 = vld [vmem:[#allocation2 + $0x68] sm:$0xfe]
        %v5176 = vld [vmem:[#allocation2 + $0x70] sm:$0xfe]
        %v5177 = vld [vmem:[#allocation2 + $0x78] sm:$0xfe]
        %v5178 = vld [vmem:[#allocation2 + $0x80] sm:$0xff]
        %v5179 = vld [vmem:[#allocation2 + $0x88] sm:$0xff]
        %v5180 = vld [vmem:[#allocation2 + $0x90] sm:$0xff]
        %v5181 = vld [vmem:[#allocation2 + $0x98] sm:$0xff]
        %v5182 = vld [vmem:[#allocation2 + $0xa0] sm:$0xff]
        %v5183 = vld [vmem:[#allocation2 + $0xa8] sm:$0xff]
        %v5184 = vld [vmem:[#allocation2 + $0xb0] sm:$0xff]
        %v5185 = vld [vmem:[#allocation2 + $0xb8] sm:$0xff]
        %v5186 = vld [vmem:[#allocation2 + $0xc0] sm:$0xff]
        %v5187 = vld [vmem:[#allocation2 + $0xc8] sm:$0xff]
        %v5188 = vld [vmem:[#allocation2 + $0xd0] sm:$0xff]
        %v5189 = vld [vmem:[#allocation2 + $0xd8] sm:$0xff]
        %v5190 = vld [vmem:[#allocation2 + $0xe0] sm:$0xff]
        %v5191 = vld [vmem:[#allocation2 + $0xe8] sm:$0xff]
        %v5192 = vld [vmem:[#allocation2 + $0xf0] sm:$0xff]
        %v5193 = vld [vmem:[#allocation2 + $0xf8] sm:$0xff]
        %v5194 = vld [vmem:[#allocation2 + $0x100] sm:$0xff]
        %v5195 = vld [vmem:[#allocation2 + $0x108] sm:$0xff]
        %v5196 = vld [vmem:[#allocation2 + $0x110] sm:$0xff]
        %v5197 = vld [vmem:[#allocation2 + $0x118] sm:$0xff]
        %v5198 = vld [vmem:[#allocation2 + $0x120] sm:$0xff]
        %v5199 = vld [vmem:[#allocation2 + $0x128] sm:$0xff]
        %v5200 = vld [vmem:[#allocation2 + $0x130] sm:$0xff]
        %v5201 = vld [vmem:[#allocation2 + $0x138] sm:$0xff]
        %v5202 = vld [vmem:[#allocation2 + $0x140] sm:$0xff]
        %v5203 = vld [vmem:[#allocation2 + $0x148] sm:$0xff]
        %v5204 = vld [vmem:[#allocation2 + $0x150] sm:$0xff]
        %v5205 = vld [vmem:[#allocation2 + $0x158] sm:$0xff]
        %v5206 = vld [vmem:[#allocation2 + $0x160] sm:$0x1]
        %v5207 = vld [vmem:[#allocation2 + $0x168] sm:$0x1]
        %v5208 = vld [vmem:[#allocation2 + $0x170] sm:$0x1]
        %v5209 = vld [vmem:[#allocation2 + $0x178] sm:$0x1]
        %v5246 = vrot.slane %v5174, 1
        %v5247 = vrot.slane %v5178, 1
        %v5248 = vsel %vm2067, %v5246, %v5247
        %v5249 = vrot.slane %v5175, 1
        %v5250 = vrot.slane %v5179, 1
        %v5251 = vsel %vm2067, %v5249, %v5250
        %v5252 = vrot.slane %v5176, 1
        %v5253 = vrot.slane %v5180, 1
        %v5254 = vsel %vm2067, %v5252, %v5253
        %v5255 = vrot.slane %v5177, 1
        %v5256 = vrot.slane %v5181, 1
        %v5257 = vsel %vm2067, %v5255, %v5256
        %v5258 = vrot.slane %v5182, 1
        %v5259 = vsel %vm2067, %v5247, %v5258
        %v5260 = vrot.slane %v5183, 1
        %v5261 = vsel %vm2067, %v5250, %v5260
        %v5262 = vrot.slane %v5184, 1
        %v5263 = vsel %vm2067, %v5253, %v5262
        %v5264 = vrot.slane %v5185, 1
        %v5265 = vsel %vm2067, %v5256, %v5264
        %v5266 = vrot.slane %v5186, 1
        %v5267 = vsel %vm2067, %v5258, %v5266
        %v5268 = vrot.slane %v5187, 1
        %v5269 = vsel %vm2067, %v5260, %v5268
        %v5270 = vrot.slane %v5188, 1
        %v5271 = vsel %vm2067, %v5262, %v5270
        %v5272 = vrot.slane %v5189, 1
        %v5273 = vsel %vm2067, %v5264, %v5272
        %v5274 = vrot.slane %v5190, 1
        %v5275 = vsel %vm2067, %v5266, %v5274
        %v5276 = vrot.slane %v5191, 1
        %v5277 = vsel %vm2067, %v5268, %v5276
        %v5278 = vrot.slane %v5192, 1
        %v5279 = vsel %vm2067, %v5270, %v5278
        %v5280 = vrot.slane %v5193, 1
        %v5281 = vsel %vm2067, %v5272, %v5280
        %v5282 = vrot.slane %v5194, 1
        %v5283 = vsel %vm2067, %v5274, %v5282
        %v5284 = vrot.slane %v5195, 1
        %v5285 = vsel %vm2067, %v5276, %v5284
        %v5286 = vrot.slane %v5196, 1
        %v5287 = vsel %vm2067, %v5278, %v5286
        %v5288 = vrot.slane %v5197, 1
        %v5289 = vsel %vm2067, %v5280, %v5288
        %v5290 = vrot.slane %v5198, 1
        %v5291 = vsel %vm2067, %v5282, %v5290
        %v5292 = vrot.slane %v5199, 1
        %v5293 = vsel %vm2067, %v5284, %v5292
        %v5294 = vrot.slane %v5200, 1
        %v5295 = vsel %vm2067, %v5286, %v5294
        %v5296 = vrot.slane %v5201, 1
        %v5297 = vsel %vm2067, %v5288, %v5296
        %v5298 = vrot.slane %v5202, 1
        %v5299 = vsel %vm2067, %v5290, %v5298
        %v5300 = vrot.slane %v5203, 1
        %v5301 = vsel %vm2067, %v5292, %v5300
        %v5302 = vrot.slane %v5204, 1
        %v5303 = vsel %vm2067, %v5294, %v5302
        %v5304 = vrot.slane %v5205, 1
        %v5305 = vsel %vm2067, %v5296, %v5304
        %v5306 = vrot.slane %v5206, 1
        %v5307 = vsel %vm2067, %v5298, %v5306
        %v5308 = vrot.slane %v5207, 1
        %v5309 = vsel %vm2067, %v5300, %v5308
        %v5310 = vrot.slane %v5208, 1
        %v5311 = vsel %vm2067, %v5302, %v5310
        %v5312 = vrot.slane %v5209, 1
        %v5313 = vsel %vm2067, %v5304, %v5312
        %v5346 = vsel %vm2023, %v5248, 0.0
        %v5347 = vsel %vm2023, %v5251, 0.0
        %v5348 = vsel %vm2023, %v5254, 0.0
        %v5349 = vsel %vm2023, %v5257, 0.0
        %v5350 = vsel %vm2024, %v5259, 0.0
        %v5351 = vsel %vm2024, %v5261, 0.0
        %v5352 = vsel %vm2024, %v5263, 0.0
        %v5353 = vsel %vm2024, %v5265, 0.0
        %v5354 = vsel %vm2025, %v5267, 0.0
        %v5355 = vsel %vm2025, %v5269, 0.0
        %v5356 = vsel %vm2025, %v5271, 0.0
        %v5357 = vsel %vm2025, %v5273, 0.0
        %v5358 = vsel %vm2026, %v5275, 0.0
        %v5359 = vsel %vm2026, %v5277, 0.0
        %v5360 = vsel %vm2026, %v5279, 0.0
        %v5361 = vsel %vm2026, %v5281, 0.0
        %v5362 = vsel %vm2027, %v5283, 0.0
        %v5363 = vsel %vm2027, %v5285, 0.0
        %v5364 = vsel %vm2027, %v5287, 0.0
        %v5365 = vsel %vm2027, %v5289, 0.0
        %v5366 = vsel %vm2028, %v5291, 0.0
        %v5367 = vsel %vm2028, %v5293, 0.0
        %v5368 = vsel %vm2028, %v5295, 0.0
        %v5369 = vsel %vm2028, %v5297, 0.0
        %v5370 = vsel %vm2029, %v5299, 0.0
        %v5371 = vsel %vm2029, %v5301, 0.0
        %v5372 = vsel %vm2029, %v5303, 0.0
        %v5373 = vsel %vm2029, %v5305, 0.0
        %v5374 = vsel %vm2030, %v5307, 0.0
        %v5375 = vsel %vm2030, %v5309, 0.0
        %v5376 = vsel %vm2030, %v5311, 0.0
        %v5377 = vsel %vm2030, %v5313, 0.0
        %v5378 = vpack.c.bf16 %v5350, %v5346
        %v5379 = vpack.c.bf16 %v5351, %v5347
        %v5380 = vpack.c.bf16 %v5352, %v5348
        %v5381 = vpack.c.bf16 %v5353, %v5349
        %v5382 = vpack.c.bf16 %v5358, %v5354
        %v5383 = vpack.c.bf16 %v5359, %v5355
        %v5384 = vpack.c.bf16 %v5360, %v5356
        %v5385 = vpack.c.bf16 %v5361, %v5357
        %v5386 = vpack.c.bf16 %v5366, %v5362
        %v5387 = vpack.c.bf16 %v5367, %v5363
        %v5388 = vpack.c.bf16 %v5368, %v5364
        %v5389 = vpack.c.bf16 %v5369, %v5365
        %v5390 = vpack.c.bf16 %v5374, %v5370
        %v5391 = vpack.c.bf16 %v5375, %v5371
        %v5392 = vpack.c.bf16 %v5376, %v5372
        %v5393 = vpack.c.bf16 %v5377, %v5373
        %s5394 = scalar_lea.vmem [#allocation12], 2048
        %v5395 = vld [vmem:[%s5394] sm:$0xf]
        %v5396 = vld [vmem:[%s5394 + $0x4] sm:$0xf]
        %v5397 = vld [vmem:[%s5394 + $0x8] sm:$0xf]
        %v5398 = vld [vmem:[%s5394 + $0xc] sm:$0xf]
        %v5399 = vld [vmem:[%s5394 + $0x10] sm:$0xf]
        %v5400 = vld [vmem:[%s5394 + $0x14] sm:$0xf]
        %v5401 = vld [vmem:[%s5394 + $0x18] sm:$0xf]
        %v5402 = vld [vmem:[%s5394 + $0x1c] sm:$0xf]
        %v5403 = vld [vmem:[%s5394 + $0x20] sm:$0xf]
        %v5404 = vld [vmem:[%s5394 + $0x24] sm:$0xf]
        %v5405 = vld [vmem:[%s5394 + $0x28] sm:$0xf]
        %v5406 = vld [vmem:[%s5394 + $0x2c] sm:$0xf]
        %v5407 = vld [vmem:[%s5394 + $0x30] sm:$0xf]
        %v5408 = vld [vmem:[%s5394 + $0x34] sm:$0xf]
        %v5409 = vld [vmem:[%s5394 + $0x38] sm:$0xf]
        %v5410 = vld [vmem:[%s5394 + $0x3c] sm:$0xf]
        %v5411 = vld [vmem:[%s5394 + $0x40] sm:$0xf]
        %v5412 = vld [vmem:[%s5394 + $0x44] sm:$0xf]
        %v5413 = vld [vmem:[%s5394 + $0x48] sm:$0xf]
        %v5414 = vld [vmem:[%s5394 + $0x4c] sm:$0xf]
        %v5415 = vld [vmem:[%s5394 + $0x50] sm:$0xf]
        %v5416 = vld [vmem:[%s5394 + $0x54] sm:$0xf]
        %v5417 = vld [vmem:[%s5394 + $0x58] sm:$0xf]
        %v5418 = vld [vmem:[%s5394 + $0x5c] sm:$0xf]
        %v5419 = vld [vmem:[%s5394 + $0x60] sm:$0xf]
        %v5420 = vld [vmem:[%s5394 + $0x64] sm:$0xf]
        %v5421 = vld [vmem:[%s5394 + $0x68] sm:$0xf]
        %v5422 = vld [vmem:[%s5394 + $0x6c] sm:$0xf]
        %v5423 = vld [vmem:[%s5394 + $0x70] sm:$0xf]
        %v5424 = vld [vmem:[%s5394 + $0x74] sm:$0xf]
        %v5425 = vld [vmem:[%s5394 + $0x78] sm:$0xf]
        %v5426 = vld [vmem:[%s5394 + $0x7c] sm:$0xf]
        %v5427 = vld [vmem:[%s5394 + $0x80] sm:$0xf]
        %v5428 = vld [vmem:[%s5394 + $0x84] sm:$0xf]
        %v5429 = vld [vmem:[%s5394 + $0x88] sm:$0xf]
        %v5430 = vld [vmem:[%s5394 + $0x8c] sm:$0xf]
        %v5431 = vld [vmem:[%s5394 + $0x90] sm:$0xf]
        %v5432 = vld [vmem:[%s5394 + $0x94] sm:$0xf]
        %v5433 = vld [vmem:[%s5394 + $0x98] sm:$0xf]
        %v5434 = vld [vmem:[%s5394 + $0x9c] sm:$0xf]
        %v5435 = vld [vmem:[%s5394 + $0xa0] sm:$0xf]
        %v5436 = vld [vmem:[%s5394 + $0xa4] sm:$0xf]
        %v5437 = vld [vmem:[%s5394 + $0xa8] sm:$0xf]
        %v5438 = vld [vmem:[%s5394 + $0xac] sm:$0xf]
        %v5439 = vld [vmem:[%s5394 + $0xb0] sm:$0xf]
        %v5440 = vld [vmem:[%s5394 + $0xb4] sm:$0xf]
        %v5441 = vld [vmem:[%s5394 + $0xb8] sm:$0xf]
        %v5442 = vld [vmem:[%s5394 + $0xbc] sm:$0xf]
        %v5443 = vld [vmem:[%s5394 + $0xc0] sm:$0xf]
        %v5444 = vld [vmem:[%s5394 + $0xc4] sm:$0xf]
        %v5445 = vld [vmem:[%s5394 + $0xc8] sm:$0xf]
        %v5446 = vld [vmem:[%s5394 + $0xcc] sm:$0xf]
        %v5447 = vld [vmem:[%s5394 + $0xd0] sm:$0xf]
        %v5448 = vld [vmem:[%s5394 + $0xd4] sm:$0xf]
        %v5449 = vld [vmem:[%s5394 + $0xd8] sm:$0xf]
        %v5450 = vld [vmem:[%s5394 + $0xdc] sm:$0xf]
        %v5451 = vld [vmem:[%s5394 + $0xe0] sm:$0xf]
        %v5452 = vld [vmem:[%s5394 + $0xe4] sm:$0xf]
        %v5453 = vld [vmem:[%s5394 + $0xe8] sm:$0xf]
        %v5454 = vld [vmem:[%s5394 + $0xec] sm:$0xf]
        %v5455 = vld [vmem:[%s5394 + $0xf0] sm:$0xf]
        %v5456 = vld [vmem:[%s5394 + $0xf4] sm:$0xf]
        %v5457 = vld [vmem:[%s5394 + $0xf8] sm:$0xf]
        %v5458 = vld [vmem:[%s5394 + $0xfc] sm:$0xf]
        %v5523 = vunpack.c.l.b16 %v5395
        %v5524 = vunpack.c.l.b16 %v5396
        %v5525 = vunpack.c.l.b16 %v5397
        %v5526 = vunpack.c.l.b16 %v5398
        %v5527 = vunpack.c.l.b16 %v5399
        %v5528 = vunpack.c.l.b16 %v5400
        %v5529 = vunpack.c.l.b16 %v5401
        %v5530 = vunpack.c.l.b16 %v5402
        %v5531 = vunpack.c.l.b16 %v5403
        %v5532 = vunpack.c.l.b16 %v5404
        %v5533 = vunpack.c.l.b16 %v5405
        %v5534 = vunpack.c.l.b16 %v5406
        %v5535 = vunpack.c.l.b16 %v5407
        %v5536 = vunpack.c.l.b16 %v5408
        %v5537 = vunpack.c.l.b16 %v5409
        %v5538 = vunpack.c.l.b16 %v5410
        %v5539 = vunpack.c.l.b16 %v5411
        %v5540 = vunpack.c.l.b16 %v5412
        %v5541 = vunpack.c.l.b16 %v5413
        %v5542 = vunpack.c.l.b16 %v5414
        %v5543 = vunpack.c.l.b16 %v5415
        %v5544 = vunpack.c.l.b16 %v5416
        %v5545 = vunpack.c.l.b16 %v5417
        %v5546 = vunpack.c.l.b16 %v5418
        %v5547 = vunpack.c.l.b16 %v5419
        %v5548 = vunpack.c.l.b16 %v5420
        %v5549 = vunpack.c.l.b16 %v5421
        %v5550 = vunpack.c.l.b16 %v5422
        %v5551 = vunpack.c.l.b16 %v5423
        %v5552 = vunpack.c.l.b16 %v5424
        %v5553 = vunpack.c.l.b16 %v5425
        %v5554 = vunpack.c.l.b16 %v5426
        %v5555 = vunpack.c.l.b16 %v5427
        %v5556 = vunpack.c.l.b16 %v5428
        %v5557 = vunpack.c.l.b16 %v5429
        %v5558 = vunpack.c.l.b16 %v5430
        %v5559 = vunpack.c.l.b16 %v5431
        %v5560 = vunpack.c.l.b16 %v5432
        %v5561 = vunpack.c.l.b16 %v5433
        %v5562 = vunpack.c.l.b16 %v5434
        %v5563 = vunpack.c.l.b16 %v5435
        %v5564 = vunpack.c.l.b16 %v5436
        %v5565 = vunpack.c.l.b16 %v5437
        %v5566 = vunpack.c.l.b16 %v5438
        %v5567 = vunpack.c.l.b16 %v5439
        %v5568 = vunpack.c.l.b16 %v5440
        %v5569 = vunpack.c.l.b16 %v5441
        %v5570 = vunpack.c.l.b16 %v5442
        %v5571 = vunpack.c.l.b16 %v5443
        %v5572 = vunpack.c.l.b16 %v5444
        %v5573 = vunpack.c.l.b16 %v5445
        %v5574 = vunpack.c.l.b16 %v5446
        %v5575 = vunpack.c.l.b16 %v5447
        %v5576 = vunpack.c.l.b16 %v5448
        %v5577 = vunpack.c.l.b16 %v5449
        %v5578 = vunpack.c.l.b16 %v5450
        %v5579 = vunpack.c.l.b16 %v5451
        %v5580 = vunpack.c.l.b16 %v5452
        %v5581 = vunpack.c.l.b16 %v5453
        %v5582 = vunpack.c.l.b16 %v5454
        %v5583 = vunpack.c.l.b16 %v5455
        %v5584 = vunpack.c.l.b16 %v5456
        %v5585 = vunpack.c.l.b16 %v5457
        %v5586 = vunpack.c.l.b16 %v5458
        %v5587 = vpack.c.b16 %v5524, %v5523
        %v5588 = vpack.c.b16 %v5526, %v5525
        %v5589 = vpack.c.b16 %v5528, %v5527
        %v5590 = vpack.c.b16 %v5530, %v5529
        %v5591 = vpack.c.b16 %v5532, %v5531
        %v5592 = vpack.c.b16 %v5534, %v5533
        %v5593 = vpack.c.b16 %v5536, %v5535
        %v5594 = vpack.c.b16 %v5538, %v5537
        %v5595 = vpack.c.b16 %v5540, %v5539
        %v5596 = vpack.c.b16 %v5542, %v5541
        %v5597 = vpack.c.b16 %v5544, %v5543
        %v5598 = vpack.c.b16 %v5546, %v5545
        %v5599 = vpack.c.b16 %v5548, %v5547
        %v5600 = vpack.c.b16 %v5550, %v5549
        %v5601 = vpack.c.b16 %v5552, %v5551
        %v5602 = vpack.c.b16 %v5554, %v5553
        %v5603 = vpack.c.b16 %v5556, %v5555
        %v5604 = vpack.c.b16 %v5558, %v5557
        %v5605 = vpack.c.b16 %v5560, %v5559
        %v5606 = vpack.c.b16 %v5562, %v5561
        %v5607 = vpack.c.b16 %v5564, %v5563
        %v5608 = vpack.c.b16 %v5566, %v5565
        %v5609 = vpack.c.b16 %v5568, %v5567
        %v5610 = vpack.c.b16 %v5570, %v5569
        %v5611 = vpack.c.b16 %v5572, %v5571
        %v5612 = vpack.c.b16 %v5574, %v5573
        %v5613 = vpack.c.b16 %v5576, %v5575
        %v5614 = vpack.c.b16 %v5578, %v5577
        %v5615 = vpack.c.b16 %v5580, %v5579
        %v5616 = vpack.c.b16 %v5582, %v5581
        %v5617 = vpack.c.b16 %v5584, %v5583
        %v5618 = vpack.c.b16 %v5586, %v5585
        %5651 = vmatprep.subr.bf16.mxu0 0
        %5652 = vmatpush1.bf16.msra.mxu0 %v5587
        %5653 = vmatprep.subr.bf16.mxu0 0
        %5654 = vmatpush1.bf16.msra.mxu0 %v5588
        %5655 = vmatprep.subr.bf16.mxu0 0
        %5656 = vmatpush1.bf16.msra.mxu0 %v5589
        %5657 = vmatprep.subr.bf16.mxu0 0
        %5658 = vmatpush1.bf16.msra.mxu0 %v5590
        %5659 = vmatprep.subr.bf16.mxu0 0
        %5660 = vmatpush1.bf16.msra.mxu0 %v5591
        %5661 = vmatprep.subr.bf16.mxu0 0
        %5662 = vmatpush1.bf16.msra.mxu0 %v5592
        %5663 = vmatprep.subr.bf16.mxu0 0
        %5664 = vmatpush1.bf16.msra.mxu0 %v5593
        %5665 = vmatprep.subr.bf16.mxu0 0
        %5666 = vmatpush1.bf16.msra.mxu0 %v5594
        %5667 = vmatprep.subr.bf16.mxu0 0
        %5668 = vmatpush1.bf16.msra.mxu0 %v5595
        %5669 = vmatprep.subr.bf16.mxu0 0
        %5670 = vmatpush1.bf16.msra.mxu0 %v5596
        %5671 = vmatprep.subr.bf16.mxu0 0
        %5672 = vmatpush1.bf16.msra.mxu0 %v5597
        %5673 = vmatprep.subr.bf16.mxu0 0
        %5674 = vmatpush1.bf16.msra.mxu0 %v5598
        %5675 = vmatprep.subr.bf16.mxu0 0
        %5676 = vmatpush1.bf16.msra.mxu0 %v5599
        %5677 = vmatprep.subr.bf16.mxu0 0
        %5678 = vmatpush1.bf16.msra.mxu0 %v5600
        %5679 = vmatprep.subr.bf16.mxu0 0
        %5680 = vmatpush1.bf16.msra.mxu0 %v5601
        %5681 = vmatprep.subr.bf16.mxu0 0
        %5682 = vmatpush1.bf16.msra.mxu0 %v5602
        %5683 = vmatprep.mubr.bf16.mxu0 %v5379
        %5684 = vmatmul.mubr.bf16.gmra.mrb[0].mxu0 %v5378
        %v5685 = vpop.f32.mrb[0].mxu0
        %v5686 = vadd.f32 0.0, %v5685
        %v5687 = vpop.f32.mrb[0].mxu0
        %v5688 = vpop.f32.mrb[0].mxu0
        %v5689 = vadd.f32 0.0, %v5688
        %v5690 = vpop.f32.mrb[0].mxu0
        %5691 = vmatprep.mubr.bf16.mxu0 %v5383
        %5692 = vmatmul.mubr.bf16.gmra.mrb[0].mxu0 %v5382
        %v5693 = vpop.f32.mrb[0].mxu0
        %v5694 = vadd.f32 0.0, %v5693
        %v5695 = vpop.f32.mrb[0].mxu0
        %v5696 = vpop.f32.mrb[0].mxu0
        %v5697 = vadd.f32 0.0, %v5696
        %v5698 = vpop.f32.mrb[0].mxu0
        %5699 = vmatprep.mubr.bf16.mxu0 %v5387
        %5700 = vmatmul.mubr.bf16.gmra.mrb[0].mxu0 %v5386
        %v5701 = vpop.f32.mrb[0].mxu0
        %v5702 = vadd.f32 0.0, %v5701
        %v5703 = vpop.f32.mrb[0].mxu0
        %v5704 = vpop.f32.mrb[0].mxu0
        %v5705 = vadd.f32 0.0, %v5704
        %v5706 = vpop.f32.mrb[0].mxu0
        %5707 = vmatprep.mubr.bf16.mxu0 %v5391
        %5708 = vmatmul.mubr.bf16.gmra.mrb[0].mxu0 %v5390
        %v5709 = vpop.f32.mrb[0].mxu0
        %v5710 = vadd.f32 0.0, %v5709
        %v5711 = vpop.f32.mrb[0].mxu0
        %v5712 = vpop.f32.mrb[0].mxu0
        %v5713 = vadd.f32 0.0, %v5712
        %v5714 = vpop.f32.mrb[0].mxu0
        %5715 = vdwg.mxu0
        %5716 = vmatprep.subr.bf16.mxu0 0
        %5717 = vmatpush1.bf16.msra.mxu0 %v5603
        %5718 = vmatprep.subr.bf16.mxu0 0
        %5719 = vmatpush1.bf16.msra.mxu0 %v5604
        %5720 = vmatprep.subr.bf16.mxu0 0
        %5721 = vmatpush1.bf16.msra.mxu0 %v5605
        %5722 = vmatprep.subr.bf16.mxu0 0
        %5723 = vmatpush1.bf16.msra.mxu0 %v5606
        %5724 = vmatprep.subr.bf16.mxu0 0
        %5725 = vmatpush1.bf16.msra.mxu0 %v5607
        %5726 = vmatprep.subr.bf16.mxu0 0
        %5727 = vmatpush1.bf16.msra.mxu0 %v5608
        %5728 = vmatprep.subr.bf16.mxu0 0
        %5729 = vmatpush1.bf16.msra.mxu0 %v5609
        %5730 = vmatprep.subr.bf16.mxu0 0
        %5731 = vmatpush1.bf16.msra.mxu0 %v5610
        %5732 = vmatprep.subr.bf16.mxu0 0
        %5733 = vmatpush1.bf16.msra.mxu0 %v5611
        %5734 = vmatprep.subr.bf16.mxu0 0
        %5735 = vmatpush1.bf16.msra.mxu0 %v5612
        %5736 = vmatprep.subr.bf16.mxu0 0
        %5737 = vmatpush1.bf16.msra.mxu0 %v5613
        %5738 = vmatprep.subr.bf16.mxu0 0
        %5739 = vmatpush1.bf16.msra.mxu0 %v5614
        %5740 = vmatprep.subr.bf16.mxu0 0
        %5741 = vmatpush1.bf16.msra.mxu0 %v5615
        %5742 = vmatprep.subr.bf16.mxu0 0
        %5743 = vmatpush1.bf16.msra.mxu0 %v5616
        %5744 = vmatprep.subr.bf16.mxu0 0
        %5745 = vmatpush1.bf16.msra.mxu0 %v5617
        %5746 = vmatprep.subr.bf16.mxu0 0
        %5747 = vmatpush1.bf16.msra.mxu0 %v5618
        %5748 = vmatprep.mubr.bf16.mxu0 %v5381
        %5749 = vmatmul.mubr.bf16.gmra.mrb[0].mxu0 %v5380
        %v5750 = vpop.f32.mrb[0].mxu0
        %v5751 = vadd.f32 %v5686, %v5750
        %v5752 = vpop.f32.mrb[0].mxu0
        %v5753 = vpop.f32.mrb[0].mxu0
        %v5754 = vadd.f32 %v5689, %v5753
        %v5755 = vpop.f32.mrb[0].mxu0
        %5756 = vmatprep.mubr.bf16.mxu0 %v5385
        %5757 = vmatmul.mubr.bf16.gmra.mrb[0].mxu0 %v5384
        %v5758 = vpop.f32.mrb[0].mxu0
        %v5759 = vadd.f32 %v5694, %v5758
        %v5760 = vpop.f32.mrb[0].mxu0
        %v5761 = vpop.f32.mrb[0].mxu0
        %v5762 = vadd.f32 %v5697, %v5761
        %v5763 = vpop.f32.mrb[0].mxu0
        %5764 = vmatprep.mubr.bf16.mxu0 %v5389
        %5765 = vmatmul.mubr.bf16.gmra.mrb[0].mxu0 %v5388
        %v5766 = vpop.f32.mrb[0].mxu0
        %v5767 = vadd.f32 %v5702, %v5766
        %v5768 = vpop.f32.mrb[0].mxu0
        %v5769 = vpop.f32.mrb[0].mxu0
        %v5770 = vadd.f32 %v5705, %v5769
        %v5771 = vpop.f32.mrb[0].mxu0
        %5772 = vmatprep.mubr.bf16.mxu0 %v5393
        %5773 = vmatmul.mubr.bf16.gmra.mrb[0].mxu0 %v5392
        %v5774 = vpop.f32.mrb[0].mxu0
        %v5775 = vadd.f32 %v5710, %v5774
        %v5776 = vpop.f32.mrb[0].mxu0
        %v5777 = vpop.f32.mrb[0].mxu0
        %v5778 = vadd.f32 %v5713, %v5777
        %v5779 = vpop.f32.mrb[0].mxu0
        %5780 = vdwg.mxu0
        %v5781 = vadd.f32 %v5166, %v5751
        %v5782 = vadd.f32 %v5167, %v5754
        %v5783 = vadd.f32 %v5168, %v5759
        %v5784 = vadd.f32 %v5169, %v5762
        %v5785 = vadd.f32 %v5170, %v5767
        %v5786 = vadd.f32 %v5171, %v5770
        %v5787 = vadd.f32 %v5172, %v5775
        %v5788 = vadd.f32 %v5173, %v5778
        %5789 = vst [vmem:[%s336] sm:$0xff] %v5781
        %5790 = vst [vmem:[%s336 + $0x8] sm:$0xff] %v5782
        %5791 = vst [vmem:[%s336 + $0x10] sm:$0xff] %v5783
        %5792 = vst [vmem:[%s336 + $0x18] sm:$0xff] %v5784
        %5793 = vst [vmem:[%s336 + $0x20] sm:$0xff] %v5785
        %5794 = vst [vmem:[%s336 + $0x28] sm:$0xff] %v5786
        %5795 = vst [vmem:[%s336 + $0x30] sm:$0xff] %v5787
        %5796 = vst [vmem:[%s336 + $0x38] sm:$0xff] %v5788
        %s5797 = sand.u32 %s165, 1
        %s5798 = scalar_lea.sflag [#allocation5], %s5797
        %s5799 = sand.u32 %s165, 1
        %s5800 = smul.addr %s5799, 64
        %s5801 = scalar_lea.vmem [#allocation14], %s5800
        // Predicated region
        $region69: #{tpu_custom_call.1} parent=43 // pred_check
          %p5802 = pneg %p175
        $region70: #{tpu_custom_call.1} parent=43 // pred_check_branch
          %5804 = sbr.rel (%p5802) target = $region72
        $region71: #{tpu_custom_call.1} parent=43 // pred_region
          %s5806 = ssub.s32 1024, 1024
          %5807 = vsyncadd %s5798, %s5806
          %s5808 = smul.addr %s26, 8
          %s5809 = smul.addr %s5808, 128
          %s5810 = scalar_lea.hbm %s6, %s5809
          %s5811 = sshll.u32 %s5801, 4
          %s5812 = int_to_ptr.vmem [resolvable:$true] %s5811
          %5817 = dma.vmem_to_hbm [thread:$0]  %s5812, 1024, %s5810, %s5798, 128, 128, 8
        $region72: #{tpu_custom_call.1} parent=43 // pred_fallthru
          _
      $region44: #{tpu_custom_call.1} parent=5 // pred_fallthru
        _
      %p5818 = scmp.le.s32.totalorder 2, %s21
      // Predicated region
      $region73: #{tpu_custom_call.1} parent=5 // pred_check
        %p5819 = pneg %p5818
      $region74: #{tpu_custom_call.1} parent=5 // pred_check_branch
        %5821 = sbr.rel (%p5819) target = $region76
      $region75: #{tpu_custom_call.1} parent=5 // pred_region
        %s5822 = ssub.s32 %s21, 2
        // Predicated region
        $region77: #{tpu_custom_call.1} parent=75 // pred_check
          %p5823 = pneg %p181
        $region78: #{tpu_custom_call.1} parent=75 // pred_check_branch
          %5825 = sbr.rel (%p5823) target = $region80
        $region79: #{tpu_custom_call.1} parent=75 // pred_region
          %s5826 = sand.u32 %s166, 1
          %s5827 = scalar_lea.sflag [#allocation5], %s5826
          %s5828 = sand.u32 %s166, 1
          %s5829 = smul.addr %s5828, 64
          %s5830 = scalar_lea.vmem [#allocation14], %s5829
          %5831 = dma.done %s5827, 1024
        $region80: #{tpu_custom_call.1} parent=75 // pred_fallthru
          _
      $region76: #{tpu_custom_call.1} parent=5 // pred_fallthru
        _
    $region6: #{tpu_custom_call.1} parent=1 // loop_footer
      %s25 = sadd.s32 1, %s21
    $region7: #{tpu_custom_call.1} parent=1 // loop_footer_branch
      %20 = sbr.rel target = $region3
    $region8: #{tpu_custom_call.1} parent=1 // loop_exit
      _
    %5832 = vsyncpa [#allocation4], 1
    %s5833 = scalar_lea.sflag [#allocation4], 1
    %5834 = vsyncpa %s5833, 1
    %5835 = vsyncpa [#allocation7], 1
    %5836 = vsyncpa [#allocation10], 1
    %5837 = vsyncpa [#allocation13], 1
    %5838 = vsyncpa [#allocation5], 1
    %s5839 = scalar_lea.sflag [#allocation5], 1
    %5840 = vsyncpa %s5839, 1

</llo_original>
